<compile_context>
chip_gen: v7x
topology: tpu7x:2x2x1
jax: 0.10.0
libtpu: 0.0.40
codegen_flags: <defaults>
</compile_context>

<pallas_src>
import math
import jax
import jax.numpy as jnp
from jax import lax
from jax.experimental import pallas as pl
from jax.experimental.pallas import tpu as pltpu

# ----------------------- config (small, consistent with the module) ----------
VOCAB = 100
MAX_POS = 64
N_EMBD = 32
N_HEAD = 4
LOCAL_HEADS = 2
GLOBAL_HEADS = N_HEAD - LOCAL_HEADS
HEAD_DIM = N_EMBD // N_HEAD
WINDOW = 4
N_LAYER = 2
EPS = 1e-5
INNER = 4 * N_EMBD

EMB_PAD = 128        # wte / wpe each padded to 128 rows, stacked -> (256, E) table
NEG_BIG = -1e30      # python float (no captured jnp constant); exp underflows to 0


# ----------------------------- math helpers ----------------------------------
def _layer_norm(x, g, b):
    mu = jnp.mean(x, axis=-1, keepdims=True)
    var = jnp.mean((x - mu) ** 2, axis=-1, keepdims=True)
    return (x - mu) * lax.rsqrt(var + EPS) * g + b


def _new_gelu(x):
    c = math.sqrt(2.0 / math.pi)
    return 0.5 * x * (1.0 + jnp.tanh(c * (x + 0.044715 * x * x * x)))


# ----------------------------- fused kernel ----------------------------------
def gptneo_kernel(ids_ref, pos_ref, bias_ref, emb_ref,
                  ln1g_ref, ln1b_ref, qkvw_ref, ow_ref, ob_ref,
                  ln2g_ref, ln2b_ref, fcw_ref, fcb_ref, pw_ref, pb_ref,
                  lnfg_ref, lnfb_ref, out_ref):
    BS = ids_ref.shape[0]              # B*S rows (batch folded into the row axis)

    # ---- fused token+position embedding gather: one one-hot matmul ----------
    ids = ids_ref[...]                                   # (BS, 1) int32
    pos = pos_ref[...]                                   # (BS, 1) int32
    col = lax.broadcasted_iota(jnp.int32, (BS, 2 * EMB_PAD), 1)
    onehot = jnp.logical_or(col == ids, col == pos + EMB_PAD).astype(jnp.float32)
    x = jnp.dot(onehot, emb_ref[...], preferred_element_type=jnp.float32)  # (BS, E)
    # embed dropout: identity (eval mode)

    # additive attention bias (block-diagonal over folded batch + causal +
    # local window), precomputed in the wrapper and loaded once.
    bias = bias_ref[...]                                 # (H, BS, BS) f32

    def bmm(a, b, ca, cb):  # head-batched matmul, no transposes materialized
        return lax.dot_general(a, b, (((ca,), (cb,)), ((0,), (0,))),
                               preferred_element_type=jnp.float32)

    for l in range(N_LAYER):           # static unroll over layers
        # ---- attention branch: ln_1 -> fused QKV -> softmax -> out_proj -----
        h = _layer_norm(x, ln1g_ref[l], ln1b_ref[l])                # (BS, E)
        hb = jnp.broadcast_to(h[None], (N_HEAD, BS, N_EMBD))        # (H, BS, E)
        qkv = bmm(hb, qkvw_ref[l], 2, 1)                            # (H, BS, 3D)
        q = qkv[:, :, 0:HEAD_DIM]                 # 1/sqrt(D) folded into q weights
        k = qkv[:, :, HEAD_DIM:2 * HEAD_DIM]
        v = qkv[:, :, 2 * HEAD_DIM:3 * HEAD_DIM]

        scores = bmm(q, k, 2, 2) + bias                             # (H, BS, BS)
        m = jnp.max(scores, axis=-1, keepdims=True)
        p = jnp.exp(scores - m)
        probs = p / jnp.sum(p, axis=-1, keepdims=True)   # exact divide (parity)
        # attn dropout: identity (eval mode)
        ctx = bmm(probs, v, 2, 1)                                   # (H, BS, D)

        # output projection accumulated per head -> no lane-axis concat
        per_head = bmm(ctx, ow_ref[l], 2, 1)                        # (H, BS, E)
        attn = jnp.sum(per_head, axis=0) + ob_ref[l]                # (BS, E)
        x = x + attn                                                # residual 1

        # ---- MLP branch: ln_2 -> fc -> gelu -> proj --------------------------
        h2 = _layer_norm(x, ln2g_ref[l], ln2b_ref[l])
        inner = jnp.dot(h2, fcw_ref[l], preferred_element_type=jnp.float32) + fcb_ref[l]
        g = _new_gelu(inner)                                        # (BS, INNER)
        mlp = jnp.dot(g, pw_ref[l], preferred_element_type=jnp.float32) + pb_ref[l]
        x = x + mlp                                                 # residual 2

    out_ref[...] = _layer_norm(x, lnfg_ref[...], lnfb_ref[...])


# ----------------------------- parameters ------------------------------------
def init_params(key):
    """PyTorch-equivalent parameters; linear weights stored (in, out) = W.T."""
    def nrm(k, shape, scale=0.02):
        return scale * jax.random.normal(k, shape, dtype=jnp.float32)

    keys = iter(jax.random.split(key, 64))
    params = {
        "wte": nrm(next(keys), (VOCAB, N_EMBD)),
        "wpe": nrm(next(keys), (MAX_POS, N_EMBD)),
        "blocks": [],
        "lnf_g": jnp.ones((1, N_EMBD), jnp.float32),
        "lnf_b": jnp.zeros((1, N_EMBD), jnp.float32),
    }
    for _ in range(N_LAYER):
        blk = dict(
            ln1_g=jnp.ones((1, N_EMBD), jnp.float32),
            ln1_b=jnp.zeros((1, N_EMBD), jnp.float32),
            qw=nrm(next(keys), (N_EMBD, N_EMBD)),
            kw=nrm(next(keys), (N_EMBD, N_EMBD)),
            vw=nrm(next(keys), (N_EMBD, N_EMBD)),
            ow=nrm(next(keys), (N_EMBD, N_EMBD)),
            ob=nrm(next(keys), (1, N_EMBD)),
            ln2_g=jnp.ones((1, N_EMBD), jnp.float32),
            ln2_b=jnp.zeros((1, N_EMBD), jnp.float32),
            fcw=nrm(next(keys), (N_EMBD, INNER)),
            fcb=nrm(next(keys), (1, INNER)),
            pw=nrm(next(keys), (INNER, N_EMBD)),
            pb=nrm(next(keys), (1, N_EMBD)),
        )
        params["blocks"].append(blk)
    return params


def pack_params(params):
    """One-time repack into the stacked per-layer / per-head kernel layout."""
    scale = 1.0 / math.sqrt(HEAD_DIM)
    blocks = params["blocks"]

    def per_head_in(w):   # (E, E) (in,out) -> (H, E, D); head = output-column group
        return jnp.transpose(w.reshape(N_EMBD, N_HEAD, HEAD_DIM), (1, 0, 2))

    emb = jnp.concatenate(
        [jnp.pad(params["wte"], ((0, EMB_PAD - VOCAB), (0, 0))),
         jnp.pad(params["wpe"], ((0, EMB_PAD - MAX_POS), (0, 0)))], axis=0)  # (256, E)

    qkvw = jnp.stack([
        jnp.concatenate([per_head_in(b["qw"]) * scale,     # fold 1/sqrt(D) into Q
                         per_head_in(b["kw"]),
                         per_head_in(b["vw"])], axis=-1)   # (H, E, 3D)
        for b in blocks])                                  # (L, H, E, 3D)

    return {
        "emb": emb,
        "ln1_g": jnp.stack([b["ln1_g"] for b in blocks]),
        "ln1_b": jnp.stack([b["ln1_b"] for b in blocks]),
        "qkvw": qkvw,
        "ow": jnp.stack([b["ow"].reshape(N_HEAD, HEAD_DIM, N_EMBD) for b in blocks]),
        "ob": jnp.stack([b["ob"] for b in blocks]),
        "ln2_g": jnp.stack([b["ln2_g"] for b in blocks]),
        "ln2_b": jnp.stack([b["ln2_b"] for b in blocks]),
        "fcw": jnp.stack([b["fcw"] for b in blocks]),
        "fcb": jnp.stack([b["fcb"] for b in blocks]),
        "pw": jnp.stack([b["pw"] for b in blocks]),
        "pb": jnp.stack([b["pb"] for b in blocks]),
        "lnf_g": params["lnf_g"],
        "lnf_b": params["lnf_b"],
    }


def _attention_bias(B, S):
    """Additive bias (H, B*S, B*S): 0 where attention is allowed, -1e30 otherwise.
    Shape-only constant (batch block-diagonal + causal + local window) -> XLA
    constant-folds it; the kernel just adds it to the scores."""
    idx = jnp.arange(B * S, dtype=jnp.int32)
    r, c = idx[:, None], idx[None, :]
    same_seq = (r // S) == (c // S)
    allowed_global = same_seq & (c <= r)                       # causal, all heads
    allowed_local = allowed_global & (c >= r - WINDOW)         # + sliding window
    head_is_local = (jnp.arange(N_HEAD) >= GLOBAL_HEADS)[:, None, None]
    allowed = jnp.where(head_is_local, allowed_local[None], allowed_global[None])
    return jnp.where(allowed, 0.0, NEG_BIG).astype(jnp.float32)


# ----------------------------- wrapper ----------------------------------------
def _full_spec(shape):
    zeros = (0,) * len(shape)
    return pl.BlockSpec(shape, lambda i, z=zeros: z)


def gpt_neo_forward(packed, input_ids, position_ids=None):
    B, S = input_ids.shape
    BS = B * S
    if position_ids is None:
        position_ids = jnp.broadcast_to(
            jnp.arange(S, dtype=jnp.int32)[None, :], (B, S))
    ids2 = input_ids.astype(jnp.int32).reshape(BS, 1)
    pos2 = position_ids.astype(jnp.int32).reshape(BS, 1)
    bias = _attention_bias(B, S)

    weights = [packed[k] for k in
               ("emb", "ln1_g", "ln1_b", "qkvw", "ow", "ob",
                "ln2_g", "ln2_b", "fcw", "fcb", "pw", "pb", "lnf_g", "lnf_b")]

    in_specs = ([_full_spec((BS, 1)), _full_spec((BS, 1)), _full_spec(bias.shape)]
                + [_full_spec(w.shape) for w in weights])

    out = pl.pallas_call(
        gptneo_kernel,
        out_shape=jax.ShapeDtypeStruct((BS, N_EMBD), jnp.float32),
        grid=(1,),
        in_specs=in_specs,
        out_specs=pl.BlockSpec((BS, N_EMBD), lambda i: (0, 0)),
        compiler_params=pltpu.CompilerParams(dimension_semantics=("arbitrary",)),
    )(ids2, pos2, bias, *weights)
    return out.reshape(B, S, N_EMBD)


# ----------------------------- pure-JAX reference ------------------------------
def gpt_neo_reference(params, input_ids, position_ids=None):
    B, S = input_ids.shape
    if position_ids is None:
        position_ids = jnp.broadcast_to(
            jnp.arange(S, dtype=jnp.int32)[None, :], (B, S))
    x = params["wte"][input_ids] + params["wpe"][position_ids]          # (B,S,E)

    i = jnp.arange(S)
    causal_dis = i[None, :] > i[:, None]
    local_dis = causal_dis | (i[None, :] < i[:, None] - WINDOW)
    dis = jnp.concatenate(
        [jnp.broadcast_to(causal_dis, (GLOBAL_HEADS, S, S)),
         jnp.broadcast_to(local_dis, (LOCAL_HEADS, S, S))], axis=0)      # (H,S,S)

    scale = 1.0 / math.sqrt(HEAD_DIM)
    for blk in params["blocks"]:
        h = _layer_norm(x, blk["ln1_g"], blk["ln1_b"])

        def split(t):
            return t.reshape(B, S, N_HEAD, HEAD_DIM).transpose(0, 2, 1, 3)

        q = split(h @ blk["qw"]) * scale
        k = split(h @ blk["kw"])
        v = split(h @ blk["vw"])
        scores = jnp.einsum("bhqd,bhkd->bhqk", q, k)
        scores = jnp.where(dis[None], -jnp.inf, scores)
        probs = jax.nn.softmax(scores, axis=-1)
        ctx = jnp.einsum("bhqk,bhkd->bhqd", probs, v)
        ctx = ctx.transpose(0, 2, 1, 3).reshape(B, S, N_EMBD)
        x = x + (ctx @ blk["ow"] + blk["ob"])
        h2 = _layer_norm(x, blk["ln2_g"], blk["ln2_b"])
        inner = h2 @ blk["fcw"] + blk["fcb"]
        x = x + (_new_gelu(inner) @ blk["pw"] + blk["pb"])
    return _layer_norm(x, params["lnf_g"], params["lnf_b"])


# ----------------------------- main --------------------------------------------
if __name__ == "__main__":
    key = jax.random.PRNGKey(0)
    pkey, ikey = jax.random.split(key)
    params = init_params(pkey)
    packed = pack_params(params)

    B, S = 2, 8
    input_ids = jax.random.randint(ikey, (B, S), 0, VOCAB, dtype=jnp.int32)

    out = gpt_neo_forward(packed, input_ids)
    out = jax.block_until_ready(out)
    assert out.shape == (B, S, N_EMBD)
    assert bool(jnp.all(jnp.isfinite(out)))

    ref = gpt_neo_reference(params, input_ids)
    assert bool(jnp.allclose(out, ref, atol=1e-3, rtol=1e-3)), \
        f"max abs err = {float(jnp.max(jnp.abs(out - ref)))}"

    print("KERNEL_OK")
</pallas_src>

<mosaic_0001>
module attributes {stable_mosaic.version = 11 : i64} {
  func.func @gptneo_kernel(%arg0: i32, %arg1: memref<16x1xi32, #tpu.memory_space<vmem>>, %arg2: memref<16x1xi32, #tpu.memory_space<vmem>>, %arg3: memref<4x16x16xf32, #tpu.memory_space<vmem>>, %arg4: memref<256x32xf32, #tpu.memory_space<vmem>>, %arg5: memref<2x1x32xf32, #tpu.memory_space<vmem>>, %arg6: memref<2x1x32xf32, #tpu.memory_space<vmem>>, %arg7: memref<2x4x32x24xf32, #tpu.memory_space<vmem>>, %arg8: memref<2x4x8x32xf32, #tpu.memory_space<vmem>>, %arg9: memref<2x1x32xf32, #tpu.memory_space<vmem>>, %arg10: memref<2x1x32xf32, #tpu.memory_space<vmem>>, %arg11: memref<2x1x32xf32, #tpu.memory_space<vmem>>, %arg12: memref<2x32x128xf32, #tpu.memory_space<vmem>>, %arg13: memref<2x1x128xf32, #tpu.memory_space<vmem>>, %arg14: memref<2x128x32xf32, #tpu.memory_space<vmem>>, %arg15: memref<2x1x32xf32, #tpu.memory_space<vmem>>, %arg16: memref<1x32xf32, #tpu.memory_space<vmem>>, %arg17: memref<1x32xf32, #tpu.memory_space<vmem>>, %arg18: memref<16x32xf32, #tpu.memory_space<vmem>>) attributes {dimension_semantics = [#tpu.dimension_semantics<arbitrary>], iteration_bounds = array<i64: 1>, scalar_prefetch = 0 : i64, scratch_operands = 0 : i64, tpu.core_type = #tpu.core_type<tc>, window_params = [{pipeline_mode = #tpu.pipeline_mode<synchronous>, transform_indices = @transform_0, window_bounds = array<i64: 16, 1>}, {pipeline_mode = #tpu.pipeline_mode<synchronous>, transform_indices = @transform_1, window_bounds = array<i64: 16, 1>}, {pipeline_mode = #tpu.pipeline_mode<synchronous>, transform_indices = @transform_2, window_bounds = array<i64: 4, 16, 16>}, {pipeline_mode = #tpu.pipeline_mode<synchronous>, transform_indices = @transform_3, window_bounds = array<i64: 256, 32>}, {pipeline_mode = #tpu.pipeline_mode<synchronous>, transform_indices = @transform_4, window_bounds = array<i64: 2, 1, 32>}, {pipeline_mode = #tpu.pipeline_mode<synchronous>, transform_indices = @transform_5, window_bounds = array<i64: 2, 1, 32>}, {pipeline_mode = #tpu.pipeline_mode<synchronous>, transform_indices = @transform_6, window_bounds = array<i64: 2, 4, 32, 24>}, {pipeline_mode = #tpu.pipeline_mode<synchronous>, transform_indices = @transform_7, window_bounds = array<i64: 2, 4, 8, 32>}, {pipeline_mode = #tpu.pipeline_mode<synchronous>, transform_indices = @transform_8, window_bounds = array<i64: 2, 1, 32>}, {pipeline_mode = #tpu.pipeline_mode<synchronous>, transform_indices = @transform_9, window_bounds = array<i64: 2, 1, 32>}, {pipeline_mode = #tpu.pipeline_mode<synchronous>, transform_indices = @transform_10, window_bounds = array<i64: 2, 1, 32>}, {pipeline_mode = #tpu.pipeline_mode<synchronous>, transform_indices = @transform_11, window_bounds = array<i64: 2, 32, 128>}, {pipeline_mode = #tpu.pipeline_mode<synchronous>, transform_indices = @transform_12, window_bounds = array<i64: 2, 1, 128>}, {pipeline_mode = #tpu.pipeline_mode<synchronous>, transform_indices = @transform_13, window_bounds = array<i64: 2, 128, 32>}, {pipeline_mode = #tpu.pipeline_mode<synchronous>, transform_indices = @transform_14, window_bounds = array<i64: 2, 1, 32>}, {pipeline_mode = #tpu.pipeline_mode<synchronous>, transform_indices = @transform_15, window_bounds = array<i64: 1, 32>}, {pipeline_mode = #tpu.pipeline_mode<synchronous>, transform_indices = @transform_16, window_bounds = array<i64: 1, 32>}, {pipeline_mode = #tpu.pipeline_mode<synchronous>, transform_indices = @transform_17, window_bounds = array<i64: 16, 32>}]} {
    %c0 = arith.constant 0 : index
    %c0_0 = arith.constant 0 : index
    %0 = vector.load %arg1[%c0, %c0_0] : memref<16x1xi32, #tpu.memory_space<vmem>>, vector<16x1xi32>
    %c0_1 = arith.constant 0 : index
    %c0_2 = arith.constant 0 : index
    %1 = vector.load %arg2[%c0_1, %c0_2] : memref<16x1xi32, #tpu.memory_space<vmem>>, vector<16x1xi32>
    %2 = tpu.iota {dimensions = array<i32: 1>} : vector<16x256xi32>
    %3 = vector.broadcast %0 : vector<16x1xi32> to vector<16x256xi32>
    %4 = arith.cmpi eq, %2, %3 : vector<16x256xi32>
    %c128_i32 = arith.constant 128 : i32
    %5 = vector.broadcast %c128_i32 : i32 to vector<16x1xi32>
    %6 = arith.addi %1, %5 : vector<16x1xi32>
    %7 = vector.broadcast %6 : vector<16x1xi32> to vector<16x256xi32>
    %8 = arith.cmpi eq, %2, %7 : vector<16x256xi32>
    %9 = arith.ori %4, %8 : vector<16x256xi1>
    %10 = arith.extui %9 : vector<16x256xi1> to vector<16x256xi32>
    %11 = arith.sitofp %10 : vector<16x256xi32> to vector<16x256xf32>
    %c0_3 = arith.constant 0 : index
    %c0_4 = arith.constant 0 : index
    %12 = vector.load %arg4[%c0_3, %c0_4] : memref<256x32xf32, #tpu.memory_space<vmem>>, vector<256x32xf32>
    %cst = arith.constant dense<0.000000e+00> : vector<16x32xf32>
    %13 = tpu.matmul %11, %12, %cst {dimension_numbers = #tpu.dot_dimension_numbers<[1], [0], [0], [1], [0, 0, 1, 1], [], []>} : vector<16x256xf32>, vector<256x32xf32>, vector<16x32xf32> -> vector<16x32xf32>
    %c0_5 = arith.constant 0 : index
    %c0_6 = arith.constant 0 : index
    %c0_7 = arith.constant 0 : index
    %14 = vector.load %arg3[%c0_5, %c0_6, %c0_7] : memref<4x16x16xf32, #tpu.memory_space<vmem>>, vector<4x16x16xf32>
    %c0_8 = arith.constant 0 : index
    %c0_9 = arith.constant 0 : index
    %c0_10 = arith.constant 0 : index
    %15 = vector.load %arg5[%c0_8, %c0_9, %c0_10] : memref<2x1x32xf32, #tpu.memory_space<vmem>>, vector<1x1x32xf32>
    %16 = vector.shape_cast %15 : vector<1x1x32xf32> to vector<1x32xf32>
    %c0_11 = arith.constant 0 : index
    %c0_12 = arith.constant 0 : index
    %c0_13 = arith.constant 0 : index
    %17 = vector.load %arg6[%c0_11, %c0_12, %c0_13] : memref<2x1x32xf32, #tpu.memory_space<vmem>>, vector<1x1x32xf32>
    %18 = vector.shape_cast %17 : vector<1x1x32xf32> to vector<1x32xf32>
    %cst_14 = arith.constant dense<0.000000e+00> : vector<16xf32>
    %19 = vector.multi_reduction <add>, %13, %cst_14 [1] : vector<16x32xf32> to vector<16xf32>
    %20 = vector.shape_cast %19 : vector<16xf32> to vector<16x1xf32>
    %cst_15 = arith.constant 3.200000e+01 : f32
    %21 = vector.broadcast %cst_15 : f32 to vector<16x1xf32>
    %22 = arith.divf %20, %21 : vector<16x1xf32>
    %23 = vector.broadcast %22 : vector<16x1xf32> to vector<16x32xf32>
    %24 = arith.subf %13, %23 : vector<16x32xf32>
    %25 = arith.mulf %24, %24 : vector<16x32xf32>
    %cst_16 = arith.constant dense<0.000000e+00> : vector<16xf32>
    %26 = vector.multi_reduction <add>, %25, %cst_16 [1] : vector<16x32xf32> to vector<16xf32>
    %27 = vector.shape_cast %26 : vector<16xf32> to vector<16x1xf32>
    %cst_17 = arith.constant 3.200000e+01 : f32
    %28 = vector.broadcast %cst_17 : f32 to vector<16x1xf32>
    %29 = arith.divf %27, %28 : vector<16x1xf32>
    %30 = vector.broadcast %22 : vector<16x1xf32> to vector<16x32xf32>
    %31 = arith.subf %13, %30 : vector<16x32xf32>
    %cst_18 = arith.constant 9.99999974E-6 : f32
    %32 = vector.broadcast %cst_18 : f32 to vector<16x1xf32>
    %33 = arith.addf %29, %32 : vector<16x1xf32>
    %34 = math.rsqrt %33 : vector<16x1xf32>
    %35 = vector.broadcast %34 : vector<16x1xf32> to vector<16x32xf32>
    %36 = arith.mulf %31, %35 : vector<16x32xf32>
    %37 = vector.broadcast %16 : vector<1x32xf32> to vector<16x32xf32>
    %38 = arith.mulf %36, %37 : vector<16x32xf32>
    %39 = vector.broadcast %18 : vector<1x32xf32> to vector<16x32xf32>
    %40 = arith.addf %38, %39 : vector<16x32xf32>
    %41 = vector.shape_cast %40 : vector<16x32xf32> to vector<1x16x32xf32>
    %42 = vector.shape_cast %41 : vector<1x16x32xf32> to vector<1x16x32xf32>
    %43 = vector.broadcast %42 : vector<1x16x32xf32> to vector<4x16x32xf32>
    %c0_19 = arith.constant 0 : index
    %c0_20 = arith.constant 0 : index
    %c0_21 = arith.constant 0 : index
    %c0_22 = arith.constant 0 : index
    %44 = vector.load %arg7[%c0_19, %c0_20, %c0_21, %c0_22] : memref<2x4x32x24xf32, #tpu.memory_space<vmem>>, vector<1x4x32x24xf32>
    %45 = vector.shape_cast %44 : vector<1x4x32x24xf32> to vector<4x32x24xf32>
    %cst_23 = arith.constant dense<0.000000e+00> : vector<4x16x24xf32>
    %46 = tpu.matmul %43, %45, %cst_23 {dimension_numbers = #tpu.dot_dimension_numbers<[2], [1], [1], [2], [0, 0, 0, 1, 1, 2], [0], [0]>} : vector<4x16x32xf32>, vector<4x32x24xf32>, vector<4x16x24xf32> -> vector<4x16x24xf32>
    %47 = vector.extract_strided_slice %46 {offsets = [0, 0, 0], sizes = [4, 16, 8], strides = [1, 1, 1]} : vector<4x16x24xf32> to vector<4x16x8xf32>
    %48 = vector.extract_strided_slice %46 {offsets = [0, 0, 8], sizes = [4, 16, 8], strides = [1, 1, 1]} : vector<4x16x24xf32> to vector<4x16x8xf32>
    %49 = vector.extract_strided_slice %46 {offsets = [0, 0, 16], sizes = [4, 16, 8], strides = [1, 1, 1]} : vector<4x16x24xf32> to vector<4x16x8xf32>
    %cst_24 = arith.constant dense<0.000000e+00> : vector<4x16x16xf32>
    %50 = tpu.matmul %47, %48, %cst_24 {dimension_numbers = #tpu.dot_dimension_numbers<[2], [2], [1], [1], [0, 0, 0, 1, 1, 1], [0], [0]>} : vector<4x16x8xf32>, vector<4x16x8xf32>, vector<4x16x16xf32> -> vector<4x16x16xf32>
    %51 = arith.addf %50, %14 : vector<4x16x16xf32>
    %cst_25 = arith.constant dense<0xFF800000> : vector<4x16xf32>
    %52 = vector.multi_reduction <maximumf>, %51, %cst_25 [2] : vector<4x16x16xf32> to vector<4x16xf32>
    %53 = vector.shape_cast %52 : vector<4x16xf32> to vector<4x16x1xf32>
    %54 = vector.broadcast %53 : vector<4x16x1xf32> to vector<4x16x16xf32>
    %55 = arith.subf %51, %54 : vector<4x16x16xf32>
    %56 = math.exp %55 : vector<4x16x16xf32>
    %cst_26 = arith.constant dense<0.000000e+00> : vector<4x16xf32>
    %57 = vector.multi_reduction <add>, %56, %cst_26 [2] : vector<4x16x16xf32> to vector<4x16xf32>
    %58 = vector.shape_cast %57 : vector<4x16xf32> to vector<4x16x1xf32>
    %59 = vector.broadcast %58 : vector<4x16x1xf32> to vector<4x16x16xf32>
    %60 = arith.divf %56, %59 : vector<4x16x16xf32>
    %cst_27 = arith.constant dense<0.000000e+00> : vector<4x16x8xf32>
    %61 = tpu.matmul %60, %49, %cst_27 {dimension_numbers = #tpu.dot_dimension_numbers<[2], [1], [1], [2], [0, 0, 0, 1, 1, 2], [0], [0]>} : vector<4x16x16xf32>, vector<4x16x8xf32>, vector<4x16x8xf32> -> vector<4x16x8xf32>
    %c0_28 = arith.constant 0 : index
    %c0_29 = arith.constant 0 : index
    %c0_30 = arith.constant 0 : index
    %c0_31 = arith.constant 0 : index
    %62 = vector.load %arg8[%c0_28, %c0_29, %c0_30, %c0_31] : memref<2x4x8x32xf32, #tpu.memory_space<vmem>>, vector<1x4x8x32xf32>
    %63 = vector.shape_cast %62 : vector<1x4x8x32xf32> to vector<4x8x32xf32>
    %cst_32 = arith.constant dense<0.000000e+00> : vector<4x16x32xf32>
    %64 = tpu.matmul %61, %63, %cst_32 {dimension_numbers = #tpu.dot_dimension_numbers<[2], [1], [1], [2], [0, 0, 0, 1, 1, 2], [0], [0]>} : vector<4x16x8xf32>, vector<4x8x32xf32>, vector<4x16x32xf32> -> vector<4x16x32xf32>
    %cst_33 = arith.constant dense<0.000000e+00> : vector<16x32xf32>
    %65 = vector.multi_reduction <add>, %64, %cst_33 [0] : vector<4x16x32xf32> to vector<16x32xf32>
    %c0_34 = arith.constant 0 : index
    %c0_35 = arith.constant 0 : index
    %c0_36 = arith.constant 0 : index
    %66 = vector.load %arg9[%c0_34, %c0_35, %c0_36] : memref<2x1x32xf32, #tpu.memory_space<vmem>>, vector<1x1x32xf32>
    %67 = vector.shape_cast %66 : vector<1x1x32xf32> to vector<1x32xf32>
    %68 = vector.broadcast %67 : vector<1x32xf32> to vector<16x32xf32>
    %69 = arith.addf %65, %68 : vector<16x32xf32>
    %70 = arith.addf %13, %69 : vector<16x32xf32>
    %c0_37 = arith.constant 0 : index
    %c0_38 = arith.constant 0 : index
    %c0_39 = arith.constant 0 : index
    %71 = vector.load %arg10[%c0_37, %c0_38, %c0_39] : memref<2x1x32xf32, #tpu.memory_space<vmem>>, vector<1x1x32xf32>
    %72 = vector.shape_cast %71 : vector<1x1x32xf32> to vector<1x32xf32>
    %c0_40 = arith.constant 0 : index
    %c0_41 = arith.constant 0 : index
    %c0_42 = arith.constant 0 : index
    %73 = vector.load %arg11[%c0_40, %c0_41, %c0_42] : memref<2x1x32xf32, #tpu.memory_space<vmem>>, vector<1x1x32xf32>
    %74 = vector.shape_cast %73 : vector<1x1x32xf32> to vector<1x32xf32>
    %cst_43 = arith.constant dense<0.000000e+00> : vector<16xf32>
    %75 = vector.multi_reduction <add>, %70, %cst_43 [1] : vector<16x32xf32> to vector<16xf32>
    %76 = vector.shape_cast %75 : vector<16xf32> to vector<16x1xf32>
    %cst_44 = arith.constant 3.200000e+01 : f32
    %77 = vector.broadcast %cst_44 : f32 to vector<16x1xf32>
    %78 = arith.divf %76, %77 : vector<16x1xf32>
    %79 = vector.broadcast %78 : vector<16x1xf32> to vector<16x32xf32>
    %80 = arith.subf %70, %79 : vector<16x32xf32>
    %81 = arith.mulf %80, %80 : vector<16x32xf32>
    %cst_45 = arith.constant dense<0.000000e+00> : vector<16xf32>
    %82 = vector.multi_reduction <add>, %81, %cst_45 [1] : vector<16x32xf32> to vector<16xf32>
    %83 = vector.shape_cast %82 : vector<16xf32> to vector<16x1xf32>
    %cst_46 = arith.constant 3.200000e+01 : f32
    %84 = vector.broadcast %cst_46 : f32 to vector<16x1xf32>
    %85 = arith.divf %83, %84 : vector<16x1xf32>
    %86 = vector.broadcast %78 : vector<16x1xf32> to vector<16x32xf32>
    %87 = arith.subf %70, %86 : vector<16x32xf32>
    %cst_47 = arith.constant 9.99999974E-6 : f32
    %88 = vector.broadcast %cst_47 : f32 to vector<16x1xf32>
    %89 = arith.addf %85, %88 : vector<16x1xf32>
    %90 = math.rsqrt %89 : vector<16x1xf32>
    %91 = vector.broadcast %90 : vector<16x1xf32> to vector<16x32xf32>
    %92 = arith.mulf %87, %91 : vector<16x32xf32>
    %93 = vector.broadcast %72 : vector<1x32xf32> to vector<16x32xf32>
    %94 = arith.mulf %92, %93 : vector<16x32xf32>
    %95 = vector.broadcast %74 : vector<1x32xf32> to vector<16x32xf32>
    %96 = arith.addf %94, %95 : vector<16x32xf32>
    %c0_48 = arith.constant 0 : index
    %c0_49 = arith.constant 0 : index
    %c0_50 = arith.constant 0 : index
    %97 = vector.load %arg12[%c0_48, %c0_49, %c0_50] : memref<2x32x128xf32, #tpu.memory_space<vmem>>, vector<1x32x128xf32>
    %98 = vector.shape_cast %97 : vector<1x32x128xf32> to vector<32x128xf32>
    %cst_51 = arith.constant dense<0.000000e+00> : vector<16x128xf32>
    %99 = tpu.matmul %96, %98, %cst_51 {dimension_numbers = #tpu.dot_dimension_numbers<[1], [0], [0], [1], [0, 0, 1, 1], [], []>} : vector<16x32xf32>, vector<32x128xf32>, vector<16x128xf32> -> vector<16x128xf32>
    %c0_52 = arith.constant 0 : index
    %c0_53 = arith.constant 0 : index
    %c0_54 = arith.constant 0 : index
    %100 = vector.load %arg13[%c0_52, %c0_53, %c0_54] : memref<2x1x128xf32, #tpu.memory_space<vmem>>, vector<1x1x128xf32>
    %101 = vector.shape_cast %100 : vector<1x1x128xf32> to vector<1x128xf32>
    %102 = vector.broadcast %101 : vector<1x128xf32> to vector<16x128xf32>
    %103 = arith.addf %99, %102 : vector<16x128xf32>
    %cst_55 = arith.constant 5.000000e-01 : f32
    %104 = vector.broadcast %cst_55 : f32 to vector<16x128xf32>
    %105 = arith.mulf %104, %103 : vector<16x128xf32>
    %cst_56 = arith.constant 4.471500e-02 : f32
    %106 = vector.broadcast %cst_56 : f32 to vector<16x128xf32>
    %107 = arith.mulf %106, %103 : vector<16x128xf32>
    %108 = arith.mulf %107, %103 : vector<16x128xf32>
    %109 = arith.mulf %108, %103 : vector<16x128xf32>
    %110 = arith.addf %103, %109 : vector<16x128xf32>
    %cst_57 = arith.constant 0.797884583 : f32
    %111 = vector.broadcast %cst_57 : f32 to vector<16x128xf32>
    %112 = arith.mulf %111, %110 : vector<16x128xf32>
    %113 = math.tanh %112 : vector<16x128xf32>
    %cst_58 = arith.constant 1.000000e+00 : f32
    %114 = vector.broadcast %cst_58 : f32 to vector<16x128xf32>
    %115 = arith.addf %114, %113 : vector<16x128xf32>
    %116 = arith.mulf %105, %115 : vector<16x128xf32>
    %c0_59 = arith.constant 0 : index
    %c0_60 = arith.constant 0 : index
    %c0_61 = arith.constant 0 : index
    %117 = vector.load %arg14[%c0_59, %c0_60, %c0_61] : memref<2x128x32xf32, #tpu.memory_space<vmem>>, vector<1x128x32xf32>
    %118 = vector.shape_cast %117 : vector<1x128x32xf32> to vector<128x32xf32>
    %cst_62 = arith.constant dense<0.000000e+00> : vector<16x32xf32>
    %119 = tpu.matmul %116, %118, %cst_62 {dimension_numbers = #tpu.dot_dimension_numbers<[1], [0], [0], [1], [0, 0, 1, 1], [], []>} : vector<16x128xf32>, vector<128x32xf32>, vector<16x32xf32> -> vector<16x32xf32>
    %c0_63 = arith.constant 0 : index
    %c0_64 = arith.constant 0 : index
    %c0_65 = arith.constant 0 : index
    %120 = vector.load %arg15[%c0_63, %c0_64, %c0_65] : memref<2x1x32xf32, #tpu.memory_space<vmem>>, vector<1x1x32xf32>
    %121 = vector.shape_cast %120 : vector<1x1x32xf32> to vector<1x32xf32>
    %122 = vector.broadcast %121 : vector<1x32xf32> to vector<16x32xf32>
    %123 = arith.addf %119, %122 : vector<16x32xf32>
    %124 = arith.addf %70, %123 : vector<16x32xf32>
    %c1 = arith.constant 1 : index
    %c0_66 = arith.constant 0 : index
    %c0_67 = arith.constant 0 : index
    %125 = vector.load %arg5[%c1, %c0_66, %c0_67] : memref<2x1x32xf32, #tpu.memory_space<vmem>>, vector<1x1x32xf32>
    %126 = vector.shape_cast %125 : vector<1x1x32xf32> to vector<1x32xf32>
    %c1_68 = arith.constant 1 : index
    %c0_69 = arith.constant 0 : index
    %c0_70 = arith.constant 0 : index
    %127 = vector.load %arg6[%c1_68, %c0_69, %c0_70] : memref<2x1x32xf32, #tpu.memory_space<vmem>>, vector<1x1x32xf32>
    %128 = vector.shape_cast %127 : vector<1x1x32xf32> to vector<1x32xf32>
    %cst_71 = arith.constant dense<0.000000e+00> : vector<16xf32>
    %129 = vector.multi_reduction <add>, %124, %cst_71 [1] : vector<16x32xf32> to vector<16xf32>
    %130 = vector.shape_cast %129 : vector<16xf32> to vector<16x1xf32>
    %cst_72 = arith.constant 3.200000e+01 : f32
    %131 = vector.broadcast %cst_72 : f32 to vector<16x1xf32>
    %132 = arith.divf %130, %131 : vector<16x1xf32>
    %133 = vector.broadcast %132 : vector<16x1xf32> to vector<16x32xf32>
    %134 = arith.subf %124, %133 : vector<16x32xf32>
    %135 = arith.mulf %134, %134 : vector<16x32xf32>
    %cst_73 = arith.constant dense<0.000000e+00> : vector<16xf32>
    %136 = vector.multi_reduction <add>, %135, %cst_73 [1] : vector<16x32xf32> to vector<16xf32>
    %137 = vector.shape_cast %136 : vector<16xf32> to vector<16x1xf32>
    %cst_74 = arith.constant 3.200000e+01 : f32
    %138 = vector.broadcast %cst_74 : f32 to vector<16x1xf32>
    %139 = arith.divf %137, %138 : vector<16x1xf32>
    %140 = vector.broadcast %132 : vector<16x1xf32> to vector<16x32xf32>
    %141 = arith.subf %124, %140 : vector<16x32xf32>
    %cst_75 = arith.constant 9.99999974E-6 : f32
    %142 = vector.broadcast %cst_75 : f32 to vector<16x1xf32>
    %143 = arith.addf %139, %142 : vector<16x1xf32>
    %144 = math.rsqrt %143 : vector<16x1xf32>
    %145 = vector.broadcast %144 : vector<16x1xf32> to vector<16x32xf32>
    %146 = arith.mulf %141, %145 : vector<16x32xf32>
    %147 = vector.broadcast %126 : vector<1x32xf32> to vector<16x32xf32>
    %148 = arith.mulf %146, %147 : vector<16x32xf32>
    %149 = vector.broadcast %128 : vector<1x32xf32> to vector<16x32xf32>
    %150 = arith.addf %148, %149 : vector<16x32xf32>
    %151 = vector.shape_cast %150 : vector<16x32xf32> to vector<1x16x32xf32>
    %152 = vector.shape_cast %151 : vector<1x16x32xf32> to vector<1x16x32xf32>
    %153 = vector.broadcast %152 : vector<1x16x32xf32> to vector<4x16x32xf32>
    %c1_76 = arith.constant 1 : index
    %c0_77 = arith.constant 0 : index
    %c0_78 = arith.constant 0 : index
    %c0_79 = arith.constant 0 : index
    %154 = vector.load %arg7[%c1_76, %c0_77, %c0_78, %c0_79] : memref<2x4x32x24xf32, #tpu.memory_space<vmem>>, vector<1x4x32x24xf32>
    %155 = vector.shape_cast %154 : vector<1x4x32x24xf32> to vector<4x32x24xf32>
    %cst_80 = arith.constant dense<0.000000e+00> : vector<4x16x24xf32>
    %156 = tpu.matmul %153, %155, %cst_80 {dimension_numbers = #tpu.dot_dimension_numbers<[2], [1], [1], [2], [0, 0, 0, 1, 1, 2], [0], [0]>} : vector<4x16x32xf32>, vector<4x32x24xf32>, vector<4x16x24xf32> -> vector<4x16x24xf32>
    %157 = vector.extract_strided_slice %156 {offsets = [0, 0, 0], sizes = [4, 16, 8], strides = [1, 1, 1]} : vector<4x16x24xf32> to vector<4x16x8xf32>
    %158 = vector.extract_strided_slice %156 {offsets = [0, 0, 8], sizes = [4, 16, 8], strides = [1, 1, 1]} : vector<4x16x24xf32> to vector<4x16x8xf32>
    %159 = vector.extract_strided_slice %156 {offsets = [0, 0, 16], sizes = [4, 16, 8], strides = [1, 1, 1]} : vector<4x16x24xf32> to vector<4x16x8xf32>
    %cst_81 = arith.constant dense<0.000000e+00> : vector<4x16x16xf32>
    %160 = tpu.matmul %157, %158, %cst_81 {dimension_numbers = #tpu.dot_dimension_numbers<[2], [2], [1], [1], [0, 0, 0, 1, 1, 1], [0], [0]>} : vector<4x16x8xf32>, vector<4x16x8xf32>, vector<4x16x16xf32> -> vector<4x16x16xf32>
    %161 = arith.addf %160, %14 : vector<4x16x16xf32>
    %cst_82 = arith.constant dense<0xFF800000> : vector<4x16xf32>
    %162 = vector.multi_reduction <maximumf>, %161, %cst_82 [2] : vector<4x16x16xf32> to vector<4x16xf32>
    %163 = vector.shape_cast %162 : vector<4x16xf32> to vector<4x16x1xf32>
    %164 = vector.broadcast %163 : vector<4x16x1xf32> to vector<4x16x16xf32>
    %165 = arith.subf %161, %164 : vector<4x16x16xf32>
    %166 = math.exp %165 : vector<4x16x16xf32>
    %cst_83 = arith.constant dense<0.000000e+00> : vector<4x16xf32>
    %167 = vector.multi_reduction <add>, %166, %cst_83 [2] : vector<4x16x16xf32> to vector<4x16xf32>
    %168 = vector.shape_cast %167 : vector<4x16xf32> to vector<4x16x1xf32>
    %169 = vector.broadcast %168 : vector<4x16x1xf32> to vector<4x16x16xf32>
    %170 = arith.divf %166, %169 : vector<4x16x16xf32>
    %cst_84 = arith.constant dense<0.000000e+00> : vector<4x16x8xf32>
    %171 = tpu.matmul %170, %159, %cst_84 {dimension_numbers = #tpu.dot_dimension_numbers<[2], [1], [1], [2], [0, 0, 0, 1, 1, 2], [0], [0]>} : vector<4x16x16xf32>, vector<4x16x8xf32>, vector<4x16x8xf32> -> vector<4x16x8xf32>
    %c1_85 = arith.constant 1 : index
    %c0_86 = arith.constant 0 : index
    %c0_87 = arith.constant 0 : index
    %c0_88 = arith.constant 0 : index
    %172 = vector.load %arg8[%c1_85, %c0_86, %c0_87, %c0_88] : memref<2x4x8x32xf32, #tpu.memory_space<vmem>>, vector<1x4x8x32xf32>
    %173 = vector.shape_cast %172 : vector<1x4x8x32xf32> to vector<4x8x32xf32>
    %cst_89 = arith.constant dense<0.000000e+00> : vector<4x16x32xf32>
    %174 = tpu.matmul %171, %173, %cst_89 {dimension_numbers = #tpu.dot_dimension_numbers<[2], [1], [1], [2], [0, 0, 0, 1, 1, 2], [0], [0]>} : vector<4x16x8xf32>, vector<4x8x32xf32>, vector<4x16x32xf32> -> vector<4x16x32xf32>
    %cst_90 = arith.constant dense<0.000000e+00> : vector<16x32xf32>
    %175 = vector.multi_reduction <add>, %174, %cst_90 [0] : vector<4x16x32xf32> to vector<16x32xf32>
    %c1_91 = arith.constant 1 : index
    %c0_92 = arith.constant 0 : index
    %c0_93 = arith.constant 0 : index
    %176 = vector.load %arg9[%c1_91, %c0_92, %c0_93] : memref<2x1x32xf32, #tpu.memory_space<vmem>>, vector<1x1x32xf32>
    %177 = vector.shape_cast %176 : vector<1x1x32xf32> to vector<1x32xf32>
    %178 = vector.broadcast %177 : vector<1x32xf32> to vector<16x32xf32>
    %179 = arith.addf %175, %178 : vector<16x32xf32>
    %180 = arith.addf %124, %179 : vector<16x32xf32>
    %c1_94 = arith.constant 1 : index
    %c0_95 = arith.constant 0 : index
    %c0_96 = arith.constant 0 : index
    %181 = vector.load %arg10[%c1_94, %c0_95, %c0_96] : memref<2x1x32xf32, #tpu.memory_space<vmem>>, vector<1x1x32xf32>
    %182 = vector.shape_cast %181 : vector<1x1x32xf32> to vector<1x32xf32>
    %c1_97 = arith.constant 1 : index
    %c0_98 = arith.constant 0 : index
    %c0_99 = arith.constant 0 : index
    %183 = vector.load %arg11[%c1_97, %c0_98, %c0_99] : memref<2x1x32xf32, #tpu.memory_space<vmem>>, vector<1x1x32xf32>
    %184 = vector.shape_cast %183 : vector<1x1x32xf32> to vector<1x32xf32>
    %cst_100 = arith.constant dense<0.000000e+00> : vector<16xf32>
    %185 = vector.multi_reduction <add>, %180, %cst_100 [1] : vector<16x32xf32> to vector<16xf32>
    %186 = vector.shape_cast %185 : vector<16xf32> to vector<16x1xf32>
    %cst_101 = arith.constant 3.200000e+01 : f32
    %187 = vector.broadcast %cst_101 : f32 to vector<16x1xf32>
    %188 = arith.divf %186, %187 : vector<16x1xf32>
    %189 = vector.broadcast %188 : vector<16x1xf32> to vector<16x32xf32>
    %190 = arith.subf %180, %189 : vector<16x32xf32>
    %191 = arith.mulf %190, %190 : vector<16x32xf32>
    %cst_102 = arith.constant dense<0.000000e+00> : vector<16xf32>
    %192 = vector.multi_reduction <add>, %191, %cst_102 [1] : vector<16x32xf32> to vector<16xf32>
    %193 = vector.shape_cast %192 : vector<16xf32> to vector<16x1xf32>
    %cst_103 = arith.constant 3.200000e+01 : f32
    %194 = vector.broadcast %cst_103 : f32 to vector<16x1xf32>
    %195 = arith.divf %193, %194 : vector<16x1xf32>
    %196 = vector.broadcast %188 : vector<16x1xf32> to vector<16x32xf32>
    %197 = arith.subf %180, %196 : vector<16x32xf32>
    %cst_104 = arith.constant 9.99999974E-6 : f32
    %198 = vector.broadcast %cst_104 : f32 to vector<16x1xf32>
    %199 = arith.addf %195, %198 : vector<16x1xf32>
    %200 = math.rsqrt %199 : vector<16x1xf32>
    %201 = vector.broadcast %200 : vector<16x1xf32> to vector<16x32xf32>
    %202 = arith.mulf %197, %201 : vector<16x32xf32>
    %203 = vector.broadcast %182 : vector<1x32xf32> to vector<16x32xf32>
    %204 = arith.mulf %202, %203 : vector<16x32xf32>
    %205 = vector.broadcast %184 : vector<1x32xf32> to vector<16x32xf32>
    %206 = arith.addf %204, %205 : vector<16x32xf32>
    %c1_105 = arith.constant 1 : index
    %c0_106 = arith.constant 0 : index
    %c0_107 = arith.constant 0 : index
    %207 = vector.load %arg12[%c1_105, %c0_106, %c0_107] : memref<2x32x128xf32, #tpu.memory_space<vmem>>, vector<1x32x128xf32>
    %208 = vector.shape_cast %207 : vector<1x32x128xf32> to vector<32x128xf32>
    %cst_108 = arith.constant dense<0.000000e+00> : vector<16x128xf32>
    %209 = tpu.matmul %206, %208, %cst_108 {dimension_numbers = #tpu.dot_dimension_numbers<[1], [0], [0], [1], [0, 0, 1, 1], [], []>} : vector<16x32xf32>, vector<32x128xf32>, vector<16x128xf32> -> vector<16x128xf32>
    %c1_109 = arith.constant 1 : index
    %c0_110 = arith.constant 0 : index
    %c0_111 = arith.constant 0 : index
    %210 = vector.load %arg13[%c1_109, %c0_110, %c0_111] : memref<2x1x128xf32, #tpu.memory_space<vmem>>, vector<1x1x128xf32>
    %211 = vector.shape_cast %210 : vector<1x1x128xf32> to vector<1x128xf32>
    %212 = vector.broadcast %211 : vector<1x128xf32> to vector<16x128xf32>
    %213 = arith.addf %209, %212 : vector<16x128xf32>
    %cst_112 = arith.constant 5.000000e-01 : f32
    %214 = vector.broadcast %cst_112 : f32 to vector<16x128xf32>
    %215 = arith.mulf %214, %213 : vector<16x128xf32>
    %cst_113 = arith.constant 4.471500e-02 : f32
    %216 = vector.broadcast %cst_113 : f32 to vector<16x128xf32>
    %217 = arith.mulf %216, %213 : vector<16x128xf32>
    %218 = arith.mulf %217, %213 : vector<16x128xf32>
    %219 = arith.mulf %218, %213 : vector<16x128xf32>
    %220 = arith.addf %213, %219 : vector<16x128xf32>
    %cst_114 = arith.constant 0.797884583 : f32
    %221 = vector.broadcast %cst_114 : f32 to vector<16x128xf32>
    %222 = arith.mulf %221, %220 : vector<16x128xf32>
    %223 = math.tanh %222 : vector<16x128xf32>
    %cst_115 = arith.constant 1.000000e+00 : f32
    %224 = vector.broadcast %cst_115 : f32 to vector<16x128xf32>
    %225 = arith.addf %224, %223 : vector<16x128xf32>
    %226 = arith.mulf %215, %225 : vector<16x128xf32>
    %c1_116 = arith.constant 1 : index
    %c0_117 = arith.constant 0 : index
    %c0_118 = arith.constant 0 : index
    %227 = vector.load %arg14[%c1_116, %c0_117, %c0_118] : memref<2x128x32xf32, #tpu.memory_space<vmem>>, vector<1x128x32xf32>
    %228 = vector.shape_cast %227 : vector<1x128x32xf32> to vector<128x32xf32>
    %cst_119 = arith.constant dense<0.000000e+00> : vector<16x32xf32>
    %229 = tpu.matmul %226, %228, %cst_119 {dimension_numbers = #tpu.dot_dimension_numbers<[1], [0], [0], [1], [0, 0, 1, 1], [], []>} : vector<16x128xf32>, vector<128x32xf32>, vector<16x32xf32> -> vector<16x32xf32>
    %c1_120 = arith.constant 1 : index
    %c0_121 = arith.constant 0 : index
    %c0_122 = arith.constant 0 : index
    %230 = vector.load %arg15[%c1_120, %c0_121, %c0_122] : memref<2x1x32xf32, #tpu.memory_space<vmem>>, vector<1x1x32xf32>
    %231 = vector.shape_cast %230 : vector<1x1x32xf32> to vector<1x32xf32>
    %232 = vector.broadcast %231 : vector<1x32xf32> to vector<16x32xf32>
    %233 = arith.addf %229, %232 : vector<16x32xf32>
    %234 = arith.addf %180, %233 : vector<16x32xf32>
    %c0_123 = arith.constant 0 : index
    %c0_124 = arith.constant 0 : index
    %235 = vector.load %arg16[%c0_123, %c0_124] : memref<1x32xf32, #tpu.memory_space<vmem>>, vector<1x32xf32>
    %c0_125 = arith.constant 0 : index
    %c0_126 = arith.constant 0 : index
    %236 = vector.load %arg17[%c0_125, %c0_126] : memref<1x32xf32, #tpu.memory_space<vmem>>, vector<1x32xf32>
    %cst_127 = arith.constant dense<0.000000e+00> : vector<16xf32>
    %237 = vector.multi_reduction <add>, %234, %cst_127 [1] : vector<16x32xf32> to vector<16xf32>
    %238 = vector.shape_cast %237 : vector<16xf32> to vector<16x1xf32>
    %cst_128 = arith.constant 3.200000e+01 : f32
    %239 = vector.broadcast %cst_128 : f32 to vector<16x1xf32>
    %240 = arith.divf %238, %239 : vector<16x1xf32>
    %241 = vector.broadcast %240 : vector<16x1xf32> to vector<16x32xf32>
    %242 = arith.subf %234, %241 : vector<16x32xf32>
    %243 = arith.mulf %242, %242 : vector<16x32xf32>
    %cst_129 = arith.constant dense<0.000000e+00> : vector<16xf32>
    %244 = vector.multi_reduction <add>, %243, %cst_129 [1] : vector<16x32xf32> to vector<16xf32>
    %245 = vector.shape_cast %244 : vector<16xf32> to vector<16x1xf32>
    %cst_130 = arith.constant 3.200000e+01 : f32
    %246 = vector.broadcast %cst_130 : f32 to vector<16x1xf32>
    %247 = arith.divf %245, %246 : vector<16x1xf32>
    %248 = vector.broadcast %240 : vector<16x1xf32> to vector<16x32xf32>
    %249 = arith.subf %234, %248 : vector<16x32xf32>
    %cst_131 = arith.constant 9.99999974E-6 : f32
    %250 = vector.broadcast %cst_131 : f32 to vector<16x1xf32>
    %251 = arith.addf %247, %250 : vector<16x1xf32>
    %252 = math.rsqrt %251 : vector<16x1xf32>
    %253 = vector.broadcast %252 : vector<16x1xf32> to vector<16x32xf32>
    %254 = arith.mulf %249, %253 : vector<16x32xf32>
    %255 = vector.broadcast %235 : vector<1x32xf32> to vector<16x32xf32>
    %256 = arith.mulf %254, %255 : vector<16x32xf32>
    %257 = vector.broadcast %236 : vector<1x32xf32> to vector<16x32xf32>
    %258 = arith.addf %256, %257 : vector<16x32xf32>
    %c0_132 = arith.constant 0 : index
    %c0_133 = arith.constant 0 : index
    %259 = vector.load %arg18[%c0_132, %c0_133] : memref<16x32xf32, #tpu.memory_space<vmem>>, vector<16x32xf32>
    tpu.vector_store %arg18[%c0_132, %c0_133], %258 {strides = array<i32>} : memref<16x32xf32, #tpu.memory_space<vmem>>, vector<16x32xf32>,
    return
  }
  func.func @transform_0(%arg0: i32) -> (i32, i32) {
    %c0_i32 = arith.constant 0 : i32
    %c0_i32_0 = arith.constant 0 : i32
    %c0_i32_1 = arith.constant 0 : i32
    return %c0_i32, %c0_i32_0 : i32, i32
  }
  func.func @transform_1(%arg0: i32) -> (i32, i32) {
    %c0_i32 = arith.constant 0 : i32
    %c0_i32_0 = arith.constant 0 : i32
    %c0_i32_1 = arith.constant 0 : i32
    return %c0_i32, %c0_i32_0 : i32, i32
  }
  func.func @transform_2(%arg0: i32) -> (i32, i32, i32) {
    %c0_i32 = arith.constant 0 : i32
    %c0_i32_0 = arith.constant 0 : i32
    %c0_i32_1 = arith.constant 0 : i32
    %c0_i32_2 = arith.constant 0 : i32
    return %c0_i32, %c0_i32_0, %c0_i32_1 : i32, i32, i32
  }
  func.func @transform_3(%arg0: i32) -> (i32, i32) {
    %c0_i32 = arith.constant 0 : i32
    %c0_i32_0 = arith.constant 0 : i32
    %c0_i32_1 = arith.constant 0 : i32
    return %c0_i32, %c0_i32_0 : i32, i32
  }
  func.func @transform_4(%arg0: i32) -> (i32, i32, i32) {
    %c0_i32 = arith.constant 0 : i32
    %c0_i32_0 = arith.constant 0 : i32
    %c0_i32_1 = arith.constant 0 : i32
    %c0_i32_2 = arith.constant 0 : i32
    return %c0_i32, %c0_i32_0, %c0_i32_1 : i32, i32, i32
  }
  func.func @transform_5(%arg0: i32) -> (i32, i32, i32) {
    %c0_i32 = arith.constant 0 : i32
    %c0_i32_0 = arith.constant 0 : i32
    %c0_i32_1 = arith.constant 0 : i32
    %c0_i32_2 = arith.constant 0 : i32
    return %c0_i32, %c0_i32_0, %c0_i32_1 : i32, i32, i32
  }
  func.func @transform_6(%arg0: i32) -> (i32, i32, i32, i32) {
    %c0_i32 = arith.constant 0 : i32
    %c0_i32_0 = arith.constant 0 : i32
    %c0_i32_1 = arith.constant 0 : i32
    %c0_i32_2 = arith.constant 0 : i32
    %c0_i32_3 = arith.constant 0 : i32
    return %c0_i32, %c0_i32_0, %c0_i32_1, %c0_i32_2 : i32, i32, i32, i32
  }
  func.func @transform_7(%arg0: i32) -> (i32, i32, i32, i32) {
    %c0_i32 = arith.constant 0 : i32
    %c0_i32_0 = arith.constant 0 : i32
    %c0_i32_1 = arith.constant 0 : i32
    %c0_i32_2 = arith.constant 0 : i32
    %c0_i32_3 = arith.constant 0 : i32
    return %c0_i32, %c0_i32_0, %c0_i32_1, %c0_i32_2 : i32, i32, i32, i32
  }
  func.func @transform_8(%arg0: i32) -> (i32, i32, i32) {
    %c0_i32 = arith.constant 0 : i32
    %c0_i32_0 = arith.constant 0 : i32
    %c0_i32_1 = arith.constant 0 : i32
    %c0_i32_2 = arith.constant 0 : i32
    return %c0_i32, %c0_i32_0, %c0_i32_1 : i32, i32, i32
  }
  func.func @transform_9(%arg0: i32) -> (i32, i32, i32) {
    %c0_i32 = arith.constant 0 : i32
    %c0_i32_0 = arith.constant 0 : i32
    %c0_i32_1 = arith.constant 0 : i32
    %c0_i32_2 = arith.constant 0 : i32
    return %c0_i32, %c0_i32_0, %c0_i32_1 : i32, i32, i32
  }
  func.func @transform_10(%arg0: i32) -> (i32, i32, i32) {
    %c0_i32 = arith.constant 0 : i32
    %c0_i32_0 = arith.constant 0 : i32
    %c0_i32_1 = arith.constant 0 : i32
    %c0_i32_2 = arith.constant 0 : i32
    return %c0_i32, %c0_i32_0, %c0_i32_1 : i32, i32, i32
  }
  func.func @transform_11(%arg0: i32) -> (i32, i32, i32) {
    %c0_i32 = arith.constant 0 : i32
    %c0_i32_0 = arith.constant 0 : i32
    %c0_i32_1 = arith.constant 0 : i32
    %c0_i32_2 = arith.constant 0 : i32
    return %c0_i32, %c0_i32_0, %c0_i32_1 : i32, i32, i32
  }
  func.func @transform_12(%arg0: i32) -> (i32, i32, i32) {
    %c0_i32 = arith.constant 0 : i32
    %c0_i32_0 = arith.constant 0 : i32
    %c0_i32_1 = arith.constant 0 : i32
    %c0_i32_2 = arith.constant 0 : i32
    return %c0_i32, %c0_i32_0, %c0_i32_1 : i32, i32, i32
  }
  func.func @transform_13(%arg0: i32) -> (i32, i32, i32) {
    %c0_i32 = arith.constant 0 : i32
    %c0_i32_0 = arith.constant 0 : i32
    %c0_i32_1 = arith.constant 0 : i32
    %c0_i32_2 = arith.constant 0 : i32
    return %c0_i32, %c0_i32_0, %c0_i32_1 : i32, i32, i32
  }
  func.func @transform_14(%arg0: i32) -> (i32, i32, i32) {
    %c0_i32 = arith.constant 0 : i32
    %c0_i32_0 = arith.constant 0 : i32
    %c0_i32_1 = arith.constant 0 : i32
    %c0_i32_2 = arith.constant 0 : i32
    return %c0_i32, %c0_i32_0, %c0_i32_1 : i32, i32, i32
  }
  func.func @transform_15(%arg0: i32) -> (i32, i32) {
    %c0_i32 = arith.constant 0 : i32
    %c0_i32_0 = arith.constant 0 : i32
    %c0_i32_1 = arith.constant 0 : i32
    return %c0_i32, %c0_i32_0 : i32, i32
  }
  func.func @transform_16(%arg0: i32) -> (i32, i32) {
    %c0_i32 = arith.constant 0 : i32
    %c0_i32_0 = arith.constant 0 : i32
    %c0_i32_1 = arith.constant 0 : i32
    return %c0_i32, %c0_i32_0 : i32, i32
  }
  func.func @transform_17(%arg0: i32) -> (i32, i32) {
    %c0_i32 = arith.constant 0 : i32
    %c0_i32_0 = arith.constant 0 : i32
    %c0_i32_1 = arith.constant 0 : i32
    return %c0_i32, %c0_i32_0 : i32, i32
  }
}

</mosaic_0001>

<llo_original>
// kernel: tpu_custom_call.1
$region0: #{tpu_custom_call.1}
  #allocation0 [shape = 'u32[]', space=smem, size = 0x4, offset = 0x4, fixed_abs, tag = 'smem constant byte address 0x4 - core index']
  #allocation1 [shape = 'u32[144,128]{1,0:T(1,128)}', space=vmem, size = 0x12000, scoped, tag = 'internal scratch']
  %s0 = inlined_call_operand.vmem [shape: s32[16,1], index: 0, kind: input, shape index: {}]
  %s1 = inlined_call_operand.vmem [shape: s32[16,1], index: 1, kind: input, shape index: {}]
  %s2 = inlined_call_operand.vmem [shape: f32[4,16,16], index: 2, kind: input, shape index: {}]
  %s3 = inlined_call_operand.vmem [shape: f32[256,32], index: 3, kind: input, shape index: {}]
  %s4 = inlined_call_operand.vmem [shape: f32[2,1,32], index: 4, kind: input, shape index: {}]
  %s5 = inlined_call_operand.vmem [shape: f32[2,1,32], index: 5, kind: input, shape index: {}]
  %s6 = inlined_call_operand.vmem [shape: f32[2,4,32,24], index: 6, kind: input, shape index: {}]
  %s7 = inlined_call_operand.vmem [shape: f32[2,4,8,32], index: 7, kind: input, shape index: {}]
  %s8 = inlined_call_operand.vmem [shape: f32[2,1,32], index: 8, kind: input, shape index: {}]
  %s9 = inlined_call_operand.vmem [shape: f32[2,1,32], index: 9, kind: input, shape index: {}]
  %s10 = inlined_call_operand.vmem [shape: f32[2,1,32], index: 10, kind: input, shape index: {}]
  %s11 = inlined_call_operand.vmem [shape: f32[2,32,128], index: 11, kind: input, shape index: {}]
  %s12 = inlined_call_operand.vmem [shape: f32[2,1,128], index: 12, kind: input, shape index: {}]
  %s13 = inlined_call_operand.vmem [shape: f32[2,128,32], index: 13, kind: input, shape index: {}]
  %s14 = inlined_call_operand.vmem [shape: f32[2,1,32], index: 14, kind: input, shape index: {}]
  %s15 = inlined_call_operand.vmem [shape: f32[1,32], index: 15, kind: input, shape index: {}]
  %s16 = inlined_call_operand.vmem [shape: f32[1,32], index: 16, kind: input, shape index: {}]
  %s17 = inlined_call_operand.hbm [shape: f32[16,32], index: 17, kind: output, shape index: {}]
  %s18 = sld [smem:[#allocation0]]
  $region78: #{tpu_custom_call.1} parent=0
    _
  %s20 = ssub.s32 1, %s18
  %s21 = scalar_select 0, %s20, %s18
  $region1: #{tpu_custom_call.1} parent=0
    #allocation2 [shape = 'u8[8192]{0}', space=vmem, size = 0x2000, scoped, tag = 'output window, operand 0, single buffered']
    #allocation3 [shape = 's32[1]{0}', space=sflag, size = 0x4, scoped, tag = 'scoped memory for tpu_custom_call.1']
    %22 = vsyncpa [#allocation3], 0
    // Predicated region
    $region2: #{tpu_custom_call.1} parent=1 // pred_check
      _
    $region3: #{tpu_custom_call.1} parent=1 // pred_check_branch
      %24 = sbr.rel (0) target = $region5
    $region4: #{tpu_custom_call.1} parent=1 // pred_region
      _
    $region5: #{tpu_custom_call.1} parent=1 // pred_fallthru
      _
    // Predicated region
    $region6: #{tpu_custom_call.1} parent=1 // pred_check
      _
    $region7: #{tpu_custom_call.1} parent=1 // pred_check_branch
      %26 = sbr.rel (0) target = $region9
    $region8: #{tpu_custom_call.1} parent=1 // pred_region
      _
    $region9: #{tpu_custom_call.1} parent=1 // pred_fallthru
      _
    // Predicated region
    $region10: #{tpu_custom_call.1} parent=1 // pred_check
      _
    $region11: #{tpu_custom_call.1} parent=1 // pred_check_branch
      %28 = sbr.rel (0) target = $region13
    $region12: #{tpu_custom_call.1} parent=1 // pred_region
      _
    $region13: #{tpu_custom_call.1} parent=1 // pred_fallthru
      _
    // Predicated region
    $region14: #{tpu_custom_call.1} parent=1 // pred_check
      _
    $region15: #{tpu_custom_call.1} parent=1 // pred_check_branch
      %30 = sbr.rel (0) target = $region17
    $region16: #{tpu_custom_call.1} parent=1 // pred_region
      _
    $region17: #{tpu_custom_call.1} parent=1 // pred_fallthru
      _
    // Predicated region
    $region18: #{tpu_custom_call.1} parent=1 // pred_check
      _
    $region19: #{tpu_custom_call.1} parent=1 // pred_check_branch
      %32 = sbr.rel (0) target = $region21
    $region20: #{tpu_custom_call.1} parent=1 // pred_region
      _
    $region21: #{tpu_custom_call.1} parent=1 // pred_fallthru
      _
    // Predicated region
    $region22: #{tpu_custom_call.1} parent=1 // pred_check
      _
    $region23: #{tpu_custom_call.1} parent=1 // pred_check_branch
      %34 = sbr.rel (0) target = $region25
    $region24: #{tpu_custom_call.1} parent=1 // pred_region
      _
    $region25: #{tpu_custom_call.1} parent=1 // pred_fallthru
      _
    // Predicated region
    $region26: #{tpu_custom_call.1} parent=1 // pred_check
      _
    $region27: #{tpu_custom_call.1} parent=1 // pred_check_branch
      %36 = sbr.rel (0) target = $region29
    $region28: #{tpu_custom_call.1} parent=1 // pred_region
      _
    $region29: #{tpu_custom_call.1} parent=1 // pred_fallthru
      _
    // Predicated region
    $region30: #{tpu_custom_call.1} parent=1 // pred_check
      _
    $region31: #{tpu_custom_call.1} parent=1 // pred_check_branch
      %38 = sbr.rel (0) target = $region33
    $region32: #{tpu_custom_call.1} parent=1 // pred_region
      _
    $region33: #{tpu_custom_call.1} parent=1 // pred_fallthru
      _
    // Predicated region
    $region34: #{tpu_custom_call.1} parent=1 // pred_check
      _
    $region35: #{tpu_custom_call.1} parent=1 // pred_check_branch
      %40 = sbr.rel (0) target = $region37
    $region36: #{tpu_custom_call.1} parent=1 // pred_region
      _
    $region37: #{tpu_custom_call.1} parent=1 // pred_fallthru
      _
    // Predicated region
    $region38: #{tpu_custom_call.1} parent=1 // pred_check
      _
    $region39: #{tpu_custom_call.1} parent=1 // pred_check_branch
      %42 = sbr.rel (0) target = $region41
    $region40: #{tpu_custom_call.1} parent=1 // pred_region
      _
    $region41: #{tpu_custom_call.1} parent=1 // pred_fallthru
      _
    // Predicated region
    $region42: #{tpu_custom_call.1} parent=1 // pred_check
      _
    $region43: #{tpu_custom_call.1} parent=1 // pred_check_branch
      %44 = sbr.rel (0) target = $region45
    $region44: #{tpu_custom_call.1} parent=1 // pred_region
      _
    $region45: #{tpu_custom_call.1} parent=1 // pred_fallthru
      _
    // Predicated region
    $region46: #{tpu_custom_call.1} parent=1 // pred_check
      _
    $region47: #{tpu_custom_call.1} parent=1 // pred_check_branch
      %46 = sbr.rel (0) target = $region49
    $region48: #{tpu_custom_call.1} parent=1 // pred_region
      _
    $region49: #{tpu_custom_call.1} parent=1 // pred_fallthru
      _
    // Predicated region
    $region50: #{tpu_custom_call.1} parent=1 // pred_check
      _
    $region51: #{tpu_custom_call.1} parent=1 // pred_check_branch
      %48 = sbr.rel (0) target = $region53
    $region52: #{tpu_custom_call.1} parent=1 // pred_region
      _
    $region53: #{tpu_custom_call.1} parent=1 // pred_fallthru
      _
    // Predicated region
    $region54: #{tpu_custom_call.1} parent=1 // pred_check
      _
    $region55: #{tpu_custom_call.1} parent=1 // pred_check_branch
      %50 = sbr.rel (0) target = $region57
    $region56: #{tpu_custom_call.1} parent=1 // pred_region
      _
    $region57: #{tpu_custom_call.1} parent=1 // pred_fallthru
      _
    // Predicated region
    $region58: #{tpu_custom_call.1} parent=1 // pred_check
      _
    $region59: #{tpu_custom_call.1} parent=1 // pred_check_branch
      %52 = sbr.rel (0) target = $region61
    $region60: #{tpu_custom_call.1} parent=1 // pred_region
      _
    $region61: #{tpu_custom_call.1} parent=1 // pred_fallthru
      _
    // Predicated region
    $region62: #{tpu_custom_call.1} parent=1 // pred_check
      _
    $region63: #{tpu_custom_call.1} parent=1 // pred_check_branch
      %54 = sbr.rel (0) target = $region65
    $region64: #{tpu_custom_call.1} parent=1 // pred_region
      _
    $region65: #{tpu_custom_call.1} parent=1 // pred_fallthru
      _
    // Predicated region
    $region66: #{tpu_custom_call.1} parent=1 // pred_check
      _
    $region67: #{tpu_custom_call.1} parent=1 // pred_check_branch
      %56 = sbr.rel (0) target = $region69
    $region68: #{tpu_custom_call.1} parent=1 // pred_region
      _
    $region69: #{tpu_custom_call.1} parent=1 // pred_fallthru
      _
    %v57 = vld [vmem:[%s0] sm:$0xff]
    %v58 = vld [vmem:[%s0 + $0x8] sm:$0xff]
    %v59 = vld [vmem:[%s1] sm:$0xff]
    %v60 = vld [vmem:[%s1 + $0x8] sm:$0xff]
    %v61 = vlaneseq
    %v62 = vand.u32 %v61, 127
    %v63 = vadd.s32 %v62, 128
    %64 = vset.pattern.permute.xlu0 0
    %65 = vperm.xlu0 %64, %v57
    %v66 = vpop.permute.xlu0 %65
    %67 = vset.pattern.permute.xlu0 0
    %68 = vperm.xlu0 %67, %v58
    %v69 = vpop.permute.xlu0 %68
    %vm70 = vcmp.eq.s32.totalorder %v62, %v66
    %vm71 = vcmp.eq.s32.totalorder %v63, %v66
    %vm72 = vcmp.eq.s32.totalorder %v62, %v69
    %vm73 = vcmp.eq.s32.totalorder %v63, %v69
    %v74 = vadd.s32 %v59, 128
    %v75 = vadd.s32 %v60, 128
    %76 = vset.pattern.permute.xlu0 0
    %77 = vperm.xlu0 %76, %v74
    %v78 = vpop.permute.xlu0 %77
    %79 = vset.pattern.permute.xlu0 0
    %80 = vperm.xlu0 %79, %v75
    %v81 = vpop.permute.xlu0 %80
    %vm82 = vcmp.eq.s32.totalorder %v62, %v78
    %vm83 = vcmp.eq.s32.totalorder %v63, %v78
    %vm84 = vcmp.eq.s32.totalorder %v62, %v81
    %vm85 = vcmp.eq.s32.totalorder %v63, %v81
    %vm86 = vmor %vm70, %vm82
    %vm87 = vmor %vm71, %vm83
    %vm88 = vmor %vm72, %vm84
    %vm89 = vmor %vm73, %vm85
    %v90 = vsel %vm86, 1, 0
    %v91 = vsel %vm87, 1, 0
    %v92 = vsel %vm88, 1, 0
    %v93 = vsel %vm89, 1, 0
    %v94 = vcvt.s32.f32 %v90
    %v95 = vcvt.s32.f32 %v91
    %v96 = vcvt.s32.f32 %v92
    %v97 = vcvt.s32.f32 %v93
    %v98 = vld [vmem:[%s3] sm:$0xff]
    %v99 = vld [vmem:[%s3 + $0x8] sm:$0xff]
    %v100 = vld [vmem:[%s3 + $0x10] sm:$0xff]
    %v101 = vld [vmem:[%s3 + $0x18] sm:$0xff]
    %v102 = vld [vmem:[%s3 + $0x20] sm:$0xff]
    %v103 = vld [vmem:[%s3 + $0x28] sm:$0xff]
    %v104 = vld [vmem:[%s3 + $0x30] sm:$0xff]
    %v105 = vld [vmem:[%s3 + $0x38] sm:$0xff]
    %v106 = vld [vmem:[%s3 + $0x40] sm:$0xff]
    %v107 = vld [vmem:[%s3 + $0x48] sm:$0xff]
    %v108 = vld [vmem:[%s3 + $0x50] sm:$0xff]
    %v109 = vld [vmem:[%s3 + $0x58] sm:$0xff]
    %v110 = vld [vmem:[%s3 + $0x60] sm:$0xff]
    %v111 = vld [vmem:[%s3 + $0x68] sm:$0xff]
    %v112 = vld [vmem:[%s3 + $0x70] sm:$0xff]
    %v113 = vld [vmem:[%s3 + $0x78] sm:$0xff]
    %v114 = vld [vmem:[%s3 + $0x80] sm:$0xff]
    %v115 = vld [vmem:[%s3 + $0x88] sm:$0xff]
    %v116 = vld [vmem:[%s3 + $0x90] sm:$0xff]
    %v117 = vld [vmem:[%s3 + $0x98] sm:$0xff]
    %v118 = vld [vmem:[%s3 + $0xa0] sm:$0xff]
    %v119 = vld [vmem:[%s3 + $0xa8] sm:$0xff]
    %v120 = vld [vmem:[%s3 + $0xb0] sm:$0xff]
    %v121 = vld [vmem:[%s3 + $0xb8] sm:$0xff]
    %v122 = vld [vmem:[%s3 + $0xc0] sm:$0xff]
    %v123 = vld [vmem:[%s3 + $0xc8] sm:$0xff]
    %v124 = vld [vmem:[%s3 + $0xd0] sm:$0xff]
    %v125 = vld [vmem:[%s3 + $0xd8] sm:$0xff]
    %v126 = vld [vmem:[%s3 + $0xe0] sm:$0xff]
    %v127 = vld [vmem:[%s3 + $0xe8] sm:$0xff]
    %v128 = vld [vmem:[%s3 + $0xf0] sm:$0xff]
    %v129 = vld [vmem:[%s3 + $0xf8] sm:$0xff]
    %130 = vmatprep.subr.mxu0 0.0
    %131 = vmatpush1.msra.mxu0 %v98
    %132 = vmatprep.subr.mxu0 0.0
    %133 = vmatpush1.msra.mxu0 %v99
    %134 = vmatprep.subr.mxu0 0.0
    %135 = vmatpush1.msra.mxu0 %v100
    %136 = vmatprep.subr.mxu0 0.0
    %137 = vmatpush1.msra.mxu0 %v101
    %138 = vmatprep.subr.mxu0 0.0
    %139 = vmatpush1.msra.mxu0 %v102
    %140 = vmatprep.subr.mxu0 0.0
    %141 = vmatpush1.msra.mxu0 %v103
    %142 = vmatprep.subr.mxu0 0.0
    %143 = vmatpush1.msra.mxu0 %v104
    %144 = vmatprep.subr.mxu0 0.0
    %145 = vmatpush1.msra.mxu0 %v105
    %146 = vmatprep.subr.mxu0 0.0
    %147 = vmatpush1.msra.mxu0 %v106
    %148 = vmatprep.subr.mxu0 0.0
    %149 = vmatpush1.msra.mxu0 %v107
    %150 = vmatprep.subr.mxu0 0.0
    %151 = vmatpush1.msra.mxu0 %v108
    %152 = vmatprep.subr.mxu0 0.0
    %153 = vmatpush1.msra.mxu0 %v109
    %154 = vmatprep.subr.mxu0 0.0
    %155 = vmatpush1.msra.mxu0 %v110
    %156 = vmatprep.subr.mxu0 0.0
    %157 = vmatpush1.msra.mxu0 %v111
    %158 = vmatprep.subr.mxu0 0.0
    %159 = vmatpush1.msra.mxu0 %v112
    %160 = vmatprep.subr.mxu0 0.0
    %161 = vmatpush1.msra.mxu0 %v113
    %162 = vmatprep.subr.mxu0 0.0
    %163 = vmatpush1.msra.mxu0 %v114
    %164 = vmatprep.subr.mxu0 0.0
    %165 = vmatpush1.msra.mxu0 %v115
    %166 = vmatprep.subr.mxu0 0.0
    %167 = vmatpush1.msra.mxu0 %v116
    %168 = vmatprep.subr.mxu0 0.0
    %169 = vmatpush1.msra.mxu0 %v117
    %170 = vmatprep.subr.mxu0 0.0
    %171 = vmatpush1.msra.mxu0 %v118
    %172 = vmatprep.subr.mxu0 0.0
    %173 = vmatpush1.msra.mxu0 %v119
    %174 = vmatprep.subr.mxu0 0.0
    %175 = vmatpush1.msra.mxu0 %v120
    %176 = vmatprep.subr.mxu0 0.0
    %177 = vmatpush1.msra.mxu0 %v121
    %178 = vmatprep.subr.mxu0 0.0
    %179 = vmatpush1.msra.mxu0 %v122
    %180 = vmatprep.subr.mxu0 0.0
    %181 = vmatpush1.msra.mxu0 %v123
    %182 = vmatprep.subr.mxu0 0.0
    %183 = vmatpush1.msra.mxu0 %v124
    %184 = vmatprep.subr.mxu0 0.0
    %185 = vmatpush1.msra.mxu0 %v125
    %186 = vmatprep.subr.mxu0 0.0
    %187 = vmatpush1.msra.mxu0 %v126
    %188 = vmatprep.subr.mxu0 0.0
    %189 = vmatpush1.msra.mxu0 %v127
    %190 = vmatprep.subr.mxu0 0.0
    %191 = vmatpush1.msra.mxu0 %v128
    %192 = vmatprep.subr.mxu0 0.0
    %193 = vmatpush1.msra.mxu0 %v129
    %194 = vmatprep.mubr.f32.mxu0 %v95
    %195 = vmatmul.mubr.f32.gmra.mrb[0].mxu0 %v94
    %v196 = vpop.f32.mrb[0].mxu0
    %v197 = vadd.f32 0.0, %v196
    %v198 = vpop.f32.mrb[0].mxu0
    %199 = vmatprep.mubr.f32.mxu0 %v97
    %200 = vmatmul.mubr.f32.gmra.mrb[0].mxu0 %v96
    %v201 = vpop.f32.mrb[0].mxu0
    %v202 = vadd.f32 0.0, %v201
    %v203 = vpop.f32.mrb[0].mxu0
    %204 = vdwg.mxu0
    %v205 = vld [vmem:[%s2] sm:$0xff]
    %v206 = vld [vmem:[%s2 + $0x8] sm:$0xff]
    %v207 = vld [vmem:[%s2 + $0x10] sm:$0xff]
    %v208 = vld [vmem:[%s2 + $0x18] sm:$0xff]
    %v209 = vld [vmem:[%s2 + $0x20] sm:$0xff]
    %v210 = vld [vmem:[%s2 + $0x28] sm:$0xff]
    %v211 = vld [vmem:[%s2 + $0x30] sm:$0xff]
    %v212 = vld [vmem:[%s2 + $0x38] sm:$0xff]
    %v213 = vld [vmem:[%s4] sm:$0x1]
    %v214 = vld [vmem:[%s5] sm:$0x1]
    %vm215 = vcmask 261120
    %v216 = vsel %vm215, %v197, 0.0
    %217 = vadd.xlane.f32.xlu0 %v216
    %v218 = vpop.xlane.xlu0 %217
    %v219 = vsel %vm215, %v202, 0.0
    %220 = vadd.xlane.f32.xlu0 %v219
    %v221 = vpop.xlane.xlu0 %220
    %v222 = vrcp.pop 32.0
    %v223 = vmul.f32 %v218, %v222
    %v224 = vmul.f32 %v221, %v222
    %v225 = vsub.f32 %v197, %v223
    %v226 = vsub.f32 %v202, %v224
    %v227 = vmul.f32 %v225, %v225
    %v228 = vmul.f32 %v226, %v226
    %v229 = vsel %vm215, %v227, 0.0
    %230 = vadd.xlane.f32.xlu0 %v229
    %v231 = vpop.xlane.xlu0 %230
    %v232 = vsel %vm215, %v228, 0.0
    %233 = vadd.xlane.f32.xlu0 %v232
    %v234 = vpop.xlane.xlu0 %233
    %v235 = vmul.f32 %v231, %v222
    %v236 = vmul.f32 %v234, %v222
    %v237 = vadd.f32 %v235, 1e-05
    %v238 = vadd.f32 %v236, 1e-05
    %v239 = vrsqrt.pop %v237
    %v240 = vrsqrt.pop %v238
    %v241 = vmul.f32 %v225, %v239
    %v242 = vmul.f32 %v226, %v240
    %v244 = vlaneseq
    %v245 = vshrl.u32 %v244, 7
    %v246 = vsub.s32 0, %v245
    %v247 = vrot.slane %v213, %v246
    %v249 = vmul.f32 %v241, %v247
    %v250 = vmul.f32 %v242, %v247
    %v252 = vlaneseq
    %v253 = vshrl.u32 %v252, 7
    %v254 = vsub.s32 0, %v253
    %v255 = vrot.slane %v214, %v254
    %v257 = vadd.f32 %v249, %v255
    %v258 = vadd.f32 %v250, %v255
    %v259 = vld [vmem:[%s6] sm:$0xff]
    %v260 = vld [vmem:[%s6 + $0x8] sm:$0xff]
    %v261 = vld [vmem:[%s6 + $0x10] sm:$0xff]
    %v262 = vld [vmem:[%s6 + $0x18] sm:$0xff]
    %v263 = vld [vmem:[%s6 + $0x20] sm:$0xff]
    %v264 = vld [vmem:[%s6 + $0x28] sm:$0xff]
    %v265 = vld [vmem:[%s6 + $0x30] sm:$0xff]
    %v266 = vld [vmem:[%s6 + $0x38] sm:$0xff]
    %v267 = vld [vmem:[%s6 + $0x40] sm:$0xff]
    %v268 = vld [vmem:[%s6 + $0x48] sm:$0xff]
    %v269 = vld [vmem:[%s6 + $0x50] sm:$0xff]
    %v270 = vld [vmem:[%s6 + $0x58] sm:$0xff]
    %v271 = vld [vmem:[%s6 + $0x60] sm:$0xff]
    %v272 = vld [vmem:[%s6 + $0x68] sm:$0xff]
    %v273 = vld [vmem:[%s6 + $0x70] sm:$0xff]
    %v274 = vld [vmem:[%s6 + $0x78] sm:$0xff]
    %v276 = vsel %vm215, %v257, 0
    %v279 = vsel %vm215, %v258, 0
    %281 = vmatprep.subr.mxu0 0.0
    %282 = vmatpush1.msra.mxu0 %v259
    %283 = vmatprep.subr.mxu0 0.0
    %284 = vmatpush1.msra.mxu0 %v260
    %285 = vmatprep.subr.mxu0 0.0
    %286 = vmatpush1.msra.mxu0 %v261
    %287 = vmatprep.subr.mxu0 0.0
    %288 = vmatpush1.msra.mxu0 %v262
    %289 = vmatprep.subr.mxu0 0.0
    %290 = vmatpush1.msra.mxu0 0.0
    %291 = vmatprep.subr.mxu0 0.0
    %292 = vmatpush1.msra.mxu0 0.0
    %293 = vmatprep.subr.mxu0 0.0
    %294 = vmatpush1.msra.mxu0 0.0
    %295 = vmatprep.subr.mxu0 0.0
    %296 = vmatpush1.msra.mxu0 0.0
    %297 = vmatprep.subr.mxu0 0.0
    %298 = vmatpush1.msra.mxu0 0.0
    %299 = vmatprep.subr.mxu0 0.0
    %300 = vmatpush1.msra.mxu0 0.0
    %301 = vmatprep.subr.mxu0 0.0
    %302 = vmatpush1.msra.mxu0 0.0
    %303 = vmatprep.subr.mxu0 0.0
    %304 = vmatpush1.msra.mxu0 0.0
    %305 = vmatprep.subr.mxu0 0.0
    %306 = vmatpush1.msra.mxu0 0.0
    %307 = vmatprep.subr.mxu0 0.0
    %308 = vmatpush1.msra.mxu0 0.0
    %309 = vmatprep.subr.mxu0 0.0
    %310 = vmatpush1.msra.mxu0 0.0
    %311 = vmatprep.subr.mxu0 0.0
    %312 = vmatpush1.msra.mxu0 0.0
    %313 = vmatprep.subr.mxu0 0.0
    %314 = vmatpush1.msra.mxu0 0.0
    %315 = vmatprep.subr.mxu0 0.0
    %316 = vmatpush1.msra.mxu0 0.0
    %317 = vmatprep.subr.mxu0 0.0
    %318 = vmatpush1.msra.mxu0 0.0
    %319 = vmatprep.subr.mxu0 0.0
    %320 = vmatpush1.msra.mxu0 0.0
    %321 = vmatprep.subr.mxu0 0.0
    %322 = vmatpush1.msra.mxu0 0.0
    %323 = vmatprep.subr.mxu0 0.0
    %324 = vmatpush1.msra.mxu0 0.0
    %325 = vmatprep.subr.mxu0 0.0
    %326 = vmatpush1.msra.mxu0 0.0
    %327 = vmatprep.subr.mxu0 0.0
    %328 = vmatpush1.msra.mxu0 0.0
    %329 = vmatprep.subr.mxu0 0.0
    %330 = vmatpush1.msra.mxu0 0.0
    %331 = vmatprep.subr.mxu0 0.0
    %332 = vmatpush1.msra.mxu0 0.0
    %333 = vmatprep.subr.mxu0 0.0
    %334 = vmatpush1.msra.mxu0 0.0
    %335 = vmatprep.subr.mxu0 0.0
    %336 = vmatpush1.msra.mxu0 0.0
    %337 = vmatprep.subr.mxu0 0.0
    %338 = vmatpush1.msra.mxu0 0.0
    %339 = vmatprep.subr.mxu0 0.0
    %340 = vmatpush1.msra.mxu0 0.0
    %341 = vmatprep.subr.mxu0 0.0
    %342 = vmatpush1.msra.mxu0 0.0
    %343 = vmatprep.subr.mxu0 0.0
    %344 = vmatpush1.msra.mxu0 0.0
    %345 = vmatprep.mubr.f32.mxu0 0.0
    %346 = vmatmul.mubr.f32.gmra.mrb[0].mxu0 %v276
    %v347 = vpop.f32.mrb[0].mxu0
    %v348 = vadd.f32 0.0, %v347
    %v349 = vpop.f32.mrb[0].mxu0
    %350 = vmatprep.mubr.f32.mxu0 0.0
    %351 = vmatmul.mubr.f32.gmra.mrb[0].mxu0 %v279
    %v352 = vpop.f32.mrb[0].mxu0
    %v353 = vadd.f32 0.0, %v352
    %v354 = vpop.f32.mrb[0].mxu0
    %355 = vdwg.mxu0
    %356 = vmatprep.subr.mxu0 0.0
    %357 = vmatpush1.msra.mxu0 %v263
    %358 = vmatprep.subr.mxu0 0.0
    %359 = vmatpush1.msra.mxu0 %v264
    %360 = vmatprep.subr.mxu0 0.0
    %361 = vmatpush1.msra.mxu0 %v265
    %362 = vmatprep.subr.mxu0 0.0
    %363 = vmatpush1.msra.mxu0 %v266
    %364 = vmatprep.subr.mxu0 0.0
    %365 = vmatpush1.msra.mxu0 0.0
    %366 = vmatprep.subr.mxu0 0.0
    %367 = vmatpush1.msra.mxu0 0.0
    %368 = vmatprep.subr.mxu0 0.0
    %369 = vmatpush1.msra.mxu0 0.0
    %370 = vmatprep.subr.mxu0 0.0
    %371 = vmatpush1.msra.mxu0 0.0
    %372 = vmatprep.subr.mxu0 0.0
    %373 = vmatpush1.msra.mxu0 0.0
    %374 = vmatprep.subr.mxu0 0.0
    %375 = vmatpush1.msra.mxu0 0.0
    %376 = vmatprep.subr.mxu0 0.0
    %377 = vmatpush1.msra.mxu0 0.0
    %378 = vmatprep.subr.mxu0 0.0
    %379 = vmatpush1.msra.mxu0 0.0
    %380 = vmatprep.subr.mxu0 0.0
    %381 = vmatpush1.msra.mxu0 0.0
    %382 = vmatprep.subr.mxu0 0.0
    %383 = vmatpush1.msra.mxu0 0.0
    %384 = vmatprep.subr.mxu0 0.0
    %385 = vmatpush1.msra.mxu0 0.0
    %386 = vmatprep.subr.mxu0 0.0
    %387 = vmatpush1.msra.mxu0 0.0
    %388 = vmatprep.subr.mxu0 0.0
    %389 = vmatpush1.msra.mxu0 0.0
    %390 = vmatprep.subr.mxu0 0.0
    %391 = vmatpush1.msra.mxu0 0.0
    %392 = vmatprep.subr.mxu0 0.0
    %393 = vmatpush1.msra.mxu0 0.0
    %394 = vmatprep.subr.mxu0 0.0
    %395 = vmatpush1.msra.mxu0 0.0
    %396 = vmatprep.subr.mxu0 0.0
    %397 = vmatpush1.msra.mxu0 0.0
    %398 = vmatprep.subr.mxu0 0.0
    %399 = vmatpush1.msra.mxu0 0.0
    %400 = vmatprep.subr.mxu0 0.0
    %401 = vmatpush1.msra.mxu0 0.0
    %402 = vmatprep.subr.mxu0 0.0
    %403 = vmatpush1.msra.mxu0 0.0
    %404 = vmatprep.subr.mxu0 0.0
    %405 = vmatpush1.msra.mxu0 0.0
    %406 = vmatprep.subr.mxu0 0.0
    %407 = vmatpush1.msra.mxu0 0.0
    %408 = vmatprep.subr.mxu0 0.0
    %409 = vmatpush1.msra.mxu0 0.0
    %410 = vmatprep.subr.mxu0 0.0
    %411 = vmatpush1.msra.mxu0 0.0
    %412 = vmatprep.subr.mxu0 0.0
    %413 = vmatpush1.msra.mxu0 0.0
    %414 = vmatprep.subr.mxu0 0.0
    %415 = vmatpush1.msra.mxu0 0.0
    %416 = vmatprep.subr.mxu0 0.0
    %417 = vmatpush1.msra.mxu0 0.0
    %418 = vmatprep.subr.mxu0 0.0
    %419 = vmatpush1.msra.mxu0 0.0
    %420 = vmatprep.mubr.f32.mxu0 0.0
    %421 = vmatmul.mubr.f32.gmra.mrb[0].mxu0 %v276
    %v422 = vpop.f32.mrb[0].mxu0
    %v423 = vadd.f32 0.0, %v422
    %v424 = vpop.f32.mrb[0].mxu0
    %425 = vmatprep.mubr.f32.mxu0 0.0
    %426 = vmatmul.mubr.f32.gmra.mrb[0].mxu0 %v279
    %v427 = vpop.f32.mrb[0].mxu0
    %v428 = vadd.f32 0.0, %v427
    %v429 = vpop.f32.mrb[0].mxu0
    %430 = vdwg.mxu0
    %431 = vmatprep.subr.mxu0 0.0
    %432 = vmatpush1.msra.mxu0 %v267
    %433 = vmatprep.subr.mxu0 0.0
    %434 = vmatpush1.msra.mxu0 %v268
    %435 = vmatprep.subr.mxu0 0.0
    %436 = vmatpush1.msra.mxu0 %v269
    %437 = vmatprep.subr.mxu0 0.0
    %438 = vmatpush1.msra.mxu0 %v270
    %439 = vmatprep.subr.mxu0 0.0
    %440 = vmatpush1.msra.mxu0 0.0
    %441 = vmatprep.subr.mxu0 0.0
    %442 = vmatpush1.msra.mxu0 0.0
    %443 = vmatprep.subr.mxu0 0.0
    %444 = vmatpush1.msra.mxu0 0.0
    %445 = vmatprep.subr.mxu0 0.0
    %446 = vmatpush1.msra.mxu0 0.0
    %447 = vmatprep.subr.mxu0 0.0
    %448 = vmatpush1.msra.mxu0 0.0
    %449 = vmatprep.subr.mxu0 0.0
    %450 = vmatpush1.msra.mxu0 0.0
    %451 = vmatprep.subr.mxu0 0.0
    %452 = vmatpush1.msra.mxu0 0.0
    %453 = vmatprep.subr.mxu0 0.0
    %454 = vmatpush1.msra.mxu0 0.0
    %455 = vmatprep.subr.mxu0 0.0
    %456 = vmatpush1.msra.mxu0 0.0
    %457 = vmatprep.subr.mxu0 0.0
    %458 = vmatpush1.msra.mxu0 0.0
    %459 = vmatprep.subr.mxu0 0.0
    %460 = vmatpush1.msra.mxu0 0.0
    %461 = vmatprep.subr.mxu0 0.0
    %462 = vmatpush1.msra.mxu0 0.0
    %463 = vmatprep.subr.mxu0 0.0
    %464 = vmatpush1.msra.mxu0 0.0
    %465 = vmatprep.subr.mxu0 0.0
    %466 = vmatpush1.msra.mxu0 0.0
    %467 = vmatprep.subr.mxu0 0.0
    %468 = vmatpush1.msra.mxu0 0.0
    %469 = vmatprep.subr.mxu0 0.0
    %470 = vmatpush1.msra.mxu0 0.0
    %471 = vmatprep.subr.mxu0 0.0
    %472 = vmatpush1.msra.mxu0 0.0
    %473 = vmatprep.subr.mxu0 0.0
    %474 = vmatpush1.msra.mxu0 0.0
    %475 = vmatprep.subr.mxu0 0.0
    %476 = vmatpush1.msra.mxu0 0.0
    %477 = vmatprep.subr.mxu0 0.0
    %478 = vmatpush1.msra.mxu0 0.0
    %479 = vmatprep.subr.mxu0 0.0
    %480 = vmatpush1.msra.mxu0 0.0
    %481 = vmatprep.subr.mxu0 0.0
    %482 = vmatpush1.msra.mxu0 0.0
    %483 = vmatprep.subr.mxu0 0.0
    %484 = vmatpush1.msra.mxu0 0.0
    %485 = vmatprep.subr.mxu0 0.0
    %486 = vmatpush1.msra.mxu0 0.0
    %487 = vmatprep.subr.mxu0 0.0
    %488 = vmatpush1.msra.mxu0 0.0
    %489 = vmatprep.subr.mxu0 0.0
    %490 = vmatpush1.msra.mxu0 0.0
    %491 = vmatprep.subr.mxu0 0.0
    %492 = vmatpush1.msra.mxu0 0.0
    %493 = vmatprep.subr.mxu0 0.0
    %494 = vmatpush1.msra.mxu0 0.0
    %495 = vmatprep.mubr.f32.mxu0 0.0
    %496 = vmatmul.mubr.f32.gmra.mrb[0].mxu0 %v276
    %v497 = vpop.f32.mrb[0].mxu0
    %v498 = vadd.f32 0.0, %v497
    %v499 = vpop.f32.mrb[0].mxu0
    %500 = vmatprep.mubr.f32.mxu0 0.0
    %501 = vmatmul.mubr.f32.gmra.mrb[0].mxu0 %v279
    %v502 = vpop.f32.mrb[0].mxu0
    %v503 = vadd.f32 0.0, %v502
    %v504 = vpop.f32.mrb[0].mxu0
    %505 = vdwg.mxu0
    %506 = vmatprep.subr.mxu0 0.0
    %507 = vmatpush1.msra.mxu0 %v271
    %508 = vmatprep.subr.mxu0 0.0
    %509 = vmatpush1.msra.mxu0 %v272
    %510 = vmatprep.subr.mxu0 0.0
    %511 = vmatpush1.msra.mxu0 %v273
    %512 = vmatprep.subr.mxu0 0.0
    %513 = vmatpush1.msra.mxu0 %v274
    %514 = vmatprep.subr.mxu0 0.0
    %515 = vmatpush1.msra.mxu0 0.0
    %516 = vmatprep.subr.mxu0 0.0
    %517 = vmatpush1.msra.mxu0 0.0
    %518 = vmatprep.subr.mxu0 0.0
    %519 = vmatpush1.msra.mxu0 0.0
    %520 = vmatprep.subr.mxu0 0.0
    %521 = vmatpush1.msra.mxu0 0.0
    %522 = vmatprep.subr.mxu0 0.0
    %523 = vmatpush1.msra.mxu0 0.0
    %524 = vmatprep.subr.mxu0 0.0
    %525 = vmatpush1.msra.mxu0 0.0
    %526 = vmatprep.subr.mxu0 0.0
    %527 = vmatpush1.msra.mxu0 0.0
    %528 = vmatprep.subr.mxu0 0.0
    %529 = vmatpush1.msra.mxu0 0.0
    %530 = vmatprep.subr.mxu0 0.0
    %531 = vmatpush1.msra.mxu0 0.0
    %532 = vmatprep.subr.mxu0 0.0
    %533 = vmatpush1.msra.mxu0 0.0
    %534 = vmatprep.subr.mxu0 0.0
    %535 = vmatpush1.msra.mxu0 0.0
    %536 = vmatprep.subr.mxu0 0.0
    %537 = vmatpush1.msra.mxu0 0.0
    %538 = vmatprep.subr.mxu0 0.0
    %539 = vmatpush1.msra.mxu0 0.0
    %540 = vmatprep.subr.mxu0 0.0
    %541 = vmatpush1.msra.mxu0 0.0
    %542 = vmatprep.subr.mxu0 0.0
    %543 = vmatpush1.msra.mxu0 0.0
    %544 = vmatprep.subr.mxu0 0.0
    %545 = vmatpush1.msra.mxu0 0.0
    %546 = vmatprep.subr.mxu0 0.0
    %547 = vmatpush1.msra.mxu0 0.0
    %548 = vmatprep.subr.mxu0 0.0
    %549 = vmatpush1.msra.mxu0 0.0
    %550 = vmatprep.subr.mxu0 0.0
    %551 = vmatpush1.msra.mxu0 0.0
    %552 = vmatprep.subr.mxu0 0.0
    %553 = vmatpush1.msra.mxu0 0.0
    %554 = vmatprep.subr.mxu0 0.0
    %555 = vmatpush1.msra.mxu0 0.0
    %556 = vmatprep.subr.mxu0 0.0
    %557 = vmatpush1.msra.mxu0 0.0
    %558 = vmatprep.subr.mxu0 0.0
    %559 = vmatpush1.msra.mxu0 0.0
    %560 = vmatprep.subr.mxu0 0.0
    %561 = vmatpush1.msra.mxu0 0.0
    %562 = vmatprep.subr.mxu0 0.0
    %563 = vmatpush1.msra.mxu0 0.0
    %564 = vmatprep.subr.mxu0 0.0
    %565 = vmatpush1.msra.mxu0 0.0
    %566 = vmatprep.subr.mxu0 0.0
    %567 = vmatpush1.msra.mxu0 0.0
    %568 = vmatprep.subr.mxu0 0.0
    %569 = vmatpush1.msra.mxu0 0.0
    %570 = vmatprep.mubr.f32.mxu0 0.0
    %571 = vmatmul.mubr.f32.gmra.mrb[0].mxu0 %v276
    %v572 = vpop.f32.mrb[0].mxu0
    %v573 = vadd.f32 0.0, %v572
    %v574 = vpop.f32.mrb[0].mxu0
    %575 = vmatprep.mubr.f32.mxu0 0.0
    %576 = vmatmul.mubr.f32.gmra.mrb[0].mxu0 %v279
    %v577 = vpop.f32.mrb[0].mxu0
    %v578 = vadd.f32 0.0, %v577
    %v579 = vpop.f32.mrb[0].mxu0
    %580 = vdwg.mxu0
    %583 = vrot.lane.b32.xlu0 %v348, 120
    %v584 = vpop.permute.xlu0 %583
    %585 = vrot.lane.b32.xlu0 %v353, 120
    %v586 = vpop.permute.xlu0 %585
    %vm587 = vcmask 64512
    %v588 = vsel %vm587, %v348, 0
    %v590 = vsel %vm587, %v353, 0
    %v592 = vsel %vm587, %v584, 0
    %v594 = vsel %vm587, %v586, 0
    %596 = vmatprep.subr.mxu0 0.0
    %597 = vmatpush1.xpose.msra.mxu0 %v592
    %598 = vmatprep.subr.mxu0 0.0
    %599 = vmatpush1.xpose.msra.mxu0 %v594
    %600 = vmatprep.subr.mxu0 0.0
    %601 = vmatpush1.xpose.msra.mxu0 0.0
    %602 = vmatprep.subr.mxu0 0.0
    %603 = vmatpush1.xpose.msra.mxu0 0.0
    %604 = vmatprep.subr.mxu0 0.0
    %605 = vmatpush1.xpose.msra.mxu0 0.0
    %606 = vmatprep.subr.mxu0 0.0
    %607 = vmatpush1.xpose.msra.mxu0 0.0
    %608 = vmatprep.subr.mxu0 0.0
    %609 = vmatpush1.xpose.msra.mxu0 0.0
    %610 = vmatprep.subr.mxu0 0.0
    %611 = vmatpush1.xpose.msra.mxu0 0.0
    %612 = vmatprep.subr.mxu0 0.0
    %613 = vmatpush1.xpose.msra.mxu0 0.0
    %614 = vmatprep.subr.mxu0 0.0
    %615 = vmatpush1.xpose.msra.mxu0 0.0
    %616 = vmatprep.subr.mxu0 0.0
    %617 = vmatpush1.xpose.msra.mxu0 0.0
    %618 = vmatprep.subr.mxu0 0.0
    %619 = vmatpush1.xpose.msra.mxu0 0.0
    %620 = vmatprep.subr.mxu0 0.0
    %621 = vmatpush1.xpose.msra.mxu0 0.0
    %622 = vmatprep.subr.mxu0 0.0
    %623 = vmatpush1.xpose.msra.mxu0 0.0
    %624 = vmatprep.subr.mxu0 0.0
    %625 = vmatpush1.xpose.msra.mxu0 0.0
    %626 = vmatprep.subr.mxu0 0.0
    %627 = vmatpush1.xpose.msra.mxu0 0.0
    %628 = vmatprep.subr.mxu0 0.0
    %629 = vmatpush1.xpose.msra.mxu0 0.0
    %630 = vmatprep.subr.mxu0 0.0
    %631 = vmatpush1.xpose.msra.mxu0 0.0
    %632 = vmatprep.subr.mxu0 0.0
    %633 = vmatpush1.xpose.msra.mxu0 0.0
    %634 = vmatprep.subr.mxu0 0.0
    %635 = vmatpush1.xpose.msra.mxu0 0.0
    %636 = vmatprep.subr.mxu0 0.0
    %637 = vmatpush1.xpose.msra.mxu0 0.0
    %638 = vmatprep.subr.mxu0 0.0
    %639 = vmatpush1.xpose.msra.mxu0 0.0
    %640 = vmatprep.subr.mxu0 0.0
    %641 = vmatpush1.xpose.msra.mxu0 0.0
    %642 = vmatprep.subr.mxu0 0.0
    %643 = vmatpush1.xpose.msra.mxu0 0.0
    %644 = vmatprep.subr.mxu0 0.0
    %645 = vmatpush1.xpose.msra.mxu0 0.0
    %646 = vmatprep.subr.mxu0 0.0
    %647 = vmatpush1.xpose.msra.mxu0 0.0
    %648 = vmatprep.subr.mxu0 0.0
    %649 = vmatpush1.xpose.msra.mxu0 0.0
    %650 = vmatprep.subr.mxu0 0.0
    %651 = vmatpush1.xpose.msra.mxu0 0.0
    %652 = vmatprep.subr.mxu0 0.0
    %653 = vmatpush1.xpose.msra.mxu0 0.0
    %654 = vmatprep.subr.mxu0 0.0
    %655 = vmatpush1.xpose.msra.mxu0 0.0
    %656 = vmatprep.subr.mxu0 0.0
    %657 = vmatpush1.xpose.msra.mxu0 0.0
    %658 = vmatprep.subr.mxu0 0.0
    %659 = vmatpush1.xpose.msra.mxu0 0.0
    %660 = vmatprep.mubr.f32.mxu0 0.0
    %661 = vmatmul.mubr.f32.gmra.mrb[0].mxu0 %v588
    %v662 = vpop.f32.mrb[0].mxu0
    %v663 = vadd.f32 %v205, %v662
    %v664 = vpop.f32.mrb[0].mxu0
    %665 = vmatprep.mubr.f32.mxu0 0.0
    %666 = vmatmul.mubr.f32.gmra.mrb[0].mxu0 %v590
    %v667 = vpop.f32.mrb[0].mxu0
    %v668 = vadd.f32 %v206, %v667
    %v669 = vpop.f32.mrb[0].mxu0
    %670 = vdwg.mxu0
    %673 = vrot.lane.b32.xlu0 %v423, 120
    %v674 = vpop.permute.xlu0 %673
    %675 = vrot.lane.b32.xlu0 %v428, 120
    %v676 = vpop.permute.xlu0 %675
    %v677 = vsel %vm587, %v423, 0
    %v679 = vsel %vm587, %v428, 0
    %v681 = vsel %vm587, %v674, 0
    %v683 = vsel %vm587, %v676, 0
    %685 = vmatprep.subr.mxu0 0.0
    %686 = vmatpush1.xpose.msra.mxu0 %v681
    %687 = vmatprep.subr.mxu0 0.0
    %688 = vmatpush1.xpose.msra.mxu0 %v683
    %689 = vmatprep.subr.mxu0 0.0
    %690 = vmatpush1.xpose.msra.mxu0 0.0
    %691 = vmatprep.subr.mxu0 0.0
    %692 = vmatpush1.xpose.msra.mxu0 0.0
    %693 = vmatprep.subr.mxu0 0.0
    %694 = vmatpush1.xpose.msra.mxu0 0.0
    %695 = vmatprep.subr.mxu0 0.0
    %696 = vmatpush1.xpose.msra.mxu0 0.0
    %697 = vmatprep.subr.mxu0 0.0
    %698 = vmatpush1.xpose.msra.mxu0 0.0
    %699 = vmatprep.subr.mxu0 0.0
    %700 = vmatpush1.xpose.msra.mxu0 0.0
    %701 = vmatprep.subr.mxu0 0.0
    %702 = vmatpush1.xpose.msra.mxu0 0.0
    %703 = vmatprep.subr.mxu0 0.0
    %704 = vmatpush1.xpose.msra.mxu0 0.0
    %705 = vmatprep.subr.mxu0 0.0
    %706 = vmatpush1.xpose.msra.mxu0 0.0
    %707 = vmatprep.subr.mxu0 0.0
    %708 = vmatpush1.xpose.msra.mxu0 0.0
    %709 = vmatprep.subr.mxu0 0.0
    %710 = vmatpush1.xpose.msra.mxu0 0.0
    %711 = vmatprep.subr.mxu0 0.0
    %712 = vmatpush1.xpose.msra.mxu0 0.0
    %713 = vmatprep.subr.mxu0 0.0
    %714 = vmatpush1.xpose.msra.mxu0 0.0
    %715 = vmatprep.subr.mxu0 0.0
    %716 = vmatpush1.xpose.msra.mxu0 0.0
    %717 = vmatprep.subr.mxu0 0.0
    %718 = vmatpush1.xpose.msra.mxu0 0.0
    %719 = vmatprep.subr.mxu0 0.0
    %720 = vmatpush1.xpose.msra.mxu0 0.0
    %721 = vmatprep.subr.mxu0 0.0
    %722 = vmatpush1.xpose.msra.mxu0 0.0
    %723 = vmatprep.subr.mxu0 0.0
    %724 = vmatpush1.xpose.msra.mxu0 0.0
    %725 = vmatprep.subr.mxu0 0.0
    %726 = vmatpush1.xpose.msra.mxu0 0.0
    %727 = vmatprep.subr.mxu0 0.0
    %728 = vmatpush1.xpose.msra.mxu0 0.0
    %729 = vmatprep.subr.mxu0 0.0
    %730 = vmatpush1.xpose.msra.mxu0 0.0
    %731 = vmatprep.subr.mxu0 0.0
    %732 = vmatpush1.xpose.msra.mxu0 0.0
    %733 = vmatprep.subr.mxu0 0.0
    %734 = vmatpush1.xpose.msra.mxu0 0.0
    %735 = vmatprep.subr.mxu0 0.0
    %736 = vmatpush1.xpose.msra.mxu0 0.0
    %737 = vmatprep.subr.mxu0 0.0
    %738 = vmatpush1.xpose.msra.mxu0 0.0
    %739 = vmatprep.subr.mxu0 0.0
    %740 = vmatpush1.xpose.msra.mxu0 0.0
    %741 = vmatprep.subr.mxu0 0.0
    %742 = vmatpush1.xpose.msra.mxu0 0.0
    %743 = vmatprep.subr.mxu0 0.0
    %744 = vmatpush1.xpose.msra.mxu0 0.0
    %745 = vmatprep.subr.mxu0 0.0
    %746 = vmatpush1.xpose.msra.mxu0 0.0
    %747 = vmatprep.subr.mxu0 0.0
    %748 = vmatpush1.xpose.msra.mxu0 0.0
    %749 = vmatprep.mubr.f32.mxu0 0.0
    %750 = vmatmul.mubr.f32.gmra.mrb[0].mxu0 %v677
    %v751 = vpop.f32.mrb[0].mxu0
    %v752 = vadd.f32 %v207, %v751
    %v753 = vpop.f32.mrb[0].mxu0
    %754 = vmatprep.mubr.f32.mxu0 0.0
    %755 = vmatmul.mubr.f32.gmra.mrb[0].mxu0 %v679
    %v756 = vpop.f32.mrb[0].mxu0
    %v757 = vadd.f32 %v208, %v756
    %v758 = vpop.f32.mrb[0].mxu0
    %759 = vdwg.mxu0
    %762 = vrot.lane.b32.xlu0 %v498, 120
    %v763 = vpop.permute.xlu0 %762
    %764 = vrot.lane.b32.xlu0 %v503, 120
    %v765 = vpop.permute.xlu0 %764
    %v766 = vsel %vm587, %v498, 0
    %v768 = vsel %vm587, %v503, 0
    %v770 = vsel %vm587, %v763, 0
    %v772 = vsel %vm587, %v765, 0
    %774 = vmatprep.subr.mxu0 0.0
    %775 = vmatpush1.xpose.msra.mxu0 %v770
    %776 = vmatprep.subr.mxu0 0.0
    %777 = vmatpush1.xpose.msra.mxu0 %v772
    %778 = vmatprep.subr.mxu0 0.0
    %779 = vmatpush1.xpose.msra.mxu0 0.0
    %780 = vmatprep.subr.mxu0 0.0
    %781 = vmatpush1.xpose.msra.mxu0 0.0
    %782 = vmatprep.subr.mxu0 0.0
    %783 = vmatpush1.xpose.msra.mxu0 0.0
    %784 = vmatprep.subr.mxu0 0.0
    %785 = vmatpush1.xpose.msra.mxu0 0.0
    %786 = vmatprep.subr.mxu0 0.0
    %787 = vmatpush1.xpose.msra.mxu0 0.0
    %788 = vmatprep.subr.mxu0 0.0
    %789 = vmatpush1.xpose.msra.mxu0 0.0
    %790 = vmatprep.subr.mxu0 0.0
    %791 = vmatpush1.xpose.msra.mxu0 0.0
    %792 = vmatprep.subr.mxu0 0.0
    %793 = vmatpush1.xpose.msra.mxu0 0.0
    %794 = vmatprep.subr.mxu0 0.0
    %795 = vmatpush1.xpose.msra.mxu0 0.0
    %796 = vmatprep.subr.mxu0 0.0
    %797 = vmatpush1.xpose.msra.mxu0 0.0
    %798 = vmatprep.subr.mxu0 0.0
    %799 = vmatpush1.xpose.msra.mxu0 0.0
    %800 = vmatprep.subr.mxu0 0.0
    %801 = vmatpush1.xpose.msra.mxu0 0.0
    %802 = vmatprep.subr.mxu0 0.0
    %803 = vmatpush1.xpose.msra.mxu0 0.0
    %804 = vmatprep.subr.mxu0 0.0
    %805 = vmatpush1.xpose.msra.mxu0 0.0
    %806 = vmatprep.subr.mxu0 0.0
    %807 = vmatpush1.xpose.msra.mxu0 0.0
    %808 = vmatprep.subr.mxu0 0.0
    %809 = vmatpush1.xpose.msra.mxu0 0.0
    %810 = vmatprep.subr.mxu0 0.0
    %811 = vmatpush1.xpose.msra.mxu0 0.0
    %812 = vmatprep.subr.mxu0 0.0
    %813 = vmatpush1.xpose.msra.mxu0 0.0
    %814 = vmatprep.subr.mxu0 0.0
    %815 = vmatpush1.xpose.msra.mxu0 0.0
    %816 = vmatprep.subr.mxu0 0.0
    %817 = vmatpush1.xpose.msra.mxu0 0.0
    %818 = vmatprep.subr.mxu0 0.0
    %819 = vmatpush1.xpose.msra.mxu0 0.0
    %820 = vmatprep.subr.mxu0 0.0
    %821 = vmatpush1.xpose.msra.mxu0 0.0
    %822 = vmatprep.subr.mxu0 0.0
    %823 = vmatpush1.xpose.msra.mxu0 0.0
    %824 = vmatprep.subr.mxu0 0.0
    %825 = vmatpush1.xpose.msra.mxu0 0.0
    %826 = vmatprep.subr.mxu0 0.0
    %827 = vmatpush1.xpose.msra.mxu0 0.0
    %828 = vmatprep.subr.mxu0 0.0
    %829 = vmatpush1.xpose.msra.mxu0 0.0
    %830 = vmatprep.subr.mxu0 0.0
    %831 = vmatpush1.xpose.msra.mxu0 0.0
    %832 = vmatprep.subr.mxu0 0.0
    %833 = vmatpush1.xpose.msra.mxu0 0.0
    %834 = vmatprep.subr.mxu0 0.0
    %835 = vmatpush1.xpose.msra.mxu0 0.0
    %836 = vmatprep.subr.mxu0 0.0
    %837 = vmatpush1.xpose.msra.mxu0 0.0
    %838 = vmatprep.mubr.f32.mxu0 0.0
    %839 = vmatmul.mubr.f32.gmra.mrb[0].mxu0 %v766
    %v840 = vpop.f32.mrb[0].mxu0
    %v841 = vadd.f32 %v209, %v840
    %v842 = vpop.f32.mrb[0].mxu0
    %843 = vmatprep.mubr.f32.mxu0 0.0
    %844 = vmatmul.mubr.f32.gmra.mrb[0].mxu0 %v768
    %v845 = vpop.f32.mrb[0].mxu0
    %v846 = vadd.f32 %v210, %v845
    %v847 = vpop.f32.mrb[0].mxu0
    %848 = vdwg.mxu0
    %851 = vrot.lane.b32.xlu0 %v573, 120
    %v852 = vpop.permute.xlu0 %851
    %853 = vrot.lane.b32.xlu0 %v578, 120
    %v854 = vpop.permute.xlu0 %853
    %v855 = vsel %vm587, %v573, 0
    %v857 = vsel %vm587, %v578, 0
    %v859 = vsel %vm587, %v852, 0
    %v861 = vsel %vm587, %v854, 0
    %863 = vmatprep.subr.mxu0 0.0
    %864 = vmatpush1.xpose.msra.mxu0 %v859
    %865 = vmatprep.subr.mxu0 0.0
    %866 = vmatpush1.xpose.msra.mxu0 %v861
    %867 = vmatprep.subr.mxu0 0.0
    %868 = vmatpush1.xpose.msra.mxu0 0.0
    %869 = vmatprep.subr.mxu0 0.0
    %870 = vmatpush1.xpose.msra.mxu0 0.0
    %871 = vmatprep.subr.mxu0 0.0
    %872 = vmatpush1.xpose.msra.mxu0 0.0
    %873 = vmatprep.subr.mxu0 0.0
    %874 = vmatpush1.xpose.msra.mxu0 0.0
    %875 = vmatprep.subr.mxu0 0.0
    %876 = vmatpush1.xpose.msra.mxu0 0.0
    %877 = vmatprep.subr.mxu0 0.0
    %878 = vmatpush1.xpose.msra.mxu0 0.0
    %879 = vmatprep.subr.mxu0 0.0
    %880 = vmatpush1.xpose.msra.mxu0 0.0
    %881 = vmatprep.subr.mxu0 0.0
    %882 = vmatpush1.xpose.msra.mxu0 0.0
    %883 = vmatprep.subr.mxu0 0.0
    %884 = vmatpush1.xpose.msra.mxu0 0.0
    %885 = vmatprep.subr.mxu0 0.0
    %886 = vmatpush1.xpose.msra.mxu0 0.0
    %887 = vmatprep.subr.mxu0 0.0
    %888 = vmatpush1.xpose.msra.mxu0 0.0
    %889 = vmatprep.subr.mxu0 0.0
    %890 = vmatpush1.xpose.msra.mxu0 0.0
    %891 = vmatprep.subr.mxu0 0.0
    %892 = vmatpush1.xpose.msra.mxu0 0.0
    %893 = vmatprep.subr.mxu0 0.0
    %894 = vmatpush1.xpose.msra.mxu0 0.0
    %895 = vmatprep.subr.mxu0 0.0
    %896 = vmatpush1.xpose.msra.mxu0 0.0
    %897 = vmatprep.subr.mxu0 0.0
    %898 = vmatpush1.xpose.msra.mxu0 0.0
    %899 = vmatprep.subr.mxu0 0.0
    %900 = vmatpush1.xpose.msra.mxu0 0.0
    %901 = vmatprep.subr.mxu0 0.0
    %902 = vmatpush1.xpose.msra.mxu0 0.0
    %903 = vmatprep.subr.mxu0 0.0
    %904 = vmatpush1.xpose.msra.mxu0 0.0
    %905 = vmatprep.subr.mxu0 0.0
    %906 = vmatpush1.xpose.msra.mxu0 0.0
    %907 = vmatprep.subr.mxu0 0.0
    %908 = vmatpush1.xpose.msra.mxu0 0.0
    %909 = vmatprep.subr.mxu0 0.0
    %910 = vmatpush1.xpose.msra.mxu0 0.0
    %911 = vmatprep.subr.mxu0 0.0
    %912 = vmatpush1.xpose.msra.mxu0 0.0
    %913 = vmatprep.subr.mxu0 0.0
    %914 = vmatpush1.xpose.msra.mxu0 0.0
    %915 = vmatprep.subr.mxu0 0.0
    %916 = vmatpush1.xpose.msra.mxu0 0.0
    %917 = vmatprep.subr.mxu0 0.0
    %918 = vmatpush1.xpose.msra.mxu0 0.0
    %919 = vmatprep.subr.mxu0 0.0
    %920 = vmatpush1.xpose.msra.mxu0 0.0
    %921 = vmatprep.subr.mxu0 0.0
    %922 = vmatpush1.xpose.msra.mxu0 0.0
    %923 = vmatprep.subr.mxu0 0.0
    %924 = vmatpush1.xpose.msra.mxu0 0.0
    %925 = vmatprep.subr.mxu0 0.0
    %926 = vmatpush1.xpose.msra.mxu0 0.0
    %927 = vmatprep.mubr.f32.mxu0 0.0
    %928 = vmatmul.mubr.f32.gmra.mrb[0].mxu0 %v855
    %v929 = vpop.f32.mrb[0].mxu0
    %v930 = vadd.f32 %v211, %v929
    %v931 = vpop.f32.mrb[0].mxu0
    %932 = vmatprep.mubr.f32.mxu0 0.0
    %933 = vmatmul.mubr.f32.gmra.mrb[0].mxu0 %v857
    %v934 = vpop.f32.mrb[0].mxu0
    %v935 = vadd.f32 %v212, %v934
    %v936 = vpop.f32.mrb[0].mxu0
    %937 = vdwg.mxu0
    %vm938 = vcmask 130048
    %v939 = vsel %vm938, %v663, -inf
    %940 = vmax.xlane.f32.xlu0 %v939
    %v941 = vpop.xlane.xlu0 %940
    %v942 = vsel %vm938, %v668, -inf
    %943 = vmax.xlane.f32.xlu0 %v942
    %v944 = vpop.xlane.xlu0 %943
    %v945 = vsel %vm938, %v752, -inf
    %946 = vmax.xlane.f32.xlu0 %v945
    %v947 = vpop.xlane.xlu0 %946
    %v948 = vsel %vm938, %v757, -inf
    %949 = vmax.xlane.f32.xlu0 %v948
    %v950 = vpop.xlane.xlu0 %949
    %v951 = vsel %vm938, %v841, -inf
    %952 = vmax.xlane.f32.xlu0 %v951
    %v953 = vpop.xlane.xlu0 %952
    %v954 = vsel %vm938, %v846, -inf
    %955 = vmax.xlane.f32.xlu0 %v954
    %v956 = vpop.xlane.xlu0 %955
    %v957 = vsel %vm938, %v930, -inf
    %958 = vmax.xlane.f32.xlu0 %v957
    %v959 = vpop.xlane.xlu0 %958
    %v960 = vsel %vm938, %v935, -inf
    %961 = vmax.xlane.f32.xlu0 %v960
    %v962 = vpop.xlane.xlu0 %961
    %v963 = vsub.f32 %v663, %v941
    %v964 = vsub.f32 %v668, %v944
    %v965 = vsub.f32 %v752, %v947
    %v966 = vsub.f32 %v757, %v950
    %v967 = vsub.f32 %v841, %v953
    %v968 = vsub.f32 %v846, %v956
    %v969 = vsub.f32 %v930, %v959
    %v970 = vsub.f32 %v935, %v962
    %v971 = vmul.f32 %v963, 1.442695
    %v972 = vpow.pop %v971
    %v973 = vmul.f32 %v964, 1.442695
    %v974 = vpow.pop %v973
    %v975 = vmul.f32 %v965, 1.442695
    %v976 = vpow.pop %v975
    %v977 = vmul.f32 %v966, 1.442695
    %v978 = vpow.pop %v977
    %v979 = vmul.f32 %v967, 1.442695
    %v980 = vpow.pop %v979
    %v981 = vmul.f32 %v968, 1.442695
    %v982 = vpow.pop %v981
    %v983 = vmul.f32 %v969, 1.442695
    %v984 = vpow.pop %v983
    %v985 = vmul.f32 %v970, 1.442695
    %v986 = vpow.pop %v985
    %v987 = vsel %vm938, %v972, 0.0
    %988 = vadd.xlane.f32.xlu0 %v987
    %v989 = vpop.xlane.xlu0 %988
    %v990 = vsel %vm938, %v974, 0.0
    %991 = vadd.xlane.f32.xlu0 %v990
    %v992 = vpop.xlane.xlu0 %991
    %v993 = vsel %vm938, %v976, 0.0
    %994 = vadd.xlane.f32.xlu0 %v993
    %v995 = vpop.xlane.xlu0 %994
    %v996 = vsel %vm938, %v978, 0.0
    %997 = vadd.xlane.f32.xlu0 %v996
    %v998 = vpop.xlane.xlu0 %997
    %v999 = vsel %vm938, %v980, 0.0
    %1000 = vadd.xlane.f32.xlu0 %v999
    %v1001 = vpop.xlane.xlu0 %1000
    %v1002 = vsel %vm938, %v982, 0.0
    %1003 = vadd.xlane.f32.xlu0 %v1002
    %v1004 = vpop.xlane.xlu0 %1003
    %v1005 = vsel %vm938, %v984, 0.0
    %1006 = vadd.xlane.f32.xlu0 %v1005
    %v1007 = vpop.xlane.xlu0 %1006
    %v1008 = vsel %vm938, %v986, 0.0
    %1009 = vadd.xlane.f32.xlu0 %v1008
    %v1010 = vpop.xlane.xlu0 %1009
    %v1011 = vrcp.pop %v989
    %v1012 = vmul.f32 %v972, %v1011
    %v1013 = vrcp.pop %v992
    %v1014 = vmul.f32 %v974, %v1013
    %v1015 = vrcp.pop %v995
    %v1016 = vmul.f32 %v976, %v1015
    %v1017 = vrcp.pop %v998
    %v1018 = vmul.f32 %v978, %v1017
    %v1019 = vrcp.pop %v1001
    %v1020 = vmul.f32 %v980, %v1019
    %v1021 = vrcp.pop %v1004
    %v1022 = vmul.f32 %v982, %v1021
    %v1023 = vrcp.pop %v1007
    %v1024 = vmul.f32 %v984, %v1023
    %v1025 = vrcp.pop %v1010
    %v1026 = vmul.f32 %v986, %v1025
    %1027 = vrot.lane.b32.xlu0 %v348, 112
    %v1028 = vpop.permute.xlu0 %1027
    %1029 = vrot.lane.b32.xlu0 %v353, 112
    %v1030 = vpop.permute.xlu0 %1029
    %v1034 = vsel %vm938, %v1012, 0
    %v1037 = vsel %vm938, %v1014, 0
    %1039 = vmatprep.subr.mxu0 0.0
    %1040 = vmatpush1.msra.mxu0 %v1028
    %1041 = vmatprep.subr.mxu0 0.0
    %1042 = vmatpush1.msra.mxu0 %v1030
    %1043 = vmatprep.subr.mxu0 0.0
    %1044 = vmatpush1.msra.mxu0 0.0
    %1045 = vmatprep.subr.mxu0 0.0
    %1046 = vmatpush1.msra.mxu0 0.0
    %1047 = vmatprep.subr.mxu0 0.0
    %1048 = vmatpush1.msra.mxu0 0.0
    %1049 = vmatprep.subr.mxu0 0.0
    %1050 = vmatpush1.msra.mxu0 0.0
    %1051 = vmatprep.subr.mxu0 0.0
    %1052 = vmatpush1.msra.mxu0 0.0
    %1053 = vmatprep.subr.mxu0 0.0
    %1054 = vmatpush1.msra.mxu0 0.0
    %1055 = vmatprep.subr.mxu0 0.0
    %1056 = vmatpush1.msra.mxu0 0.0
    %1057 = vmatprep.subr.mxu0 0.0
    %1058 = vmatpush1.msra.mxu0 0.0
    %1059 = vmatprep.subr.mxu0 0.0
    %1060 = vmatpush1.msra.mxu0 0.0
    %1061 = vmatprep.subr.mxu0 0.0
    %1062 = vmatpush1.msra.mxu0 0.0
    %1063 = vmatprep.subr.mxu0 0.0
    %1064 = vmatpush1.msra.mxu0 0.0
    %1065 = vmatprep.subr.mxu0 0.0
    %1066 = vmatpush1.msra.mxu0 0.0
    %1067 = vmatprep.subr.mxu0 0.0
    %1068 = vmatpush1.msra.mxu0 0.0
    %1069 = vmatprep.subr.mxu0 0.0
    %1070 = vmatpush1.msra.mxu0 0.0
    %1071 = vmatprep.subr.mxu0 0.0
    %1072 = vmatpush1.msra.mxu0 0.0
    %1073 = vmatprep.subr.mxu0 0.0
    %1074 = vmatpush1.msra.mxu0 0.0
    %1075 = vmatprep.subr.mxu0 0.0
    %1076 = vmatpush1.msra.mxu0 0.0
    %1077 = vmatprep.subr.mxu0 0.0
    %1078 = vmatpush1.msra.mxu0 0.0
    %1079 = vmatprep.subr.mxu0 0.0
    %1080 = vmatpush1.msra.mxu0 0.0
    %1081 = vmatprep.subr.mxu0 0.0
    %1082 = vmatpush1.msra.mxu0 0.0
    %1083 = vmatprep.subr.mxu0 0.0
    %1084 = vmatpush1.msra.mxu0 0.0
    %1085 = vmatprep.subr.mxu0 0.0
    %1086 = vmatpush1.msra.mxu0 0.0
    %1087 = vmatprep.subr.mxu0 0.0
    %1088 = vmatpush1.msra.mxu0 0.0
    %1089 = vmatprep.subr.mxu0 0.0
    %1090 = vmatpush1.msra.mxu0 0.0
    %1091 = vmatprep.subr.mxu0 0.0
    %1092 = vmatpush1.msra.mxu0 0.0
    %1093 = vmatprep.subr.mxu0 0.0
    %1094 = vmatpush1.msra.mxu0 0.0
    %1095 = vmatprep.subr.mxu0 0.0
    %1096 = vmatpush1.msra.mxu0 0.0
    %1097 = vmatprep.subr.mxu0 0.0
    %1098 = vmatpush1.msra.mxu0 0.0
    %1099 = vmatprep.subr.mxu0 0.0
    %1100 = vmatpush1.msra.mxu0 0.0
    %1101 = vmatprep.subr.mxu0 0.0
    %1102 = vmatpush1.msra.mxu0 0.0
    %1103 = vmatprep.mubr.f32.mxu0 0.0
    %1104 = vmatmul.mubr.f32.gmra.mrb[0].mxu0 %v1034
    %v1105 = vpop.f32.mrb[0].mxu0
    %v1106 = vadd.f32 0.0, %v1105
    %v1107 = vpop.f32.mrb[0].mxu0
    %1108 = vmatprep.mubr.f32.mxu0 0.0
    %1109 = vmatmul.mubr.f32.gmra.mrb[0].mxu0 %v1037
    %v1110 = vpop.f32.mrb[0].mxu0
    %v1111 = vadd.f32 0.0, %v1110
    %v1112 = vpop.f32.mrb[0].mxu0
    %1113 = vdwg.mxu0
    %1114 = vrot.lane.b32.xlu0 %v423, 112
    %v1115 = vpop.permute.xlu0 %1114
    %1116 = vrot.lane.b32.xlu0 %v428, 112
    %v1117 = vpop.permute.xlu0 %1116
    %v1121 = vsel %vm938, %v1016, 0
    %v1124 = vsel %vm938, %v1018, 0
    %1126 = vmatprep.subr.mxu0 0.0
    %1127 = vmatpush1.msra.mxu0 %v1115
    %1128 = vmatprep.subr.mxu0 0.0
    %1129 = vmatpush1.msra.mxu0 %v1117
    %1130 = vmatprep.subr.mxu0 0.0
    %1131 = vmatpush1.msra.mxu0 0.0
    %1132 = vmatprep.subr.mxu0 0.0
    %1133 = vmatpush1.msra.mxu0 0.0
    %1134 = vmatprep.subr.mxu0 0.0
    %1135 = vmatpush1.msra.mxu0 0.0
    %1136 = vmatprep.subr.mxu0 0.0
    %1137 = vmatpush1.msra.mxu0 0.0
    %1138 = vmatprep.subr.mxu0 0.0
    %1139 = vmatpush1.msra.mxu0 0.0
    %1140 = vmatprep.subr.mxu0 0.0
    %1141 = vmatpush1.msra.mxu0 0.0
    %1142 = vmatprep.subr.mxu0 0.0
    %1143 = vmatpush1.msra.mxu0 0.0
    %1144 = vmatprep.subr.mxu0 0.0
    %1145 = vmatpush1.msra.mxu0 0.0
    %1146 = vmatprep.subr.mxu0 0.0
    %1147 = vmatpush1.msra.mxu0 0.0
    %1148 = vmatprep.subr.mxu0 0.0
    %1149 = vmatpush1.msra.mxu0 0.0
    %1150 = vmatprep.subr.mxu0 0.0
    %1151 = vmatpush1.msra.mxu0 0.0
    %1152 = vmatprep.subr.mxu0 0.0
    %1153 = vmatpush1.msra.mxu0 0.0
    %1154 = vmatprep.subr.mxu0 0.0
    %1155 = vmatpush1.msra.mxu0 0.0
    %1156 = vmatprep.subr.mxu0 0.0
    %1157 = vmatpush1.msra.mxu0 0.0
    %1158 = vmatprep.subr.mxu0 0.0
    %1159 = vmatpush1.msra.mxu0 0.0
    %1160 = vmatprep.subr.mxu0 0.0
    %1161 = vmatpush1.msra.mxu0 0.0
    %1162 = vmatprep.subr.mxu0 0.0
    %1163 = vmatpush1.msra.mxu0 0.0
    %1164 = vmatprep.subr.mxu0 0.0
    %1165 = vmatpush1.msra.mxu0 0.0
    %1166 = vmatprep.subr.mxu0 0.0
    %1167 = vmatpush1.msra.mxu0 0.0
    %1168 = vmatprep.subr.mxu0 0.0
    %1169 = vmatpush1.msra.mxu0 0.0
    %1170 = vmatprep.subr.mxu0 0.0
    %1171 = vmatpush1.msra.mxu0 0.0
    %1172 = vmatprep.subr.mxu0 0.0
    %1173 = vmatpush1.msra.mxu0 0.0
    %1174 = vmatprep.subr.mxu0 0.0
    %1175 = vmatpush1.msra.mxu0 0.0
    %1176 = vmatprep.subr.mxu0 0.0
    %1177 = vmatpush1.msra.mxu0 0.0
    %1178 = vmatprep.subr.mxu0 0.0
    %1179 = vmatpush1.msra.mxu0 0.0
    %1180 = vmatprep.subr.mxu0 0.0
    %1181 = vmatpush1.msra.mxu0 0.0
    %1182 = vmatprep.subr.mxu0 0.0
    %1183 = vmatpush1.msra.mxu0 0.0
    %1184 = vmatprep.subr.mxu0 0.0
    %1185 = vmatpush1.msra.mxu0 0.0
    %1186 = vmatprep.subr.mxu0 0.0
    %1187 = vmatpush1.msra.mxu0 0.0
    %1188 = vmatprep.subr.mxu0 0.0
    %1189 = vmatpush1.msra.mxu0 0.0
    %1190 = vmatprep.mubr.f32.mxu0 0.0
    %1191 = vmatmul.mubr.f32.gmra.mrb[0].mxu0 %v1121
    %v1192 = vpop.f32.mrb[0].mxu0
    %v1193 = vadd.f32 0.0, %v1192
    %v1194 = vpop.f32.mrb[0].mxu0
    %1195 = vmatprep.mubr.f32.mxu0 0.0
    %1196 = vmatmul.mubr.f32.gmra.mrb[0].mxu0 %v1124
    %v1197 = vpop.f32.mrb[0].mxu0
    %v1198 = vadd.f32 0.0, %v1197
    %v1199 = vpop.f32.mrb[0].mxu0
    %1200 = vdwg.mxu0
    %1201 = vrot.lane.b32.xlu0 %v498, 112
    %v1202 = vpop.permute.xlu0 %1201
    %1203 = vrot.lane.b32.xlu0 %v503, 112
    %v1204 = vpop.permute.xlu0 %1203
    %v1208 = vsel %vm938, %v1020, 0
    %v1211 = vsel %vm938, %v1022, 0
    %1213 = vmatprep.subr.mxu0 0.0
    %1214 = vmatpush1.msra.mxu0 %v1202
    %1215 = vmatprep.subr.mxu0 0.0
    %1216 = vmatpush1.msra.mxu0 %v1204
    %1217 = vmatprep.subr.mxu0 0.0
    %1218 = vmatpush1.msra.mxu0 0.0
    %1219 = vmatprep.subr.mxu0 0.0
    %1220 = vmatpush1.msra.mxu0 0.0
    %1221 = vmatprep.subr.mxu0 0.0
    %1222 = vmatpush1.msra.mxu0 0.0
    %1223 = vmatprep.subr.mxu0 0.0
    %1224 = vmatpush1.msra.mxu0 0.0
    %1225 = vmatprep.subr.mxu0 0.0
    %1226 = vmatpush1.msra.mxu0 0.0
    %1227 = vmatprep.subr.mxu0 0.0
    %1228 = vmatpush1.msra.mxu0 0.0
    %1229 = vmatprep.subr.mxu0 0.0
    %1230 = vmatpush1.msra.mxu0 0.0
    %1231 = vmatprep.subr.mxu0 0.0
    %1232 = vmatpush1.msra.mxu0 0.0
    %1233 = vmatprep.subr.mxu0 0.0
    %1234 = vmatpush1.msra.mxu0 0.0
    %1235 = vmatprep.subr.mxu0 0.0
    %1236 = vmatpush1.msra.mxu0 0.0
    %1237 = vmatprep.subr.mxu0 0.0
    %1238 = vmatpush1.msra.mxu0 0.0
    %1239 = vmatprep.subr.mxu0 0.0
    %1240 = vmatpush1.msra.mxu0 0.0
    %1241 = vmatprep.subr.mxu0 0.0
    %1242 = vmatpush1.msra.mxu0 0.0
    %1243 = vmatprep.subr.mxu0 0.0
    %1244 = vmatpush1.msra.mxu0 0.0
    %1245 = vmatprep.subr.mxu0 0.0
    %1246 = vmatpush1.msra.mxu0 0.0
    %1247 = vmatprep.subr.mxu0 0.0
    %1248 = vmatpush1.msra.mxu0 0.0
    %1249 = vmatprep.subr.mxu0 0.0
    %1250 = vmatpush1.msra.mxu0 0.0
    %1251 = vmatprep.subr.mxu0 0.0
    %1252 = vmatpush1.msra.mxu0 0.0
    %1253 = vmatprep.subr.mxu0 0.0
    %1254 = vmatpush1.msra.mxu0 0.0
    %1255 = vmatprep.subr.mxu0 0.0
    %1256 = vmatpush1.msra.mxu0 0.0
    %1257 = vmatprep.subr.mxu0 0.0
    %1258 = vmatpush1.msra.mxu0 0.0
    %1259 = vmatprep.subr.mxu0 0.0
    %1260 = vmatpush1.msra.mxu0 0.0
    %1261 = vmatprep.subr.mxu0 0.0
    %1262 = vmatpush1.msra.mxu0 0.0
    %1263 = vmatprep.subr.mxu0 0.0
    %1264 = vmatpush1.msra.mxu0 0.0
    %1265 = vmatprep.subr.mxu0 0.0
    %1266 = vmatpush1.msra.mxu0 0.0
    %1267 = vmatprep.subr.mxu0 0.0
    %1268 = vmatpush1.msra.mxu0 0.0
    %1269 = vmatprep.subr.mxu0 0.0
    %1270 = vmatpush1.msra.mxu0 0.0
    %1271 = vmatprep.subr.mxu0 0.0
    %1272 = vmatpush1.msra.mxu0 0.0
    %1273 = vmatprep.subr.mxu0 0.0
    %1274 = vmatpush1.msra.mxu0 0.0
    %1275 = vmatprep.subr.mxu0 0.0
    %1276 = vmatpush1.msra.mxu0 0.0
    %1277 = vmatprep.mubr.f32.mxu0 0.0
    %1278 = vmatmul.mubr.f32.gmra.mrb[0].mxu0 %v1208
    %v1279 = vpop.f32.mrb[0].mxu0
    %v1280 = vadd.f32 0.0, %v1279
    %v1281 = vpop.f32.mrb[0].mxu0
    %1282 = vmatprep.mubr.f32.mxu0 0.0
    %1283 = vmatmul.mubr.f32.gmra.mrb[0].mxu0 %v1211
    %v1284 = vpop.f32.mrb[0].mxu0
    %v1285 = vadd.f32 0.0, %v1284
    %v1286 = vpop.f32.mrb[0].mxu0
    %1287 = vdwg.mxu0
    %1288 = vrot.lane.b32.xlu0 %v573, 112
    %v1289 = vpop.permute.xlu0 %1288
    %1290 = vrot.lane.b32.xlu0 %v578, 112
    %v1291 = vpop.permute.xlu0 %1290
    %v1295 = vsel %vm938, %v1024, 0
    %v1298 = vsel %vm938, %v1026, 0
    %1300 = vmatprep.subr.mxu0 0.0
    %1301 = vmatpush1.msra.mxu0 %v1289
    %1302 = vmatprep.subr.mxu0 0.0
    %1303 = vmatpush1.msra.mxu0 %v1291
    %1304 = vmatprep.subr.mxu0 0.0
    %1305 = vmatpush1.msra.mxu0 0.0
    %1306 = vmatprep.subr.mxu0 0.0
    %1307 = vmatpush1.msra.mxu0 0.0
    %1308 = vmatprep.subr.mxu0 0.0
    %1309 = vmatpush1.msra.mxu0 0.0
    %1310 = vmatprep.subr.mxu0 0.0
    %1311 = vmatpush1.msra.mxu0 0.0
    %1312 = vmatprep.subr.mxu0 0.0
    %1313 = vmatpush1.msra.mxu0 0.0
    %1314 = vmatprep.subr.mxu0 0.0
    %1315 = vmatpush1.msra.mxu0 0.0
    %1316 = vmatprep.subr.mxu0 0.0
    %1317 = vmatpush1.msra.mxu0 0.0
    %1318 = vmatprep.subr.mxu0 0.0
    %1319 = vmatpush1.msra.mxu0 0.0
    %1320 = vmatprep.subr.mxu0 0.0
    %1321 = vmatpush1.msra.mxu0 0.0
    %1322 = vmatprep.subr.mxu0 0.0
    %1323 = vmatpush1.msra.mxu0 0.0
    %1324 = vmatprep.subr.mxu0 0.0
    %1325 = vmatpush1.msra.mxu0 0.0
    %1326 = vmatprep.subr.mxu0 0.0
    %1327 = vmatpush1.msra.mxu0 0.0
    %1328 = vmatprep.subr.mxu0 0.0
    %1329 = vmatpush1.msra.mxu0 0.0
    %1330 = vmatprep.subr.mxu0 0.0
    %1331 = vmatpush1.msra.mxu0 0.0
    %1332 = vmatprep.subr.mxu0 0.0
    %1333 = vmatpush1.msra.mxu0 0.0
    %1334 = vmatprep.subr.mxu0 0.0
    %1335 = vmatpush1.msra.mxu0 0.0
    %1336 = vmatprep.subr.mxu0 0.0
    %1337 = vmatpush1.msra.mxu0 0.0
    %1338 = vmatprep.subr.mxu0 0.0
    %1339 = vmatpush1.msra.mxu0 0.0
    %1340 = vmatprep.subr.mxu0 0.0
    %1341 = vmatpush1.msra.mxu0 0.0
    %1342 = vmatprep.subr.mxu0 0.0
    %1343 = vmatpush1.msra.mxu0 0.0
    %1344 = vmatprep.subr.mxu0 0.0
    %1345 = vmatpush1.msra.mxu0 0.0
    %1346 = vmatprep.subr.mxu0 0.0
    %1347 = vmatpush1.msra.mxu0 0.0
    %1348 = vmatprep.subr.mxu0 0.0
    %1349 = vmatpush1.msra.mxu0 0.0
    %1350 = vmatprep.subr.mxu0 0.0
    %1351 = vmatpush1.msra.mxu0 0.0
    %1352 = vmatprep.subr.mxu0 0.0
    %1353 = vmatpush1.msra.mxu0 0.0
    %1354 = vmatprep.subr.mxu0 0.0
    %1355 = vmatpush1.msra.mxu0 0.0
    %1356 = vmatprep.subr.mxu0 0.0
    %1357 = vmatpush1.msra.mxu0 0.0
    %1358 = vmatprep.subr.mxu0 0.0
    %1359 = vmatpush1.msra.mxu0 0.0
    %1360 = vmatprep.subr.mxu0 0.0
    %1361 = vmatpush1.msra.mxu0 0.0
    %1362 = vmatprep.subr.mxu0 0.0
    %1363 = vmatpush1.msra.mxu0 0.0
    %1364 = vmatprep.mubr.f32.mxu0 0.0
    %1365 = vmatmul.mubr.f32.gmra.mrb[0].mxu0 %v1295
    %v1366 = vpop.f32.mrb[0].mxu0
    %v1367 = vadd.f32 0.0, %v1366
    %v1368 = vpop.f32.mrb[0].mxu0
    %1369 = vmatprep.mubr.f32.mxu0 0.0
    %1370 = vmatmul.mubr.f32.gmra.mrb[0].mxu0 %v1298
    %v1371 = vpop.f32.mrb[0].mxu0
    %v1372 = vadd.f32 0.0, %v1371
    %v1373 = vpop.f32.mrb[0].mxu0
    %1374 = vdwg.mxu0
    %v1375 = vld [vmem:[%s7] sm:$0xff]
    %v1376 = vld [vmem:[%s7 + $0x8] sm:$0xff]
    %v1377 = vld [vmem:[%s7 + $0x10] sm:$0xff]
    %v1378 = vld [vmem:[%s7 + $0x18] sm:$0xff]
    %v1380 = vsel %vm587, %v1106, 0
    %v1383 = vsel %vm587, %v1111, 0
    %1385 = vmatprep.subr.mxu0 0.0
    %1386 = vmatpush1.msra.mxu0 %v1375
    %1387 = vmatprep.subr.mxu0 0.0
    %1388 = vmatpush1.msra.mxu0 0.0
    %1389 = vmatprep.subr.mxu0 0.0
    %1390 = vmatpush1.msra.mxu0 0.0
    %1391 = vmatprep.subr.mxu0 0.0
    %1392 = vmatpush1.msra.mxu0 0.0
    %1393 = vmatprep.subr.mxu0 0.0
    %1394 = vmatpush1.msra.mxu0 0.0
    %1395 = vmatprep.subr.mxu0 0.0
    %1396 = vmatpush1.msra.mxu0 0.0
    %1397 = vmatprep.subr.mxu0 0.0
    %1398 = vmatpush1.msra.mxu0 0.0
    %1399 = vmatprep.subr.mxu0 0.0
    %1400 = vmatpush1.msra.mxu0 0.0
    %1401 = vmatprep.subr.mxu0 0.0
    %1402 = vmatpush1.msra.mxu0 0.0
    %1403 = vmatprep.subr.mxu0 0.0
    %1404 = vmatpush1.msra.mxu0 0.0
    %1405 = vmatprep.subr.mxu0 0.0
    %1406 = vmatpush1.msra.mxu0 0.0
    %1407 = vmatprep.subr.mxu0 0.0
    %1408 = vmatpush1.msra.mxu0 0.0
    %1409 = vmatprep.subr.mxu0 0.0
    %1410 = vmatpush1.msra.mxu0 0.0
    %1411 = vmatprep.subr.mxu0 0.0
    %1412 = vmatpush1.msra.mxu0 0.0
    %1413 = vmatprep.subr.mxu0 0.0
    %1414 = vmatpush1.msra.mxu0 0.0
    %1415 = vmatprep.subr.mxu0 0.0
    %1416 = vmatpush1.msra.mxu0 0.0
    %1417 = vmatprep.subr.mxu0 0.0
    %1418 = vmatpush1.msra.mxu0 0.0
    %1419 = vmatprep.subr.mxu0 0.0
    %1420 = vmatpush1.msra.mxu0 0.0
    %1421 = vmatprep.subr.mxu0 0.0
    %1422 = vmatpush1.msra.mxu0 0.0
    %1423 = vmatprep.subr.mxu0 0.0
    %1424 = vmatpush1.msra.mxu0 0.0
    %1425 = vmatprep.subr.mxu0 0.0
    %1426 = vmatpush1.msra.mxu0 0.0
    %1427 = vmatprep.subr.mxu0 0.0
    %1428 = vmatpush1.msra.mxu0 0.0
    %1429 = vmatprep.subr.mxu0 0.0
    %1430 = vmatpush1.msra.mxu0 0.0
    %1431 = vmatprep.subr.mxu0 0.0
    %1432 = vmatpush1.msra.mxu0 0.0
    %1433 = vmatprep.subr.mxu0 0.0
    %1434 = vmatpush1.msra.mxu0 0.0
    %1435 = vmatprep.subr.mxu0 0.0
    %1436 = vmatpush1.msra.mxu0 0.0
    %1437 = vmatprep.subr.mxu0 0.0
    %1438 = vmatpush1.msra.mxu0 0.0
    %1439 = vmatprep.subr.mxu0 0.0
    %1440 = vmatpush1.msra.mxu0 0.0
    %1441 = vmatprep.subr.mxu0 0.0
    %1442 = vmatpush1.msra.mxu0 0.0
    %1443 = vmatprep.subr.mxu0 0.0
    %1444 = vmatpush1.msra.mxu0 0.0
    %1445 = vmatprep.subr.mxu0 0.0
    %1446 = vmatpush1.msra.mxu0 0.0
    %1447 = vmatprep.subr.mxu0 0.0
    %1448 = vmatpush1.msra.mxu0 0.0
    %1449 = vmatprep.mubr.f32.mxu0 0.0
    %1450 = vmatmul.mubr.f32.gmra.mrb[0].mxu0 %v1380
    %v1451 = vpop.f32.mrb[0].mxu0
    %v1452 = vadd.f32 0.0, %v1451
    %v1453 = vpop.f32.mrb[0].mxu0
    %1454 = vmatprep.mubr.f32.mxu0 0.0
    %1455 = vmatmul.mubr.f32.gmra.mrb[0].mxu0 %v1383
    %v1456 = vpop.f32.mrb[0].mxu0
    %v1457 = vadd.f32 0.0, %v1456
    %v1458 = vpop.f32.mrb[0].mxu0
    %1459 = vdwg.mxu0
    %v1461 = vsel %vm587, %v1193, 0
    %v1464 = vsel %vm587, %v1198, 0
    %1466 = vmatprep.subr.mxu0 0.0
    %1467 = vmatpush1.msra.mxu0 %v1376
    %1468 = vmatprep.subr.mxu0 0.0
    %1469 = vmatpush1.msra.mxu0 0.0
    %1470 = vmatprep.subr.mxu0 0.0
    %1471 = vmatpush1.msra.mxu0 0.0
    %1472 = vmatprep.subr.mxu0 0.0
    %1473 = vmatpush1.msra.mxu0 0.0
    %1474 = vmatprep.subr.mxu0 0.0
    %1475 = vmatpush1.msra.mxu0 0.0
    %1476 = vmatprep.subr.mxu0 0.0
    %1477 = vmatpush1.msra.mxu0 0.0
    %1478 = vmatprep.subr.mxu0 0.0
    %1479 = vmatpush1.msra.mxu0 0.0
    %1480 = vmatprep.subr.mxu0 0.0
    %1481 = vmatpush1.msra.mxu0 0.0
    %1482 = vmatprep.subr.mxu0 0.0
    %1483 = vmatpush1.msra.mxu0 0.0
    %1484 = vmatprep.subr.mxu0 0.0
    %1485 = vmatpush1.msra.mxu0 0.0
    %1486 = vmatprep.subr.mxu0 0.0
    %1487 = vmatpush1.msra.mxu0 0.0
    %1488 = vmatprep.subr.mxu0 0.0
    %1489 = vmatpush1.msra.mxu0 0.0
    %1490 = vmatprep.subr.mxu0 0.0
    %1491 = vmatpush1.msra.mxu0 0.0
    %1492 = vmatprep.subr.mxu0 0.0
    %1493 = vmatpush1.msra.mxu0 0.0
    %1494 = vmatprep.subr.mxu0 0.0
    %1495 = vmatpush1.msra.mxu0 0.0
    %1496 = vmatprep.subr.mxu0 0.0
    %1497 = vmatpush1.msra.mxu0 0.0
    %1498 = vmatprep.subr.mxu0 0.0
    %1499 = vmatpush1.msra.mxu0 0.0
    %1500 = vmatprep.subr.mxu0 0.0
    %1501 = vmatpush1.msra.mxu0 0.0
    %1502 = vmatprep.subr.mxu0 0.0
    %1503 = vmatpush1.msra.mxu0 0.0
    %1504 = vmatprep.subr.mxu0 0.0
    %1505 = vmatpush1.msra.mxu0 0.0
    %1506 = vmatprep.subr.mxu0 0.0
    %1507 = vmatpush1.msra.mxu0 0.0
    %1508 = vmatprep.subr.mxu0 0.0
    %1509 = vmatpush1.msra.mxu0 0.0
    %1510 = vmatprep.subr.mxu0 0.0
    %1511 = vmatpush1.msra.mxu0 0.0
    %1512 = vmatprep.subr.mxu0 0.0
    %1513 = vmatpush1.msra.mxu0 0.0
    %1514 = vmatprep.subr.mxu0 0.0
    %1515 = vmatpush1.msra.mxu0 0.0
    %1516 = vmatprep.subr.mxu0 0.0
    %1517 = vmatpush1.msra.mxu0 0.0
    %1518 = vmatprep.subr.mxu0 0.0
    %1519 = vmatpush1.msra.mxu0 0.0
    %1520 = vmatprep.subr.mxu0 0.0
    %1521 = vmatpush1.msra.mxu0 0.0
    %1522 = vmatprep.subr.mxu0 0.0
    %1523 = vmatpush1.msra.mxu0 0.0
    %1524 = vmatprep.subr.mxu0 0.0
    %1525 = vmatpush1.msra.mxu0 0.0
    %1526 = vmatprep.subr.mxu0 0.0
    %1527 = vmatpush1.msra.mxu0 0.0
    %1528 = vmatprep.subr.mxu0 0.0
    %1529 = vmatpush1.msra.mxu0 0.0
    %1530 = vmatprep.mubr.f32.mxu0 0.0
    %1531 = vmatmul.mubr.f32.gmra.mrb[0].mxu0 %v1461
    %v1532 = vpop.f32.mrb[0].mxu0
    %v1533 = vadd.f32 0.0, %v1532
    %v1534 = vpop.f32.mrb[0].mxu0
    %1535 = vmatprep.mubr.f32.mxu0 0.0
    %1536 = vmatmul.mubr.f32.gmra.mrb[0].mxu0 %v1464
    %v1537 = vpop.f32.mrb[0].mxu0
    %v1538 = vadd.f32 0.0, %v1537
    %v1539 = vpop.f32.mrb[0].mxu0
    %1540 = vdwg.mxu0
    %v1542 = vsel %vm587, %v1280, 0
    %v1545 = vsel %vm587, %v1285, 0
    %1547 = vmatprep.subr.mxu0 0.0
    %1548 = vmatpush1.msra.mxu0 %v1377
    %1549 = vmatprep.subr.mxu0 0.0
    %1550 = vmatpush1.msra.mxu0 0.0
    %1551 = vmatprep.subr.mxu0 0.0
    %1552 = vmatpush1.msra.mxu0 0.0
    %1553 = vmatprep.subr.mxu0 0.0
    %1554 = vmatpush1.msra.mxu0 0.0
    %1555 = vmatprep.subr.mxu0 0.0
    %1556 = vmatpush1.msra.mxu0 0.0
    %1557 = vmatprep.subr.mxu0 0.0
    %1558 = vmatpush1.msra.mxu0 0.0
    %1559 = vmatprep.subr.mxu0 0.0
    %1560 = vmatpush1.msra.mxu0 0.0
    %1561 = vmatprep.subr.mxu0 0.0
    %1562 = vmatpush1.msra.mxu0 0.0
    %1563 = vmatprep.subr.mxu0 0.0
    %1564 = vmatpush1.msra.mxu0 0.0
    %1565 = vmatprep.subr.mxu0 0.0
    %1566 = vmatpush1.msra.mxu0 0.0
    %1567 = vmatprep.subr.mxu0 0.0
    %1568 = vmatpush1.msra.mxu0 0.0
    %1569 = vmatprep.subr.mxu0 0.0
    %1570 = vmatpush1.msra.mxu0 0.0
    %1571 = vmatprep.subr.mxu0 0.0
    %1572 = vmatpush1.msra.mxu0 0.0
    %1573 = vmatprep.subr.mxu0 0.0
    %1574 = vmatpush1.msra.mxu0 0.0
    %1575 = vmatprep.subr.mxu0 0.0
    %1576 = vmatpush1.msra.mxu0 0.0
    %1577 = vmatprep.subr.mxu0 0.0
    %1578 = vmatpush1.msra.mxu0 0.0
    %1579 = vmatprep.subr.mxu0 0.0
    %1580 = vmatpush1.msra.mxu0 0.0
    %1581 = vmatprep.subr.mxu0 0.0
    %1582 = vmatpush1.msra.mxu0 0.0
    %1583 = vmatprep.subr.mxu0 0.0
    %1584 = vmatpush1.msra.mxu0 0.0
    %1585 = vmatprep.subr.mxu0 0.0
    %1586 = vmatpush1.msra.mxu0 0.0
    %1587 = vmatprep.subr.mxu0 0.0
    %1588 = vmatpush1.msra.mxu0 0.0
    %1589 = vmatprep.subr.mxu0 0.0
    %1590 = vmatpush1.msra.mxu0 0.0
    %1591 = vmatprep.subr.mxu0 0.0
    %1592 = vmatpush1.msra.mxu0 0.0
    %1593 = vmatprep.subr.mxu0 0.0
    %1594 = vmatpush1.msra.mxu0 0.0
    %1595 = vmatprep.subr.mxu0 0.0
    %1596 = vmatpush1.msra.mxu0 0.0
    %1597 = vmatprep.subr.mxu0 0.0
    %1598 = vmatpush1.msra.mxu0 0.0
    %1599 = vmatprep.subr.mxu0 0.0
    %1600 = vmatpush1.msra.mxu0 0.0
    %1601 = vmatprep.subr.mxu0 0.0
    %1602 = vmatpush1.msra.mxu0 0.0
    %1603 = vmatprep.subr.mxu0 0.0
    %1604 = vmatpush1.msra.mxu0 0.0
    %1605 = vmatprep.subr.mxu0 0.0
    %1606 = vmatpush1.msra.mxu0 0.0
    %1607 = vmatprep.subr.mxu0 0.0
    %1608 = vmatpush1.msra.mxu0 0.0
    %1609 = vmatprep.subr.mxu0 0.0
    %1610 = vmatpush1.msra.mxu0 0.0
    %1611 = vmatprep.mubr.f32.mxu0 0.0
    %1612 = vmatmul.mubr.f32.gmra.mrb[0].mxu0 %v1542
    %v1613 = vpop.f32.mrb[0].mxu0
    %v1614 = vadd.f32 0.0, %v1613
    %v1615 = vpop.f32.mrb[0].mxu0
    %1616 = vmatprep.mubr.f32.mxu0 0.0
    %1617 = vmatmul.mubr.f32.gmra.mrb[0].mxu0 %v1545
    %v1618 = vpop.f32.mrb[0].mxu0
    %v1619 = vadd.f32 0.0, %v1618
    %v1620 = vpop.f32.mrb[0].mxu0
    %1621 = vdwg.mxu0
    %v1623 = vsel %vm587, %v1367, 0
    %v1626 = vsel %vm587, %v1372, 0
    %1628 = vmatprep.subr.mxu0 0.0
    %1629 = vmatpush1.msra.mxu0 %v1378
    %1630 = vmatprep.subr.mxu0 0.0
    %1631 = vmatpush1.msra.mxu0 0.0
    %1632 = vmatprep.subr.mxu0 0.0
    %1633 = vmatpush1.msra.mxu0 0.0
    %1634 = vmatprep.subr.mxu0 0.0
    %1635 = vmatpush1.msra.mxu0 0.0
    %1636 = vmatprep.subr.mxu0 0.0
    %1637 = vmatpush1.msra.mxu0 0.0
    %1638 = vmatprep.subr.mxu0 0.0
    %1639 = vmatpush1.msra.mxu0 0.0
    %1640 = vmatprep.subr.mxu0 0.0
    %1641 = vmatpush1.msra.mxu0 0.0
    %1642 = vmatprep.subr.mxu0 0.0
    %1643 = vmatpush1.msra.mxu0 0.0
    %1644 = vmatprep.subr.mxu0 0.0
    %1645 = vmatpush1.msra.mxu0 0.0
    %1646 = vmatprep.subr.mxu0 0.0
    %1647 = vmatpush1.msra.mxu0 0.0
    %1648 = vmatprep.subr.mxu0 0.0
    %1649 = vmatpush1.msra.mxu0 0.0
    %1650 = vmatprep.subr.mxu0 0.0
    %1651 = vmatpush1.msra.mxu0 0.0
    %1652 = vmatprep.subr.mxu0 0.0
    %1653 = vmatpush1.msra.mxu0 0.0
    %1654 = vmatprep.subr.mxu0 0.0
    %1655 = vmatpush1.msra.mxu0 0.0
    %1656 = vmatprep.subr.mxu0 0.0
    %1657 = vmatpush1.msra.mxu0 0.0
    %1658 = vmatprep.subr.mxu0 0.0
    %1659 = vmatpush1.msra.mxu0 0.0
    %1660 = vmatprep.subr.mxu0 0.0
    %1661 = vmatpush1.msra.mxu0 0.0
    %1662 = vmatprep.subr.mxu0 0.0
    %1663 = vmatpush1.msra.mxu0 0.0
    %1664 = vmatprep.subr.mxu0 0.0
    %1665 = vmatpush1.msra.mxu0 0.0
    %1666 = vmatprep.subr.mxu0 0.0
    %1667 = vmatpush1.msra.mxu0 0.0
    %1668 = vmatprep.subr.mxu0 0.0
    %1669 = vmatpush1.msra.mxu0 0.0
    %1670 = vmatprep.subr.mxu0 0.0
    %1671 = vmatpush1.msra.mxu0 0.0
    %1672 = vmatprep.subr.mxu0 0.0
    %1673 = vmatpush1.msra.mxu0 0.0
    %1674 = vmatprep.subr.mxu0 0.0
    %1675 = vmatpush1.msra.mxu0 0.0
    %1676 = vmatprep.subr.mxu0 0.0
    %1677 = vmatpush1.msra.mxu0 0.0
    %1678 = vmatprep.subr.mxu0 0.0
    %1679 = vmatpush1.msra.mxu0 0.0
    %1680 = vmatprep.subr.mxu0 0.0
    %1681 = vmatpush1.msra.mxu0 0.0
    %1682 = vmatprep.subr.mxu0 0.0
    %1683 = vmatpush1.msra.mxu0 0.0
    %1684 = vmatprep.subr.mxu0 0.0
    %1685 = vmatpush1.msra.mxu0 0.0
    %1686 = vmatprep.subr.mxu0 0.0
    %1687 = vmatpush1.msra.mxu0 0.0
    %1688 = vmatprep.subr.mxu0 0.0
    %1689 = vmatpush1.msra.mxu0 0.0
    %1690 = vmatprep.subr.mxu0 0.0
    %1691 = vmatpush1.msra.mxu0 0.0
    %1692 = vmatprep.mubr.f32.mxu0 0.0
    %1693 = vmatmul.mubr.f32.gmra.mrb[0].mxu0 %v1623
    %v1694 = vpop.f32.mrb[0].mxu0
    %v1695 = vadd.f32 0.0, %v1694
    %v1696 = vpop.f32.mrb[0].mxu0
    %1697 = vmatprep.mubr.f32.mxu0 0.0
    %1698 = vmatmul.mubr.f32.gmra.mrb[0].mxu0 %v1626
    %v1699 = vpop.f32.mrb[0].mxu0
    %v1700 = vadd.f32 0.0, %v1699
    %v1701 = vpop.f32.mrb[0].mxu0
    %1702 = vdwg.mxu0
    %v1703 = vsel %vm215, %v1452, 0.0
    %v1704 = vsel %vm215, %v1533, 0.0
    %v1705 = vadd.f32 %v1703, %v1704
    %v1706 = vsel %vm215, %v1614, 0.0
    %v1707 = vadd.f32 %v1705, %v1706
    %v1708 = vsel %vm215, %v1695, 0.0
    %v1709 = vadd.f32 %v1707, %v1708
    %v1710 = vsel %vm215, %v1457, 0.0
    %v1711 = vsel %vm215, %v1538, 0.0
    %v1712 = vadd.f32 %v1710, %v1711
    %v1713 = vsel %vm215, %v1619, 0.0
    %v1714 = vadd.f32 %v1712, %v1713
    %v1715 = vsel %vm215, %v1700, 0.0
    %v1716 = vadd.f32 %v1714, %v1715
    %v1717 = vld [vmem:[%s8] sm:$0x1]
    %v1719 = vlaneseq
    %v1720 = vshrl.u32 %v1719, 7
    %v1721 = vsub.s32 0, %v1720
    %v1722 = vrot.slane %v1717, %v1721
    %v1724 = vadd.f32 %v1709, %v1722
    %v1725 = vadd.f32 %v1716, %v1722
    %v1726 = vadd.f32 %v197, %v1724
    %v1727 = vadd.f32 %v202, %v1725
    %v1728 = vld [vmem:[%s9] sm:$0x1]
    %v1729 = vld [vmem:[%s10] sm:$0x1]
    %v1730 = vsel %vm215, %v1726, 0.0
    %1731 = vadd.xlane.f32.xlu0 %v1730
    %v1732 = vpop.xlane.xlu0 %1731
    %v1733 = vsel %vm215, %v1727, 0.0
    %1734 = vadd.xlane.f32.xlu0 %v1733
    %v1735 = vpop.xlane.xlu0 %1734
    %v1736 = vmul.f32 %v1732, %v222
    %v1737 = vmul.f32 %v1735, %v222
    %v1738 = vsub.f32 %v1726, %v1736
    %v1739 = vsub.f32 %v1727, %v1737
    %v1740 = vmul.f32 %v1738, %v1738
    %v1741 = vmul.f32 %v1739, %v1739
    %v1742 = vsel %vm215, %v1740, 0.0
    %1743 = vadd.xlane.f32.xlu0 %v1742
    %v1744 = vpop.xlane.xlu0 %1743
    %v1745 = vsel %vm215, %v1741, 0.0
    %1746 = vadd.xlane.f32.xlu0 %v1745
    %v1747 = vpop.xlane.xlu0 %1746
    %v1748 = vmul.f32 %v1744, %v222
    %v1749 = vmul.f32 %v1747, %v222
    %v1750 = vadd.f32 %v1748, 1e-05
    %v1751 = vadd.f32 %v1749, 1e-05
    %v1752 = vrsqrt.pop %v1750
    %v1753 = vrsqrt.pop %v1751
    %v1754 = vmul.f32 %v1738, %v1752
    %v1755 = vmul.f32 %v1739, %v1753
    %v1757 = vlaneseq
    %v1758 = vshrl.u32 %v1757, 7
    %v1759 = vsub.s32 0, %v1758
    %v1760 = vrot.slane %v1728, %v1759
    %v1762 = vmul.f32 %v1754, %v1760
    %v1763 = vmul.f32 %v1755, %v1760
    %v1765 = vlaneseq
    %v1766 = vshrl.u32 %v1765, 7
    %v1767 = vsub.s32 0, %v1766
    %v1768 = vrot.slane %v1729, %v1767
    %v1770 = vadd.f32 %v1762, %v1768
    %v1771 = vadd.f32 %v1763, %v1768
    %v1772 = vld [vmem:[%s11] sm:$0xff]
    %v1773 = vld [vmem:[%s11 + $0x8] sm:$0xff]
    %v1774 = vld [vmem:[%s11 + $0x10] sm:$0xff]
    %v1775 = vld [vmem:[%s11 + $0x18] sm:$0xff]
    %v1776 = vld [vmem:[%s12] sm:$0x1]
    %v1778 = vlaneseq
    %v1779 = vshrl.u32 %v1778, 7
    %v1780 = vsub.s32 0, %v1779
    %v1781 = vrot.slane %v1776, %v1780
    %v1784 = vsel %vm215, %v1770, 0
    %v1787 = vsel %vm215, %v1771, 0
    %1789 = vmatprep.subr.mxu0 0.0
    %1790 = vmatpush1.msra.mxu0 %v1772
    %1791 = vmatprep.subr.mxu0 0.0
    %1792 = vmatpush1.msra.mxu0 %v1773
    %1793 = vmatprep.subr.mxu0 0.0
    %1794 = vmatpush1.msra.mxu0 %v1774
    %1795 = vmatprep.subr.mxu0 0.0
    %1796 = vmatpush1.msra.mxu0 %v1775
    %1797 = vmatprep.subr.mxu0 0.0
    %1798 = vmatpush1.msra.mxu0 0.0
    %1799 = vmatprep.subr.mxu0 0.0
    %1800 = vmatpush1.msra.mxu0 0.0
    %1801 = vmatprep.subr.mxu0 0.0
    %1802 = vmatpush1.msra.mxu0 0.0
    %1803 = vmatprep.subr.mxu0 0.0
    %1804 = vmatpush1.msra.mxu0 0.0
    %1805 = vmatprep.subr.mxu0 0.0
    %1806 = vmatpush1.msra.mxu0 0.0
    %1807 = vmatprep.subr.mxu0 0.0
    %1808 = vmatpush1.msra.mxu0 0.0
    %1809 = vmatprep.subr.mxu0 0.0
    %1810 = vmatpush1.msra.mxu0 0.0
    %1811 = vmatprep.subr.mxu0 0.0
    %1812 = vmatpush1.msra.mxu0 0.0
    %1813 = vmatprep.subr.mxu0 0.0
    %1814 = vmatpush1.msra.mxu0 0.0
    %1815 = vmatprep.subr.mxu0 0.0
    %1816 = vmatpush1.msra.mxu0 0.0
    %1817 = vmatprep.subr.mxu0 0.0
    %1818 = vmatpush1.msra.mxu0 0.0
    %1819 = vmatprep.subr.mxu0 0.0
    %1820 = vmatpush1.msra.mxu0 0.0
    %1821 = vmatprep.subr.mxu0 0.0
    %1822 = vmatpush1.msra.mxu0 0.0
    %1823 = vmatprep.subr.mxu0 0.0
    %1824 = vmatpush1.msra.mxu0 0.0
    %1825 = vmatprep.subr.mxu0 0.0
    %1826 = vmatpush1.msra.mxu0 0.0
    %1827 = vmatprep.subr.mxu0 0.0
    %1828 = vmatpush1.msra.mxu0 0.0
    %1829 = vmatprep.subr.mxu0 0.0
    %1830 = vmatpush1.msra.mxu0 0.0
    %1831 = vmatprep.subr.mxu0 0.0
    %1832 = vmatpush1.msra.mxu0 0.0
    %1833 = vmatprep.subr.mxu0 0.0
    %1834 = vmatpush1.msra.mxu0 0.0
    %1835 = vmatprep.subr.mxu0 0.0
    %1836 = vmatpush1.msra.mxu0 0.0
    %1837 = vmatprep.subr.mxu0 0.0
    %1838 = vmatpush1.msra.mxu0 0.0
    %1839 = vmatprep.subr.mxu0 0.0
    %1840 = vmatpush1.msra.mxu0 0.0
    %1841 = vmatprep.subr.mxu0 0.0
    %1842 = vmatpush1.msra.mxu0 0.0
    %1843 = vmatprep.subr.mxu0 0.0
    %1844 = vmatpush1.msra.mxu0 0.0
    %1845 = vmatprep.subr.mxu0 0.0
    %1846 = vmatpush1.msra.mxu0 0.0
    %1847 = vmatprep.subr.mxu0 0.0
    %1848 = vmatpush1.msra.mxu0 0.0
    %1849 = vmatprep.subr.mxu0 0.0
    %1850 = vmatpush1.msra.mxu0 0.0
    %1851 = vmatprep.subr.mxu0 0.0
    %1852 = vmatpush1.msra.mxu0 0.0
    %1853 = vmatprep.mubr.f32.mxu0 0.0
    %1854 = vmatmul.mubr.f32.gmra.mrb[0].mxu0 %v1784
    %v1855 = vpop.f32.mrb[0].mxu0
    %v1856 = vadd.f32 %v1781, %v1855
    %v1857 = vpop.f32.mrb[0].mxu0
    %1858 = vmatprep.mubr.f32.mxu0 0.0
    %1859 = vmatmul.mubr.f32.gmra.mrb[0].mxu0 %v1787
    %v1860 = vpop.f32.mrb[0].mxu0
    %v1861 = vadd.f32 %v1781, %v1860
    %v1862 = vpop.f32.mrb[0].mxu0
    %1863 = vdwg.mxu0
    %v1864 = vmul.f32 %v1856, 0.5
    %v1865 = vmul.f32 %v1861, 0.5
    %v1866 = vmul.f32 %v1856, 0.044715
    %v1867 = vmul.f32 %v1861, 0.044715
    %v1868 = vmul.f32 %v1866, %v1856
    %v1869 = vmul.f32 %v1867, %v1861
    %v1870 = vmul.f32 %v1868, %v1856
    %v1871 = vmul.f32 %v1869, %v1861
    %v1872 = vadd.f32 %v1856, %v1870
    %v1873 = vadd.f32 %v1861, %v1871
    %v1874 = vmul.f32 %v1872, 0.7978846
    %v1875 = vmul.f32 %v1873, 0.7978846
    %v1876 = vtanh.pop %v1874
    %v1877 = vtanh.pop %v1875
    %v1878 = vadd.f32 %v1876, 1.0
    %v1879 = vadd.f32 %v1877, 1.0
    %v1880 = vmul.f32 %v1864, %v1878
    %v1881 = vmul.f32 %v1865, %v1879
    %v1882 = vld [vmem:[%s13] sm:$0xff]
    %v1883 = vld [vmem:[%s13 + $0x8] sm:$0xff]
    %v1884 = vld [vmem:[%s13 + $0x10] sm:$0xff]
    %v1885 = vld [vmem:[%s13 + $0x18] sm:$0xff]
    %v1886 = vld [vmem:[%s13 + $0x20] sm:$0xff]
    %v1887 = vld [vmem:[%s13 + $0x28] sm:$0xff]
    %v1888 = vld [vmem:[%s13 + $0x30] sm:$0xff]
    %v1889 = vld [vmem:[%s13 + $0x38] sm:$0xff]
    %v1890 = vld [vmem:[%s13 + $0x40] sm:$0xff]
    %v1891 = vld [vmem:[%s13 + $0x48] sm:$0xff]
    %v1892 = vld [vmem:[%s13 + $0x50] sm:$0xff]
    %v1893 = vld [vmem:[%s13 + $0x58] sm:$0xff]
    %v1894 = vld [vmem:[%s13 + $0x60] sm:$0xff]
    %v1895 = vld [vmem:[%s13 + $0x68] sm:$0xff]
    %v1896 = vld [vmem:[%s13 + $0x70] sm:$0xff]
    %v1897 = vld [vmem:[%s13 + $0x78] sm:$0xff]
    %v1898 = vld [vmem:[%s14] sm:$0x1]
    %v1900 = vlaneseq
    %v1901 = vshrl.u32 %v1900, 7
    %v1902 = vsub.s32 0, %v1901
    %v1903 = vrot.slane %v1898, %v1902
    %1905 = vmatprep.subr.mxu0 0.0
    %1906 = vmatpush1.msra.mxu0 %v1882
    %1907 = vmatprep.subr.mxu0 0.0
    %1908 = vmatpush1.msra.mxu0 %v1883
    %1909 = vmatprep.subr.mxu0 0.0
    %1910 = vmatpush1.msra.mxu0 %v1884
    %1911 = vmatprep.subr.mxu0 0.0
    %1912 = vmatpush1.msra.mxu0 %v1885
    %1913 = vmatprep.subr.mxu0 0.0
    %1914 = vmatpush1.msra.mxu0 %v1886
    %1915 = vmatprep.subr.mxu0 0.0
    %1916 = vmatpush1.msra.mxu0 %v1887
    %1917 = vmatprep.subr.mxu0 0.0
    %1918 = vmatpush1.msra.mxu0 %v1888
    %1919 = vmatprep.subr.mxu0 0.0
    %1920 = vmatpush1.msra.mxu0 %v1889
    %1921 = vmatprep.subr.mxu0 0.0
    %1922 = vmatpush1.msra.mxu0 %v1890
    %1923 = vmatprep.subr.mxu0 0.0
    %1924 = vmatpush1.msra.mxu0 %v1891
    %1925 = vmatprep.subr.mxu0 0.0
    %1926 = vmatpush1.msra.mxu0 %v1892
    %1927 = vmatprep.subr.mxu0 0.0
    %1928 = vmatpush1.msra.mxu0 %v1893
    %1929 = vmatprep.subr.mxu0 0.0
    %1930 = vmatpush1.msra.mxu0 %v1894
    %1931 = vmatprep.subr.mxu0 0.0
    %1932 = vmatpush1.msra.mxu0 %v1895
    %1933 = vmatprep.subr.mxu0 0.0
    %1934 = vmatpush1.msra.mxu0 %v1896
    %1935 = vmatprep.subr.mxu0 0.0
    %1936 = vmatpush1.msra.mxu0 %v1897
    %1937 = vmatprep.subr.mxu0 0.0
    %1938 = vmatpush1.msra.mxu0 0.0
    %1939 = vmatprep.subr.mxu0 0.0
    %1940 = vmatpush1.msra.mxu0 0.0
    %1941 = vmatprep.subr.mxu0 0.0
    %1942 = vmatpush1.msra.mxu0 0.0
    %1943 = vmatprep.subr.mxu0 0.0
    %1944 = vmatpush1.msra.mxu0 0.0
    %1945 = vmatprep.subr.mxu0 0.0
    %1946 = vmatpush1.msra.mxu0 0.0
    %1947 = vmatprep.subr.mxu0 0.0
    %1948 = vmatpush1.msra.mxu0 0.0
    %1949 = vmatprep.subr.mxu0 0.0
    %1950 = vmatpush1.msra.mxu0 0.0
    %1951 = vmatprep.subr.mxu0 0.0
    %1952 = vmatpush1.msra.mxu0 0.0
    %1953 = vmatprep.subr.mxu0 0.0
    %1954 = vmatpush1.msra.mxu0 0.0
    %1955 = vmatprep.subr.mxu0 0.0
    %1956 = vmatpush1.msra.mxu0 0.0
    %1957 = vmatprep.subr.mxu0 0.0
    %1958 = vmatpush1.msra.mxu0 0.0
    %1959 = vmatprep.subr.mxu0 0.0
    %1960 = vmatpush1.msra.mxu0 0.0
    %1961 = vmatprep.subr.mxu0 0.0
    %1962 = vmatpush1.msra.mxu0 0.0
    %1963 = vmatprep.subr.mxu0 0.0
    %1964 = vmatpush1.msra.mxu0 0.0
    %1965 = vmatprep.subr.mxu0 0.0
    %1966 = vmatpush1.msra.mxu0 0.0
    %1967 = vmatprep.subr.mxu0 0.0
    %1968 = vmatpush1.msra.mxu0 0.0
    %1969 = vmatprep.mubr.f32.mxu0 0.0
    %1970 = vmatmul.mubr.f32.gmra.mrb[0].mxu0 %v1880
    %v1971 = vpop.f32.mrb[0].mxu0
    %v1972 = vadd.f32 %v1903, %v1971
    %v1973 = vpop.f32.mrb[0].mxu0
    %1974 = vmatprep.mubr.f32.mxu0 0.0
    %1975 = vmatmul.mubr.f32.gmra.mrb[0].mxu0 %v1881
    %v1976 = vpop.f32.mrb[0].mxu0
    %v1977 = vadd.f32 %v1903, %v1976
    %v1978 = vpop.f32.mrb[0].mxu0
    %1979 = vdwg.mxu0
    %v1980 = vadd.f32 %v1726, %v1972
    %v1981 = vadd.f32 %v1727, %v1977
    %s1982 = scalar_lea.vmem %s4, 1
    %v1983 = vld [vmem:[%s1982] sm:$0x1]
    %s1984 = scalar_lea.vmem %s5, 1
    %v1985 = vld [vmem:[%s1984] sm:$0x1]
    %v1986 = vsel %vm215, %v1980, 0.0
    %1987 = vadd.xlane.f32.xlu0 %v1986
    %v1988 = vpop.xlane.xlu0 %1987
    %v1989 = vsel %vm215, %v1981, 0.0
    %1990 = vadd.xlane.f32.xlu0 %v1989
    %v1991 = vpop.xlane.xlu0 %1990
    %v1992 = vmul.f32 %v1988, %v222
    %v1993 = vmul.f32 %v1991, %v222
    %v1994 = vsub.f32 %v1980, %v1992
    %v1995 = vsub.f32 %v1981, %v1993
    %v1996 = vmul.f32 %v1994, %v1994
    %v1997 = vmul.f32 %v1995, %v1995
    %v1998 = vsel %vm215, %v1996, 0.0
    %1999 = vadd.xlane.f32.xlu0 %v1998
    %v2000 = vpop.xlane.xlu0 %1999
    %v2001 = vsel %vm215, %v1997, 0.0
    %2002 = vadd.xlane.f32.xlu0 %v2001
    %v2003 = vpop.xlane.xlu0 %2002
    %v2004 = vmul.f32 %v2000, %v222
    %v2005 = vmul.f32 %v2003, %v222
    %v2006 = vadd.f32 %v2004, 1e-05
    %v2007 = vadd.f32 %v2005, 1e-05
    %v2008 = vrsqrt.pop %v2006
    %v2009 = vrsqrt.pop %v2007
    %v2010 = vmul.f32 %v1994, %v2008
    %v2011 = vmul.f32 %v1995, %v2009
    %v2013 = vlaneseq
    %v2014 = vshrl.u32 %v2013, 7
    %v2015 = vsub.s32 0, %v2014
    %v2016 = vrot.slane %v1983, %v2015
    %v2018 = vmul.f32 %v2010, %v2016
    %v2019 = vmul.f32 %v2011, %v2016
    %v2021 = vlaneseq
    %v2022 = vshrl.u32 %v2021, 7
    %v2023 = vsub.s32 0, %v2022
    %v2024 = vrot.slane %v1985, %v2023
    %v2026 = vadd.f32 %v2018, %v2024
    %v2027 = vadd.f32 %v2019, %v2024
    %s2028 = scalar_lea.vmem %s6, 128
    %v2029 = vld [vmem:[%s2028] sm:$0xff]
    %v2030 = vld [vmem:[%s2028 + $0x8] sm:$0xff]
    %v2031 = vld [vmem:[%s2028 + $0x10] sm:$0xff]
    %v2032 = vld [vmem:[%s2028 + $0x18] sm:$0xff]
    %v2033 = vld [vmem:[%s2028 + $0x20] sm:$0xff]
    %v2034 = vld [vmem:[%s2028 + $0x28] sm:$0xff]
    %v2035 = vld [vmem:[%s2028 + $0x30] sm:$0xff]
    %v2036 = vld [vmem:[%s2028 + $0x38] sm:$0xff]
    %v2037 = vld [vmem:[%s2028 + $0x40] sm:$0xff]
    %v2038 = vld [vmem:[%s2028 + $0x48] sm:$0xff]
    %v2039 = vld [vmem:[%s2028 + $0x50] sm:$0xff]
    %v2040 = vld [vmem:[%s2028 + $0x58] sm:$0xff]
    %v2041 = vld [vmem:[%s2028 + $0x60] sm:$0xff]
    %v2042 = vld [vmem:[%s2028 + $0x68] sm:$0xff]
    %v2043 = vld [vmem:[%s2028 + $0x70] sm:$0xff]
    %v2044 = vld [vmem:[%s2028 + $0x78] sm:$0xff]
    %v2046 = vsel %vm215, %v2026, 0
    %v2049 = vsel %vm215, %v2027, 0
    %2051 = vmatprep.subr.mxu0 0.0
    %2052 = vmatpush1.msra.mxu0 %v2029
    %2053 = vmatprep.subr.mxu0 0.0
    %2054 = vmatpush1.msra.mxu0 %v2030
    %2055 = vmatprep.subr.mxu0 0.0
    %2056 = vmatpush1.msra.mxu0 %v2031
    %2057 = vmatprep.subr.mxu0 0.0
    %2058 = vmatpush1.msra.mxu0 %v2032
    %2059 = vmatprep.subr.mxu0 0.0
    %2060 = vmatpush1.msra.mxu0 0.0
    %2061 = vmatprep.subr.mxu0 0.0
    %2062 = vmatpush1.msra.mxu0 0.0
    %2063 = vmatprep.subr.mxu0 0.0
    %2064 = vmatpush1.msra.mxu0 0.0
    %2065 = vmatprep.subr.mxu0 0.0
    %2066 = vmatpush1.msra.mxu0 0.0
    %2067 = vmatprep.subr.mxu0 0.0
    %2068 = vmatpush1.msra.mxu0 0.0
    %2069 = vmatprep.subr.mxu0 0.0
    %2070 = vmatpush1.msra.mxu0 0.0
    %2071 = vmatprep.subr.mxu0 0.0
    %2072 = vmatpush1.msra.mxu0 0.0
    %2073 = vmatprep.subr.mxu0 0.0
    %2074 = vmatpush1.msra.mxu0 0.0
    %2075 = vmatprep.subr.mxu0 0.0
    %2076 = vmatpush1.msra.mxu0 0.0
    %2077 = vmatprep.subr.mxu0 0.0
    %2078 = vmatpush1.msra.mxu0 0.0
    %2079 = vmatprep.subr.mxu0 0.0
    %2080 = vmatpush1.msra.mxu0 0.0
    %2081 = vmatprep.subr.mxu0 0.0
    %2082 = vmatpush1.msra.mxu0 0.0
    %2083 = vmatprep.subr.mxu0 0.0
    %2084 = vmatpush1.msra.mxu0 0.0
    %2085 = vmatprep.subr.mxu0 0.0
    %2086 = vmatpush1.msra.mxu0 0.0
    %2087 = vmatprep.subr.mxu0 0.0
    %2088 = vmatpush1.msra.mxu0 0.0
    %2089 = vmatprep.subr.mxu0 0.0
    %2090 = vmatpush1.msra.mxu0 0.0
    %2091 = vmatprep.subr.mxu0 0.0
    %2092 = vmatpush1.msra.mxu0 0.0
    %2093 = vmatprep.subr.mxu0 0.0
    %2094 = vmatpush1.msra.mxu0 0.0
    %2095 = vmatprep.subr.mxu0 0.0
    %2096 = vmatpush1.msra.mxu0 0.0
    %2097 = vmatprep.subr.mxu0 0.0
    %2098 = vmatpush1.msra.mxu0 0.0
    %2099 = vmatprep.subr.mxu0 0.0
    %2100 = vmatpush1.msra.mxu0 0.0
    %2101 = vmatprep.subr.mxu0 0.0
    %2102 = vmatpush1.msra.mxu0 0.0
    %2103 = vmatprep.subr.mxu0 0.0
    %2104 = vmatpush1.msra.mxu0 0.0
    %2105 = vmatprep.subr.mxu0 0.0
    %2106 = vmatpush1.msra.mxu0 0.0
    %2107 = vmatprep.subr.mxu0 0.0
    %2108 = vmatpush1.msra.mxu0 0.0
    %2109 = vmatprep.subr.mxu0 0.0
    %2110 = vmatpush1.msra.mxu0 0.0
    %2111 = vmatprep.subr.mxu0 0.0
    %2112 = vmatpush1.msra.mxu0 0.0
    %2113 = vmatprep.subr.mxu0 0.0
    %2114 = vmatpush1.msra.mxu0 0.0
    %2115 = vmatprep.mubr.f32.mxu0 0.0
    %2116 = vmatmul.mubr.f32.gmra.mrb[0].mxu0 %v2046
    %v2117 = vpop.f32.mrb[0].mxu0
    %v2118 = vadd.f32 0.0, %v2117
    %v2119 = vpop.f32.mrb[0].mxu0
    %2120 = vmatprep.mubr.f32.mxu0 0.0
    %2121 = vmatmul.mubr.f32.gmra.mrb[0].mxu0 %v2049
    %v2122 = vpop.f32.mrb[0].mxu0
    %v2123 = vadd.f32 0.0, %v2122
    %v2124 = vpop.f32.mrb[0].mxu0
    %2125 = vdwg.mxu0
    %2126 = vmatprep.subr.mxu0 0.0
    %2127 = vmatpush1.msra.mxu0 %v2033
    %2128 = vmatprep.subr.mxu0 0.0
    %2129 = vmatpush1.msra.mxu0 %v2034
    %2130 = vmatprep.subr.mxu0 0.0
    %2131 = vmatpush1.msra.mxu0 %v2035
    %2132 = vmatprep.subr.mxu0 0.0
    %2133 = vmatpush1.msra.mxu0 %v2036
    %2134 = vmatprep.subr.mxu0 0.0
    %2135 = vmatpush1.msra.mxu0 0.0
    %2136 = vmatprep.subr.mxu0 0.0
    %2137 = vmatpush1.msra.mxu0 0.0
    %2138 = vmatprep.subr.mxu0 0.0
    %2139 = vmatpush1.msra.mxu0 0.0
    %2140 = vmatprep.subr.mxu0 0.0
    %2141 = vmatpush1.msra.mxu0 0.0
    %2142 = vmatprep.subr.mxu0 0.0
    %2143 = vmatpush1.msra.mxu0 0.0
    %2144 = vmatprep.subr.mxu0 0.0
    %2145 = vmatpush1.msra.mxu0 0.0
    %2146 = vmatprep.subr.mxu0 0.0
    %2147 = vmatpush1.msra.mxu0 0.0
    %2148 = vmatprep.subr.mxu0 0.0
    %2149 = vmatpush1.msra.mxu0 0.0
    %2150 = vmatprep.subr.mxu0 0.0
    %2151 = vmatpush1.msra.mxu0 0.0
    %2152 = vmatprep.subr.mxu0 0.0
    %2153 = vmatpush1.msra.mxu0 0.0
    %2154 = vmatprep.subr.mxu0 0.0
    %2155 = vmatpush1.msra.mxu0 0.0
    %2156 = vmatprep.subr.mxu0 0.0
    %2157 = vmatpush1.msra.mxu0 0.0
    %2158 = vmatprep.subr.mxu0 0.0
    %2159 = vmatpush1.msra.mxu0 0.0
    %2160 = vmatprep.subr.mxu0 0.0
    %2161 = vmatpush1.msra.mxu0 0.0
    %2162 = vmatprep.subr.mxu0 0.0
    %2163 = vmatpush1.msra.mxu0 0.0
    %2164 = vmatprep.subr.mxu0 0.0
    %2165 = vmatpush1.msra.mxu0 0.0
    %2166 = vmatprep.subr.mxu0 0.0
    %2167 = vmatpush1.msra.mxu0 0.0
    %2168 = vmatprep.subr.mxu0 0.0
    %2169 = vmatpush1.msra.mxu0 0.0
    %2170 = vmatprep.subr.mxu0 0.0
    %2171 = vmatpush1.msra.mxu0 0.0
    %2172 = vmatprep.subr.mxu0 0.0
    %2173 = vmatpush1.msra.mxu0 0.0
    %2174 = vmatprep.subr.mxu0 0.0
    %2175 = vmatpush1.msra.mxu0 0.0
    %2176 = vmatprep.subr.mxu0 0.0
    %2177 = vmatpush1.msra.mxu0 0.0
    %2178 = vmatprep.subr.mxu0 0.0
    %2179 = vmatpush1.msra.mxu0 0.0
    %2180 = vmatprep.subr.mxu0 0.0
    %2181 = vmatpush1.msra.mxu0 0.0
    %2182 = vmatprep.subr.mxu0 0.0
    %2183 = vmatpush1.msra.mxu0 0.0
    %2184 = vmatprep.subr.mxu0 0.0
    %2185 = vmatpush1.msra.mxu0 0.0
    %2186 = vmatprep.subr.mxu0 0.0
    %2187 = vmatpush1.msra.mxu0 0.0
    %2188 = vmatprep.subr.mxu0 0.0
    %2189 = vmatpush1.msra.mxu0 0.0
    %2190 = vmatprep.mubr.f32.mxu0 0.0
    %2191 = vmatmul.mubr.f32.gmra.mrb[0].mxu0 %v2046
    %v2192 = vpop.f32.mrb[0].mxu0
    %v2193 = vadd.f32 0.0, %v2192
    %v2194 = vpop.f32.mrb[0].mxu0
    %2195 = vmatprep.mubr.f32.mxu0 0.0
    %2196 = vmatmul.mubr.f32.gmra.mrb[0].mxu0 %v2049
    %v2197 = vpop.f32.mrb[0].mxu0
    %v2198 = vadd.f32 0.0, %v2197
    %v2199 = vpop.f32.mrb[0].mxu0
    %2200 = vdwg.mxu0
    %2201 = vmatprep.subr.mxu0 0.0
    %2202 = vmatpush1.msra.mxu0 %v2037
    %2203 = vmatprep.subr.mxu0 0.0
    %2204 = vmatpush1.msra.mxu0 %v2038
    %2205 = vmatprep.subr.mxu0 0.0
    %2206 = vmatpush1.msra.mxu0 %v2039
    %2207 = vmatprep.subr.mxu0 0.0
    %2208 = vmatpush1.msra.mxu0 %v2040
    %2209 = vmatprep.subr.mxu0 0.0
    %2210 = vmatpush1.msra.mxu0 0.0
    %2211 = vmatprep.subr.mxu0 0.0
    %2212 = vmatpush1.msra.mxu0 0.0
    %2213 = vmatprep.subr.mxu0 0.0
    %2214 = vmatpush1.msra.mxu0 0.0
    %2215 = vmatprep.subr.mxu0 0.0
    %2216 = vmatpush1.msra.mxu0 0.0
    %2217 = vmatprep.subr.mxu0 0.0
    %2218 = vmatpush1.msra.mxu0 0.0
    %2219 = vmatprep.subr.mxu0 0.0
    %2220 = vmatpush1.msra.mxu0 0.0
    %2221 = vmatprep.subr.mxu0 0.0
    %2222 = vmatpush1.msra.mxu0 0.0
    %2223 = vmatprep.subr.mxu0 0.0
    %2224 = vmatpush1.msra.mxu0 0.0
    %2225 = vmatprep.subr.mxu0 0.0
    %2226 = vmatpush1.msra.mxu0 0.0
    %2227 = vmatprep.subr.mxu0 0.0
    %2228 = vmatpush1.msra.mxu0 0.0
    %2229 = vmatprep.subr.mxu0 0.0
    %2230 = vmatpush1.msra.mxu0 0.0
    %2231 = vmatprep.subr.mxu0 0.0
    %2232 = vmatpush1.msra.mxu0 0.0
    %2233 = vmatprep.subr.mxu0 0.0
    %2234 = vmatpush1.msra.mxu0 0.0
    %2235 = vmatprep.subr.mxu0 0.0
    %2236 = vmatpush1.msra.mxu0 0.0
    %2237 = vmatprep.subr.mxu0 0.0
    %2238 = vmatpush1.msra.mxu0 0.0
    %2239 = vmatprep.subr.mxu0 0.0
    %2240 = vmatpush1.msra.mxu0 0.0
    %2241 = vmatprep.subr.mxu0 0.0
    %2242 = vmatpush1.msra.mxu0 0.0
    %2243 = vmatprep.subr.mxu0 0.0
    %2244 = vmatpush1.msra.mxu0 0.0
    %2245 = vmatprep.subr.mxu0 0.0
    %2246 = vmatpush1.msra.mxu0 0.0
    %2247 = vmatprep.subr.mxu0 0.0
    %2248 = vmatpush1.msra.mxu0 0.0
    %2249 = vmatprep.subr.mxu0 0.0
    %2250 = vmatpush1.msra.mxu0 0.0
    %2251 = vmatprep.subr.mxu0 0.0
    %2252 = vmatpush1.msra.mxu0 0.0
    %2253 = vmatprep.subr.mxu0 0.0
    %2254 = vmatpush1.msra.mxu0 0.0
    %2255 = vmatprep.subr.mxu0 0.0
    %2256 = vmatpush1.msra.mxu0 0.0
    %2257 = vmatprep.subr.mxu0 0.0
    %2258 = vmatpush1.msra.mxu0 0.0
    %2259 = vmatprep.subr.mxu0 0.0
    %2260 = vmatpush1.msra.mxu0 0.0
    %2261 = vmatprep.subr.mxu0 0.0
    %2262 = vmatpush1.msra.mxu0 0.0
    %2263 = vmatprep.subr.mxu0 0.0
    %2264 = vmatpush1.msra.mxu0 0.0
    %2265 = vmatprep.mubr.f32.mxu0 0.0
    %2266 = vmatmul.mubr.f32.gmra.mrb[0].mxu0 %v2046
    %v2267 = vpop.f32.mrb[0].mxu0
    %v2268 = vadd.f32 0.0, %v2267
    %v2269 = vpop.f32.mrb[0].mxu0
    %2270 = vmatprep.mubr.f32.mxu0 0.0
    %2271 = vmatmul.mubr.f32.gmra.mrb[0].mxu0 %v2049
    %v2272 = vpop.f32.mrb[0].mxu0
    %v2273 = vadd.f32 0.0, %v2272
    %v2274 = vpop.f32.mrb[0].mxu0
    %2275 = vdwg.mxu0
    %2276 = vmatprep.subr.mxu0 0.0
    %2277 = vmatpush1.msra.mxu0 %v2041
    %2278 = vmatprep.subr.mxu0 0.0
    %2279 = vmatpush1.msra.mxu0 %v2042
    %2280 = vmatprep.subr.mxu0 0.0
    %2281 = vmatpush1.msra.mxu0 %v2043
    %2282 = vmatprep.subr.mxu0 0.0
    %2283 = vmatpush1.msra.mxu0 %v2044
    %2284 = vmatprep.subr.mxu0 0.0
    %2285 = vmatpush1.msra.mxu0 0.0
    %2286 = vmatprep.subr.mxu0 0.0
    %2287 = vmatpush1.msra.mxu0 0.0
    %2288 = vmatprep.subr.mxu0 0.0
    %2289 = vmatpush1.msra.mxu0 0.0
    %2290 = vmatprep.subr.mxu0 0.0
    %2291 = vmatpush1.msra.mxu0 0.0
    %2292 = vmatprep.subr.mxu0 0.0
    %2293 = vmatpush1.msra.mxu0 0.0
    %2294 = vmatprep.subr.mxu0 0.0
    %2295 = vmatpush1.msra.mxu0 0.0
    %2296 = vmatprep.subr.mxu0 0.0
    %2297 = vmatpush1.msra.mxu0 0.0
    %2298 = vmatprep.subr.mxu0 0.0
    %2299 = vmatpush1.msra.mxu0 0.0
    %2300 = vmatprep.subr.mxu0 0.0
    %2301 = vmatpush1.msra.mxu0 0.0
    %2302 = vmatprep.subr.mxu0 0.0
    %2303 = vmatpush1.msra.mxu0 0.0
    %2304 = vmatprep.subr.mxu0 0.0
    %2305 = vmatpush1.msra.mxu0 0.0
    %2306 = vmatprep.subr.mxu0 0.0
    %2307 = vmatpush1.msra.mxu0 0.0
    %2308 = vmatprep.subr.mxu0 0.0
    %2309 = vmatpush1.msra.mxu0 0.0
    %2310 = vmatprep.subr.mxu0 0.0
    %2311 = vmatpush1.msra.mxu0 0.0
    %2312 = vmatprep.subr.mxu0 0.0
    %2313 = vmatpush1.msra.mxu0 0.0
    %2314 = vmatprep.subr.mxu0 0.0
    %2315 = vmatpush1.msra.mxu0 0.0
    %2316 = vmatprep.subr.mxu0 0.0
    %2317 = vmatpush1.msra.mxu0 0.0
    %2318 = vmatprep.subr.mxu0 0.0
    %2319 = vmatpush1.msra.mxu0 0.0
    %2320 = vmatprep.subr.mxu0 0.0
    %2321 = vmatpush1.msra.mxu0 0.0
    %2322 = vmatprep.subr.mxu0 0.0
    %2323 = vmatpush1.msra.mxu0 0.0
    %2324 = vmatprep.subr.mxu0 0.0
    %2325 = vmatpush1.msra.mxu0 0.0
    %2326 = vmatprep.subr.mxu0 0.0
    %2327 = vmatpush1.msra.mxu0 0.0
    %2328 = vmatprep.subr.mxu0 0.0
    %2329 = vmatpush1.msra.mxu0 0.0
    %2330 = vmatprep.subr.mxu0 0.0
    %2331 = vmatpush1.msra.mxu0 0.0
    %2332 = vmatprep.subr.mxu0 0.0
    %2333 = vmatpush1.msra.mxu0 0.0
    %2334 = vmatprep.subr.mxu0 0.0
    %2335 = vmatpush1.msra.mxu0 0.0
    %2336 = vmatprep.subr.mxu0 0.0
    %2337 = vmatpush1.msra.mxu0 0.0
    %2338 = vmatprep.subr.mxu0 0.0
    %2339 = vmatpush1.msra.mxu0 0.0
    %2340 = vmatprep.mubr.f32.mxu0 0.0
    %2341 = vmatmul.mubr.f32.gmra.mrb[0].mxu0 %v2046
    %v2342 = vpop.f32.mrb[0].mxu0
    %v2343 = vadd.f32 0.0, %v2342
    %v2344 = vpop.f32.mrb[0].mxu0
    %2345 = vmatprep.mubr.f32.mxu0 0.0
    %2346 = vmatmul.mubr.f32.gmra.mrb[0].mxu0 %v2049
    %v2347 = vpop.f32.mrb[0].mxu0
    %v2348 = vadd.f32 0.0, %v2347
    %v2349 = vpop.f32.mrb[0].mxu0
    %2350 = vdwg.mxu0
    %2353 = vrot.lane.b32.xlu0 %v2118, 120
    %v2354 = vpop.permute.xlu0 %2353
    %2355 = vrot.lane.b32.xlu0 %v2123, 120
    %v2356 = vpop.permute.xlu0 %2355
    %v2357 = vsel %vm587, %v2118, 0
    %v2359 = vsel %vm587, %v2123, 0
    %v2361 = vsel %vm587, %v2354, 0
    %v2363 = vsel %vm587, %v2356, 0
    %2365 = vmatprep.subr.mxu0 0.0
    %2366 = vmatpush1.xpose.msra.mxu0 %v2361
    %2367 = vmatprep.subr.mxu0 0.0
    %2368 = vmatpush1.xpose.msra.mxu0 %v2363
    %2369 = vmatprep.subr.mxu0 0.0
    %2370 = vmatpush1.xpose.msra.mxu0 0.0
    %2371 = vmatprep.subr.mxu0 0.0
    %2372 = vmatpush1.xpose.msra.mxu0 0.0
    %2373 = vmatprep.subr.mxu0 0.0
    %2374 = vmatpush1.xpose.msra.mxu0 0.0
    %2375 = vmatprep.subr.mxu0 0.0
    %2376 = vmatpush1.xpose.msra.mxu0 0.0
    %2377 = vmatprep.subr.mxu0 0.0
    %2378 = vmatpush1.xpose.msra.mxu0 0.0
    %2379 = vmatprep.subr.mxu0 0.0
    %2380 = vmatpush1.xpose.msra.mxu0 0.0
    %2381 = vmatprep.subr.mxu0 0.0
    %2382 = vmatpush1.xpose.msra.mxu0 0.0
    %2383 = vmatprep.subr.mxu0 0.0
    %2384 = vmatpush1.xpose.msra.mxu0 0.0
    %2385 = vmatprep.subr.mxu0 0.0
    %2386 = vmatpush1.xpose.msra.mxu0 0.0
    %2387 = vmatprep.subr.mxu0 0.0
    %2388 = vmatpush1.xpose.msra.mxu0 0.0
    %2389 = vmatprep.subr.mxu0 0.0
    %2390 = vmatpush1.xpose.msra.mxu0 0.0
    %2391 = vmatprep.subr.mxu0 0.0
    %2392 = vmatpush1.xpose.msra.mxu0 0.0
    %2393 = vmatprep.subr.mxu0 0.0
    %2394 = vmatpush1.xpose.msra.mxu0 0.0
    %2395 = vmatprep.subr.mxu0 0.0
    %2396 = vmatpush1.xpose.msra.mxu0 0.0
    %2397 = vmatprep.subr.mxu0 0.0
    %2398 = vmatpush1.xpose.msra.mxu0 0.0
    %2399 = vmatprep.subr.mxu0 0.0
    %2400 = vmatpush1.xpose.msra.mxu0 0.0
    %2401 = vmatprep.subr.mxu0 0.0
    %2402 = vmatpush1.xpose.msra.mxu0 0.0
    %2403 = vmatprep.subr.mxu0 0.0
    %2404 = vmatpush1.xpose.msra.mxu0 0.0
    %2405 = vmatprep.subr.mxu0 0.0
    %2406 = vmatpush1.xpose.msra.mxu0 0.0
    %2407 = vmatprep.subr.mxu0 0.0
    %2408 = vmatpush1.xpose.msra.mxu0 0.0
    %2409 = vmatprep.subr.mxu0 0.0
    %2410 = vmatpush1.xpose.msra.mxu0 0.0
    %2411 = vmatprep.subr.mxu0 0.0
    %2412 = vmatpush1.xpose.msra.mxu0 0.0
    %2413 = vmatprep.subr.mxu0 0.0
    %2414 = vmatpush1.xpose.msra.mxu0 0.0
    %2415 = vmatprep.subr.mxu0 0.0
    %2416 = vmatpush1.xpose.msra.mxu0 0.0
    %2417 = vmatprep.subr.mxu0 0.0
    %2418 = vmatpush1.xpose.msra.mxu0 0.0
    %2419 = vmatprep.subr.mxu0 0.0
    %2420 = vmatpush1.xpose.msra.mxu0 0.0
    %2421 = vmatprep.subr.mxu0 0.0
    %2422 = vmatpush1.xpose.msra.mxu0 0.0
    %2423 = vmatprep.subr.mxu0 0.0
    %2424 = vmatpush1.xpose.msra.mxu0 0.0
    %2425 = vmatprep.subr.mxu0 0.0
    %2426 = vmatpush1.xpose.msra.mxu0 0.0
    %2427 = vmatprep.subr.mxu0 0.0
    %2428 = vmatpush1.xpose.msra.mxu0 0.0
    %2429 = vmatprep.mubr.f32.mxu0 0.0
    %2430 = vmatmul.mubr.f32.gmra.mrb[0].mxu0 %v2357
    %v2431 = vpop.f32.mrb[0].mxu0
    %v2432 = vadd.f32 %v205, %v2431
    %v2433 = vpop.f32.mrb[0].mxu0
    %2434 = vmatprep.mubr.f32.mxu0 0.0
    %2435 = vmatmul.mubr.f32.gmra.mrb[0].mxu0 %v2359
    %v2436 = vpop.f32.mrb[0].mxu0
    %v2437 = vadd.f32 %v206, %v2436
    %v2438 = vpop.f32.mrb[0].mxu0
    %2439 = vdwg.mxu0
    %2442 = vrot.lane.b32.xlu0 %v2193, 120
    %v2443 = vpop.permute.xlu0 %2442
    %2444 = vrot.lane.b32.xlu0 %v2198, 120
    %v2445 = vpop.permute.xlu0 %2444
    %v2446 = vsel %vm587, %v2193, 0
    %v2448 = vsel %vm587, %v2198, 0
    %v2450 = vsel %vm587, %v2443, 0
    %v2452 = vsel %vm587, %v2445, 0
    %2454 = vmatprep.subr.mxu0 0.0
    %2455 = vmatpush1.xpose.msra.mxu0 %v2450
    %2456 = vmatprep.subr.mxu0 0.0
    %2457 = vmatpush1.xpose.msra.mxu0 %v2452
    %2458 = vmatprep.subr.mxu0 0.0
    %2459 = vmatpush1.xpose.msra.mxu0 0.0
    %2460 = vmatprep.subr.mxu0 0.0
    %2461 = vmatpush1.xpose.msra.mxu0 0.0
    %2462 = vmatprep.subr.mxu0 0.0
    %2463 = vmatpush1.xpose.msra.mxu0 0.0
    %2464 = vmatprep.subr.mxu0 0.0
    %2465 = vmatpush1.xpose.msra.mxu0 0.0
    %2466 = vmatprep.subr.mxu0 0.0
    %2467 = vmatpush1.xpose.msra.mxu0 0.0
    %2468 = vmatprep.subr.mxu0 0.0
    %2469 = vmatpush1.xpose.msra.mxu0 0.0
    %2470 = vmatprep.subr.mxu0 0.0
    %2471 = vmatpush1.xpose.msra.mxu0 0.0
    %2472 = vmatprep.subr.mxu0 0.0
    %2473 = vmatpush1.xpose.msra.mxu0 0.0
    %2474 = vmatprep.subr.mxu0 0.0
    %2475 = vmatpush1.xpose.msra.mxu0 0.0
    %2476 = vmatprep.subr.mxu0 0.0
    %2477 = vmatpush1.xpose.msra.mxu0 0.0
    %2478 = vmatprep.subr.mxu0 0.0
    %2479 = vmatpush1.xpose.msra.mxu0 0.0
    %2480 = vmatprep.subr.mxu0 0.0
    %2481 = vmatpush1.xpose.msra.mxu0 0.0
    %2482 = vmatprep.subr.mxu0 0.0
    %2483 = vmatpush1.xpose.msra.mxu0 0.0
    %2484 = vmatprep.subr.mxu0 0.0
    %2485 = vmatpush1.xpose.msra.mxu0 0.0
    %2486 = vmatprep.subr.mxu0 0.0
    %2487 = vmatpush1.xpose.msra.mxu0 0.0
    %2488 = vmatprep.subr.mxu0 0.0
    %2489 = vmatpush1.xpose.msra.mxu0 0.0
    %2490 = vmatprep.subr.mxu0 0.0
    %2491 = vmatpush1.xpose.msra.mxu0 0.0
    %2492 = vmatprep.subr.mxu0 0.0
    %2493 = vmatpush1.xpose.msra.mxu0 0.0
    %2494 = vmatprep.subr.mxu0 0.0
    %2495 = vmatpush1.xpose.msra.mxu0 0.0
    %2496 = vmatprep.subr.mxu0 0.0
    %2497 = vmatpush1.xpose.msra.mxu0 0.0
    %2498 = vmatprep.subr.mxu0 0.0
    %2499 = vmatpush1.xpose.msra.mxu0 0.0
    %2500 = vmatprep.subr.mxu0 0.0
    %2501 = vmatpush1.xpose.msra.mxu0 0.0
    %2502 = vmatprep.subr.mxu0 0.0
    %2503 = vmatpush1.xpose.msra.mxu0 0.0
    %2504 = vmatprep.subr.mxu0 0.0
    %2505 = vmatpush1.xpose.msra.mxu0 0.0
    %2506 = vmatprep.subr.mxu0 0.0
    %2507 = vmatpush1.xpose.msra.mxu0 0.0
    %2508 = vmatprep.subr.mxu0 0.0
    %2509 = vmatpush1.xpose.msra.mxu0 0.0
    %2510 = vmatprep.subr.mxu0 0.0
    %2511 = vmatpush1.xpose.msra.mxu0 0.0
    %2512 = vmatprep.subr.mxu0 0.0
    %2513 = vmatpush1.xpose.msra.mxu0 0.0
    %2514 = vmatprep.subr.mxu0 0.0
    %2515 = vmatpush1.xpose.msra.mxu0 0.0
    %2516 = vmatprep.subr.mxu0 0.0
    %2517 = vmatpush1.xpose.msra.mxu0 0.0
    %2518 = vmatprep.mubr.f32.mxu0 0.0
    %2519 = vmatmul.mubr.f32.gmra.mrb[0].mxu0 %v2446
    %v2520 = vpop.f32.mrb[0].mxu0
    %v2521 = vadd.f32 %v207, %v2520
    %v2522 = vpop.f32.mrb[0].mxu0
    %2523 = vmatprep.mubr.f32.mxu0 0.0
    %2524 = vmatmul.mubr.f32.gmra.mrb[0].mxu0 %v2448
    %v2525 = vpop.f32.mrb[0].mxu0
    %v2526 = vadd.f32 %v208, %v2525
    %v2527 = vpop.f32.mrb[0].mxu0
    %2528 = vdwg.mxu0
    %2531 = vrot.lane.b32.xlu0 %v2268, 120
    %v2532 = vpop.permute.xlu0 %2531
    %2533 = vrot.lane.b32.xlu0 %v2273, 120
    %v2534 = vpop.permute.xlu0 %2533
    %v2535 = vsel %vm587, %v2268, 0
    %v2537 = vsel %vm587, %v2273, 0
    %v2539 = vsel %vm587, %v2532, 0
    %v2541 = vsel %vm587, %v2534, 0
    %2543 = vmatprep.subr.mxu0 0.0
    %2544 = vmatpush1.xpose.msra.mxu0 %v2539
    %2545 = vmatprep.subr.mxu0 0.0
    %2546 = vmatpush1.xpose.msra.mxu0 %v2541
    %2547 = vmatprep.subr.mxu0 0.0
    %2548 = vmatpush1.xpose.msra.mxu0 0.0
    %2549 = vmatprep.subr.mxu0 0.0
    %2550 = vmatpush1.xpose.msra.mxu0 0.0
    %2551 = vmatprep.subr.mxu0 0.0
    %2552 = vmatpush1.xpose.msra.mxu0 0.0
    %2553 = vmatprep.subr.mxu0 0.0
    %2554 = vmatpush1.xpose.msra.mxu0 0.0
    %2555 = vmatprep.subr.mxu0 0.0
    %2556 = vmatpush1.xpose.msra.mxu0 0.0
    %2557 = vmatprep.subr.mxu0 0.0
    %2558 = vmatpush1.xpose.msra.mxu0 0.0
    %2559 = vmatprep.subr.mxu0 0.0
    %2560 = vmatpush1.xpose.msra.mxu0 0.0
    %2561 = vmatprep.subr.mxu0 0.0
    %2562 = vmatpush1.xpose.msra.mxu0 0.0
    %2563 = vmatprep.subr.mxu0 0.0
    %2564 = vmatpush1.xpose.msra.mxu0 0.0
    %2565 = vmatprep.subr.mxu0 0.0
    %2566 = vmatpush1.xpose.msra.mxu0 0.0
    %2567 = vmatprep.subr.mxu0 0.0
    %2568 = vmatpush1.xpose.msra.mxu0 0.0
    %2569 = vmatprep.subr.mxu0 0.0
    %2570 = vmatpush1.xpose.msra.mxu0 0.0
    %2571 = vmatprep.subr.mxu0 0.0
    %2572 = vmatpush1.xpose.msra.mxu0 0.0
    %2573 = vmatprep.subr.mxu0 0.0
    %2574 = vmatpush1.xpose.msra.mxu0 0.0
    %2575 = vmatprep.subr.mxu0 0.0
    %2576 = vmatpush1.xpose.msra.mxu0 0.0
    %2577 = vmatprep.subr.mxu0 0.0
    %2578 = vmatpush1.xpose.msra.mxu0 0.0
    %2579 = vmatprep.subr.mxu0 0.0
    %2580 = vmatpush1.xpose.msra.mxu0 0.0
    %2581 = vmatprep.subr.mxu0 0.0
    %2582 = vmatpush1.xpose.msra.mxu0 0.0
    %2583 = vmatprep.subr.mxu0 0.0
    %2584 = vmatpush1.xpose.msra.mxu0 0.0
    %2585 = vmatprep.subr.mxu0 0.0
    %2586 = vmatpush1.xpose.msra.mxu0 0.0
    %2587 = vmatprep.subr.mxu0 0.0
    %2588 = vmatpush1.xpose.msra.mxu0 0.0
    %2589 = vmatprep.subr.mxu0 0.0
    %2590 = vmatpush1.xpose.msra.mxu0 0.0
    %2591 = vmatprep.subr.mxu0 0.0
    %2592 = vmatpush1.xpose.msra.mxu0 0.0
    %2593 = vmatprep.subr.mxu0 0.0
    %2594 = vmatpush1.xpose.msra.mxu0 0.0
    %2595 = vmatprep.subr.mxu0 0.0
    %2596 = vmatpush1.xpose.msra.mxu0 0.0
    %2597 = vmatprep.subr.mxu0 0.0
    %2598 = vmatpush1.xpose.msra.mxu0 0.0
    %2599 = vmatprep.subr.mxu0 0.0
    %2600 = vmatpush1.xpose.msra.mxu0 0.0
    %2601 = vmatprep.subr.mxu0 0.0
    %2602 = vmatpush1.xpose.msra.mxu0 0.0
    %2603 = vmatprep.subr.mxu0 0.0
    %2604 = vmatpush1.xpose.msra.mxu0 0.0
    %2605 = vmatprep.subr.mxu0 0.0
    %2606 = vmatpush1.xpose.msra.mxu0 0.0
    %2607 = vmatprep.mubr.f32.mxu0 0.0
    %2608 = vmatmul.mubr.f32.gmra.mrb[0].mxu0 %v2535
    %v2609 = vpop.f32.mrb[0].mxu0
    %v2610 = vadd.f32 %v209, %v2609
    %v2611 = vpop.f32.mrb[0].mxu0
    %2612 = vmatprep.mubr.f32.mxu0 0.0
    %2613 = vmatmul.mubr.f32.gmra.mrb[0].mxu0 %v2537
    %v2614 = vpop.f32.mrb[0].mxu0
    %v2615 = vadd.f32 %v210, %v2614
    %v2616 = vpop.f32.mrb[0].mxu0
    %2617 = vdwg.mxu0
    %2620 = vrot.lane.b32.xlu0 %v2343, 120
    %v2621 = vpop.permute.xlu0 %2620
    %2622 = vrot.lane.b32.xlu0 %v2348, 120
    %v2623 = vpop.permute.xlu0 %2622
    %v2624 = vsel %vm587, %v2343, 0
    %v2626 = vsel %vm587, %v2348, 0
    %v2628 = vsel %vm587, %v2621, 0
    %v2630 = vsel %vm587, %v2623, 0
    %2632 = vmatprep.subr.mxu0 0.0
    %2633 = vmatpush1.xpose.msra.mxu0 %v2628
    %2634 = vmatprep.subr.mxu0 0.0
    %2635 = vmatpush1.xpose.msra.mxu0 %v2630
    %2636 = vmatprep.subr.mxu0 0.0
    %2637 = vmatpush1.xpose.msra.mxu0 0.0
    %2638 = vmatprep.subr.mxu0 0.0
    %2639 = vmatpush1.xpose.msra.mxu0 0.0
    %2640 = vmatprep.subr.mxu0 0.0
    %2641 = vmatpush1.xpose.msra.mxu0 0.0
    %2642 = vmatprep.subr.mxu0 0.0
    %2643 = vmatpush1.xpose.msra.mxu0 0.0
    %2644 = vmatprep.subr.mxu0 0.0
    %2645 = vmatpush1.xpose.msra.mxu0 0.0
    %2646 = vmatprep.subr.mxu0 0.0
    %2647 = vmatpush1.xpose.msra.mxu0 0.0
    %2648 = vmatprep.subr.mxu0 0.0
    %2649 = vmatpush1.xpose.msra.mxu0 0.0
    %2650 = vmatprep.subr.mxu0 0.0
    %2651 = vmatpush1.xpose.msra.mxu0 0.0
    %2652 = vmatprep.subr.mxu0 0.0
    %2653 = vmatpush1.xpose.msra.mxu0 0.0
    %2654 = vmatprep.subr.mxu0 0.0
    %2655 = vmatpush1.xpose.msra.mxu0 0.0
    %2656 = vmatprep.subr.mxu0 0.0
    %2657 = vmatpush1.xpose.msra.mxu0 0.0
    %2658 = vmatprep.subr.mxu0 0.0
    %2659 = vmatpush1.xpose.msra.mxu0 0.0
    %2660 = vmatprep.subr.mxu0 0.0
    %2661 = vmatpush1.xpose.msra.mxu0 0.0
    %2662 = vmatprep.subr.mxu0 0.0
    %2663 = vmatpush1.xpose.msra.mxu0 0.0
    %2664 = vmatprep.subr.mxu0 0.0
    %2665 = vmatpush1.xpose.msra.mxu0 0.0
    %2666 = vmatprep.subr.mxu0 0.0
    %2667 = vmatpush1.xpose.msra.mxu0 0.0
    %2668 = vmatprep.subr.mxu0 0.0
    %2669 = vmatpush1.xpose.msra.mxu0 0.0
    %2670 = vmatprep.subr.mxu0 0.0
    %2671 = vmatpush1.xpose.msra.mxu0 0.0
    %2672 = vmatprep.subr.mxu0 0.0
    %2673 = vmatpush1.xpose.msra.mxu0 0.0
    %2674 = vmatprep.subr.mxu0 0.0
    %2675 = vmatpush1.xpose.msra.mxu0 0.0
    %2676 = vmatprep.subr.mxu0 0.0
    %2677 = vmatpush1.xpose.msra.mxu0 0.0
    %2678 = vmatprep.subr.mxu0 0.0
    %2679 = vmatpush1.xpose.msra.mxu0 0.0
    %2680 = vmatprep.subr.mxu0 0.0
    %2681 = vmatpush1.xpose.msra.mxu0 0.0
    %2682 = vmatprep.subr.mxu0 0.0
    %2683 = vmatpush1.xpose.msra.mxu0 0.0
    %2684 = vmatprep.subr.mxu0 0.0
    %2685 = vmatpush1.xpose.msra.mxu0 0.0
    %2686 = vmatprep.subr.mxu0 0.0
    %2687 = vmatpush1.xpose.msra.mxu0 0.0
    %2688 = vmatprep.subr.mxu0 0.0
    %2689 = vmatpush1.xpose.msra.mxu0 0.0
    %2690 = vmatprep.subr.mxu0 0.0
    %2691 = vmatpush1.xpose.msra.mxu0 0.0
    %2692 = vmatprep.subr.mxu0 0.0
    %2693 = vmatpush1.xpose.msra.mxu0 0.0
    %2694 = vmatprep.subr.mxu0 0.0
    %2695 = vmatpush1.xpose.msra.mxu0 0.0
    %2696 = vmatprep.mubr.f32.mxu0 0.0
    %2697 = vmatmul.mubr.f32.gmra.mrb[0].mxu0 %v2624
    %v2698 = vpop.f32.mrb[0].mxu0
    %v2699 = vadd.f32 %v211, %v2698
    %v2700 = vpop.f32.mrb[0].mxu0
    %2701 = vmatprep.mubr.f32.mxu0 0.0
    %2702 = vmatmul.mubr.f32.gmra.mrb[0].mxu0 %v2626
    %v2703 = vpop.f32.mrb[0].mxu0
    %v2704 = vadd.f32 %v212, %v2703
    %v2705 = vpop.f32.mrb[0].mxu0
    %2706 = vdwg.mxu0
    %v2707 = vsel %vm938, %v2432, -inf
    %2708 = vmax.xlane.f32.xlu0 %v2707
    %v2709 = vpop.xlane.xlu0 %2708
    %v2710 = vsel %vm938, %v2437, -inf
    %2711 = vmax.xlane.f32.xlu0 %v2710
    %v2712 = vpop.xlane.xlu0 %2711
    %v2713 = vsel %vm938, %v2521, -inf
    %2714 = vmax.xlane.f32.xlu0 %v2713
    %v2715 = vpop.xlane.xlu0 %2714
    %v2716 = vsel %vm938, %v2526, -inf
    %2717 = vmax.xlane.f32.xlu0 %v2716
    %v2718 = vpop.xlane.xlu0 %2717
    %v2719 = vsel %vm938, %v2610, -inf
    %2720 = vmax.xlane.f32.xlu0 %v2719
    %v2721 = vpop.xlane.xlu0 %2720
    %v2722 = vsel %vm938, %v2615, -inf
    %2723 = vmax.xlane.f32.xlu0 %v2722
    %v2724 = vpop.xlane.xlu0 %2723
    %v2725 = vsel %vm938, %v2699, -inf
    %2726 = vmax.xlane.f32.xlu0 %v2725
    %v2727 = vpop.xlane.xlu0 %2726
    %v2728 = vsel %vm938, %v2704, -inf
    %2729 = vmax.xlane.f32.xlu0 %v2728
    %v2730 = vpop.xlane.xlu0 %2729
    %v2731 = vsub.f32 %v2432, %v2709
    %v2732 = vsub.f32 %v2437, %v2712
    %v2733 = vsub.f32 %v2521, %v2715
    %v2734 = vsub.f32 %v2526, %v2718
    %v2735 = vsub.f32 %v2610, %v2721
    %v2736 = vsub.f32 %v2615, %v2724
    %v2737 = vsub.f32 %v2699, %v2727
    %v2738 = vsub.f32 %v2704, %v2730
    %v2739 = vmul.f32 %v2731, 1.442695
    %v2740 = vpow.pop %v2739
    %v2741 = vmul.f32 %v2732, 1.442695
    %v2742 = vpow.pop %v2741
    %v2743 = vmul.f32 %v2733, 1.442695
    %v2744 = vpow.pop %v2743
    %v2745 = vmul.f32 %v2734, 1.442695
    %v2746 = vpow.pop %v2745
    %v2747 = vmul.f32 %v2735, 1.442695
    %v2748 = vpow.pop %v2747
    %v2749 = vmul.f32 %v2736, 1.442695
    %v2750 = vpow.pop %v2749
    %v2751 = vmul.f32 %v2737, 1.442695
    %v2752 = vpow.pop %v2751
    %v2753 = vmul.f32 %v2738, 1.442695
    %v2754 = vpow.pop %v2753
    %v2755 = vsel %vm938, %v2740, 0.0
    %2756 = vadd.xlane.f32.xlu0 %v2755
    %v2757 = vpop.xlane.xlu0 %2756
    %v2758 = vsel %vm938, %v2742, 0.0
    %2759 = vadd.xlane.f32.xlu0 %v2758
    %v2760 = vpop.xlane.xlu0 %2759
    %v2761 = vsel %vm938, %v2744, 0.0
    %2762 = vadd.xlane.f32.xlu0 %v2761
    %v2763 = vpop.xlane.xlu0 %2762
    %v2764 = vsel %vm938, %v2746, 0.0
    %2765 = vadd.xlane.f32.xlu0 %v2764
    %v2766 = vpop.xlane.xlu0 %2765
    %v2767 = vsel %vm938, %v2748, 0.0
    %2768 = vadd.xlane.f32.xlu0 %v2767
    %v2769 = vpop.xlane.xlu0 %2768
    %v2770 = vsel %vm938, %v2750, 0.0
    %2771 = vadd.xlane.f32.xlu0 %v2770
    %v2772 = vpop.xlane.xlu0 %2771
    %v2773 = vsel %vm938, %v2752, 0.0
    %2774 = vadd.xlane.f32.xlu0 %v2773
    %v2775 = vpop.xlane.xlu0 %2774
    %v2776 = vsel %vm938, %v2754, 0.0
    %2777 = vadd.xlane.f32.xlu0 %v2776
    %v2778 = vpop.xlane.xlu0 %2777
    %v2779 = vrcp.pop %v2757
    %v2780 = vmul.f32 %v2740, %v2779
    %v2781 = vrcp.pop %v2760
    %v2782 = vmul.f32 %v2742, %v2781
    %v2783 = vrcp.pop %v2763
    %v2784 = vmul.f32 %v2744, %v2783
    %v2785 = vrcp.pop %v2766
    %v2786 = vmul.f32 %v2746, %v2785
    %v2787 = vrcp.pop %v2769
    %v2788 = vmul.f32 %v2748, %v2787
    %v2789 = vrcp.pop %v2772
    %v2790 = vmul.f32 %v2750, %v2789
    %v2791 = vrcp.pop %v2775
    %v2792 = vmul.f32 %v2752, %v2791
    %v2793 = vrcp.pop %v2778
    %v2794 = vmul.f32 %v2754, %v2793
    %2795 = vrot.lane.b32.xlu0 %v2118, 112
    %v2796 = vpop.permute.xlu0 %2795
    %2797 = vrot.lane.b32.xlu0 %v2123, 112
    %v2798 = vpop.permute.xlu0 %2797
    %v2802 = vsel %vm938, %v2780, 0
    %v2805 = vsel %vm938, %v2782, 0
    %2807 = vmatprep.subr.mxu0 0.0
    %2808 = vmatpush1.msra.mxu0 %v2796
    %2809 = vmatprep.subr.mxu0 0.0
    %2810 = vmatpush1.msra.mxu0 %v2798
    %2811 = vmatprep.subr.mxu0 0.0
    %2812 = vmatpush1.msra.mxu0 0.0
    %2813 = vmatprep.subr.mxu0 0.0
    %2814 = vmatpush1.msra.mxu0 0.0
    %2815 = vmatprep.subr.mxu0 0.0
    %2816 = vmatpush1.msra.mxu0 0.0
    %2817 = vmatprep.subr.mxu0 0.0
    %2818 = vmatpush1.msra.mxu0 0.0
    %2819 = vmatprep.subr.mxu0 0.0
    %2820 = vmatpush1.msra.mxu0 0.0
    %2821 = vmatprep.subr.mxu0 0.0
    %2822 = vmatpush1.msra.mxu0 0.0
    %2823 = vmatprep.subr.mxu0 0.0
    %2824 = vmatpush1.msra.mxu0 0.0
    %2825 = vmatprep.subr.mxu0 0.0
    %2826 = vmatpush1.msra.mxu0 0.0
    %2827 = vmatprep.subr.mxu0 0.0
    %2828 = vmatpush1.msra.mxu0 0.0
    %2829 = vmatprep.subr.mxu0 0.0
    %2830 = vmatpush1.msra.mxu0 0.0
    %2831 = vmatprep.subr.mxu0 0.0
    %2832 = vmatpush1.msra.mxu0 0.0
    %2833 = vmatprep.subr.mxu0 0.0
    %2834 = vmatpush1.msra.mxu0 0.0
    %2835 = vmatprep.subr.mxu0 0.0
    %2836 = vmatpush1.msra.mxu0 0.0
    %2837 = vmatprep.subr.mxu0 0.0
    %2838 = vmatpush1.msra.mxu0 0.0
    %2839 = vmatprep.subr.mxu0 0.0
    %2840 = vmatpush1.msra.mxu0 0.0
    %2841 = vmatprep.subr.mxu0 0.0
    %2842 = vmatpush1.msra.mxu0 0.0
    %2843 = vmatprep.subr.mxu0 0.0
    %2844 = vmatpush1.msra.mxu0 0.0
    %2845 = vmatprep.subr.mxu0 0.0
    %2846 = vmatpush1.msra.mxu0 0.0
    %2847 = vmatprep.subr.mxu0 0.0
    %2848 = vmatpush1.msra.mxu0 0.0
    %2849 = vmatprep.subr.mxu0 0.0
    %2850 = vmatpush1.msra.mxu0 0.0
    %2851 = vmatprep.subr.mxu0 0.0
    %2852 = vmatpush1.msra.mxu0 0.0
    %2853 = vmatprep.subr.mxu0 0.0
    %2854 = vmatpush1.msra.mxu0 0.0
    %2855 = vmatprep.subr.mxu0 0.0
    %2856 = vmatpush1.msra.mxu0 0.0
    %2857 = vmatprep.subr.mxu0 0.0
    %2858 = vmatpush1.msra.mxu0 0.0
    %2859 = vmatprep.subr.mxu0 0.0
    %2860 = vmatpush1.msra.mxu0 0.0
    %2861 = vmatprep.subr.mxu0 0.0
    %2862 = vmatpush1.msra.mxu0 0.0
    %2863 = vmatprep.subr.mxu0 0.0
    %2864 = vmatpush1.msra.mxu0 0.0
    %2865 = vmatprep.subr.mxu0 0.0
    %2866 = vmatpush1.msra.mxu0 0.0
    %2867 = vmatprep.subr.mxu0 0.0
    %2868 = vmatpush1.msra.mxu0 0.0
    %2869 = vmatprep.subr.mxu0 0.0
    %2870 = vmatpush1.msra.mxu0 0.0
    %2871 = vmatprep.mubr.f32.mxu0 0.0
    %2872 = vmatmul.mubr.f32.gmra.mrb[0].mxu0 %v2802
    %v2873 = vpop.f32.mrb[0].mxu0
    %v2874 = vadd.f32 0.0, %v2873
    %v2875 = vpop.f32.mrb[0].mxu0
    %2876 = vmatprep.mubr.f32.mxu0 0.0
    %2877 = vmatmul.mubr.f32.gmra.mrb[0].mxu0 %v2805
    %v2878 = vpop.f32.mrb[0].mxu0
    %v2879 = vadd.f32 0.0, %v2878
    %v2880 = vpop.f32.mrb[0].mxu0
    %2881 = vdwg.mxu0
    %2882 = vrot.lane.b32.xlu0 %v2193, 112
    %v2883 = vpop.permute.xlu0 %2882
    %2884 = vrot.lane.b32.xlu0 %v2198, 112
    %v2885 = vpop.permute.xlu0 %2884
    %v2889 = vsel %vm938, %v2784, 0
    %v2892 = vsel %vm938, %v2786, 0
    %2894 = vmatprep.subr.mxu0 0.0
    %2895 = vmatpush1.msra.mxu0 %v2883
    %2896 = vmatprep.subr.mxu0 0.0
    %2897 = vmatpush1.msra.mxu0 %v2885
    %2898 = vmatprep.subr.mxu0 0.0
    %2899 = vmatpush1.msra.mxu0 0.0
    %2900 = vmatprep.subr.mxu0 0.0
    %2901 = vmatpush1.msra.mxu0 0.0
    %2902 = vmatprep.subr.mxu0 0.0
    %2903 = vmatpush1.msra.mxu0 0.0
    %2904 = vmatprep.subr.mxu0 0.0
    %2905 = vmatpush1.msra.mxu0 0.0
    %2906 = vmatprep.subr.mxu0 0.0
    %2907 = vmatpush1.msra.mxu0 0.0
    %2908 = vmatprep.subr.mxu0 0.0
    %2909 = vmatpush1.msra.mxu0 0.0
    %2910 = vmatprep.subr.mxu0 0.0
    %2911 = vmatpush1.msra.mxu0 0.0
    %2912 = vmatprep.subr.mxu0 0.0
    %2913 = vmatpush1.msra.mxu0 0.0
    %2914 = vmatprep.subr.mxu0 0.0
    %2915 = vmatpush1.msra.mxu0 0.0
    %2916 = vmatprep.subr.mxu0 0.0
    %2917 = vmatpush1.msra.mxu0 0.0
    %2918 = vmatprep.subr.mxu0 0.0
    %2919 = vmatpush1.msra.mxu0 0.0
    %2920 = vmatprep.subr.mxu0 0.0
    %2921 = vmatpush1.msra.mxu0 0.0
    %2922 = vmatprep.subr.mxu0 0.0
    %2923 = vmatpush1.msra.mxu0 0.0
    %2924 = vmatprep.subr.mxu0 0.0
    %2925 = vmatpush1.msra.mxu0 0.0
    %2926 = vmatprep.subr.mxu0 0.0
    %2927 = vmatpush1.msra.mxu0 0.0
    %2928 = vmatprep.subr.mxu0 0.0
    %2929 = vmatpush1.msra.mxu0 0.0
    %2930 = vmatprep.subr.mxu0 0.0
    %2931 = vmatpush1.msra.mxu0 0.0
    %2932 = vmatprep.subr.mxu0 0.0
    %2933 = vmatpush1.msra.mxu0 0.0
    %2934 = vmatprep.subr.mxu0 0.0
    %2935 = vmatpush1.msra.mxu0 0.0
    %2936 = vmatprep.subr.mxu0 0.0
    %2937 = vmatpush1.msra.mxu0 0.0
    %2938 = vmatprep.subr.mxu0 0.0
    %2939 = vmatpush1.msra.mxu0 0.0
    %2940 = vmatprep.subr.mxu0 0.0
    %2941 = vmatpush1.msra.mxu0 0.0
    %2942 = vmatprep.subr.mxu0 0.0
    %2943 = vmatpush1.msra.mxu0 0.0
    %2944 = vmatprep.subr.mxu0 0.0
    %2945 = vmatpush1.msra.mxu0 0.0
    %2946 = vmatprep.subr.mxu0 0.0
    %2947 = vmatpush1.msra.mxu0 0.0
    %2948 = vmatprep.subr.mxu0 0.0
    %2949 = vmatpush1.msra.mxu0 0.0
    %2950 = vmatprep.subr.mxu0 0.0
    %2951 = vmatpush1.msra.mxu0 0.0
    %2952 = vmatprep.subr.mxu0 0.0
    %2953 = vmatpush1.msra.mxu0 0.0
    %2954 = vmatprep.subr.mxu0 0.0
    %2955 = vmatpush1.msra.mxu0 0.0
    %2956 = vmatprep.subr.mxu0 0.0
    %2957 = vmatpush1.msra.mxu0 0.0
    %2958 = vmatprep.mubr.f32.mxu0 0.0
    %2959 = vmatmul.mubr.f32.gmra.mrb[0].mxu0 %v2889
    %v2960 = vpop.f32.mrb[0].mxu0
    %v2961 = vadd.f32 0.0, %v2960
    %v2962 = vpop.f32.mrb[0].mxu0
    %2963 = vmatprep.mubr.f32.mxu0 0.0
    %2964 = vmatmul.mubr.f32.gmra.mrb[0].mxu0 %v2892
    %v2965 = vpop.f32.mrb[0].mxu0
    %v2966 = vadd.f32 0.0, %v2965
    %v2967 = vpop.f32.mrb[0].mxu0
    %2968 = vdwg.mxu0
    %2969 = vrot.lane.b32.xlu0 %v2268, 112
    %v2970 = vpop.permute.xlu0 %2969
    %2971 = vrot.lane.b32.xlu0 %v2273, 112
    %v2972 = vpop.permute.xlu0 %2971
    %v2976 = vsel %vm938, %v2788, 0
    %v2979 = vsel %vm938, %v2790, 0
    %2981 = vmatprep.subr.mxu0 0.0
    %2982 = vmatpush1.msra.mxu0 %v2970
    %2983 = vmatprep.subr.mxu0 0.0
    %2984 = vmatpush1.msra.mxu0 %v2972
    %2985 = vmatprep.subr.mxu0 0.0
    %2986 = vmatpush1.msra.mxu0 0.0
    %2987 = vmatprep.subr.mxu0 0.0
    %2988 = vmatpush1.msra.mxu0 0.0
    %2989 = vmatprep.subr.mxu0 0.0
    %2990 = vmatpush1.msra.mxu0 0.0
    %2991 = vmatprep.subr.mxu0 0.0
    %2992 = vmatpush1.msra.mxu0 0.0
    %2993 = vmatprep.subr.mxu0 0.0
    %2994 = vmatpush1.msra.mxu0 0.0
    %2995 = vmatprep.subr.mxu0 0.0
    %2996 = vmatpush1.msra.mxu0 0.0
    %2997 = vmatprep.subr.mxu0 0.0
    %2998 = vmatpush1.msra.mxu0 0.0
    %2999 = vmatprep.subr.mxu0 0.0
    %3000 = vmatpush1.msra.mxu0 0.0
    %3001 = vmatprep.subr.mxu0 0.0
    %3002 = vmatpush1.msra.mxu0 0.0
    %3003 = vmatprep.subr.mxu0 0.0
    %3004 = vmatpush1.msra.mxu0 0.0
    %3005 = vmatprep.subr.mxu0 0.0
    %3006 = vmatpush1.msra.mxu0 0.0
    %3007 = vmatprep.subr.mxu0 0.0
    %3008 = vmatpush1.msra.mxu0 0.0
    %3009 = vmatprep.subr.mxu0 0.0
    %3010 = vmatpush1.msra.mxu0 0.0
    %3011 = vmatprep.subr.mxu0 0.0
    %3012 = vmatpush1.msra.mxu0 0.0
    %3013 = vmatprep.subr.mxu0 0.0
    %3014 = vmatpush1.msra.mxu0 0.0
    %3015 = vmatprep.subr.mxu0 0.0
    %3016 = vmatpush1.msra.mxu0 0.0
    %3017 = vmatprep.subr.mxu0 0.0
    %3018 = vmatpush1.msra.mxu0 0.0
    %3019 = vmatprep.subr.mxu0 0.0
    %3020 = vmatpush1.msra.mxu0 0.0
    %3021 = vmatprep.subr.mxu0 0.0
    %3022 = vmatpush1.msra.mxu0 0.0
    %3023 = vmatprep.subr.mxu0 0.0
    %3024 = vmatpush1.msra.mxu0 0.0
    %3025 = vmatprep.subr.mxu0 0.0
    %3026 = vmatpush1.msra.mxu0 0.0
    %3027 = vmatprep.subr.mxu0 0.0
    %3028 = vmatpush1.msra.mxu0 0.0
    %3029 = vmatprep.subr.mxu0 0.0
    %3030 = vmatpush1.msra.mxu0 0.0
    %3031 = vmatprep.subr.mxu0 0.0
    %3032 = vmatpush1.msra.mxu0 0.0
    %3033 = vmatprep.subr.mxu0 0.0
    %3034 = vmatpush1.msra.mxu0 0.0
    %3035 = vmatprep.subr.mxu0 0.0
    %3036 = vmatpush1.msra.mxu0 0.0
    %3037 = vmatprep.subr.mxu0 0.0
    %3038 = vmatpush1.msra.mxu0 0.0
    %3039 = vmatprep.subr.mxu0 0.0
    %3040 = vmatpush1.msra.mxu0 0.0
    %3041 = vmatprep.subr.mxu0 0.0
    %3042 = vmatpush1.msra.mxu0 0.0
    %3043 = vmatprep.subr.mxu0 0.0
    %3044 = vmatpush1.msra.mxu0 0.0
    %3045 = vmatprep.mubr.f32.mxu0 0.0
    %3046 = vmatmul.mubr.f32.gmra.mrb[0].mxu0 %v2976
    %v3047 = vpop.f32.mrb[0].mxu0
    %v3048 = vadd.f32 0.0, %v3047
    %v3049 = vpop.f32.mrb[0].mxu0
    %3050 = vmatprep.mubr.f32.mxu0 0.0
    %3051 = vmatmul.mubr.f32.gmra.mrb[0].mxu0 %v2979
    %v3052 = vpop.f32.mrb[0].mxu0
    %v3053 = vadd.f32 0.0, %v3052
    %v3054 = vpop.f32.mrb[0].mxu0
    %3055 = vdwg.mxu0
    %3056 = vrot.lane.b32.xlu0 %v2343, 112
    %v3057 = vpop.permute.xlu0 %3056
    %3058 = vrot.lane.b32.xlu0 %v2348, 112
    %v3059 = vpop.permute.xlu0 %3058
    %v3063 = vsel %vm938, %v2792, 0
    %v3066 = vsel %vm938, %v2794, 0
    %3068 = vmatprep.subr.mxu0 0.0
    %3069 = vmatpush1.msra.mxu0 %v3057
    %3070 = vmatprep.subr.mxu0 0.0
    %3071 = vmatpush1.msra.mxu0 %v3059
    %3072 = vmatprep.subr.mxu0 0.0
    %3073 = vmatpush1.msra.mxu0 0.0
    %3074 = vmatprep.subr.mxu0 0.0
    %3075 = vmatpush1.msra.mxu0 0.0
    %3076 = vmatprep.subr.mxu0 0.0
    %3077 = vmatpush1.msra.mxu0 0.0
    %3078 = vmatprep.subr.mxu0 0.0
    %3079 = vmatpush1.msra.mxu0 0.0
    %3080 = vmatprep.subr.mxu0 0.0
    %3081 = vmatpush1.msra.mxu0 0.0
    %3082 = vmatprep.subr.mxu0 0.0
    %3083 = vmatpush1.msra.mxu0 0.0
    %3084 = vmatprep.subr.mxu0 0.0
    %3085 = vmatpush1.msra.mxu0 0.0
    %3086 = vmatprep.subr.mxu0 0.0
    %3087 = vmatpush1.msra.mxu0 0.0
    %3088 = vmatprep.subr.mxu0 0.0
    %3089 = vmatpush1.msra.mxu0 0.0
    %3090 = vmatprep.subr.mxu0 0.0
    %3091 = vmatpush1.msra.mxu0 0.0
    %3092 = vmatprep.subr.mxu0 0.0
    %3093 = vmatpush1.msra.mxu0 0.0
    %3094 = vmatprep.subr.mxu0 0.0
    %3095 = vmatpush1.msra.mxu0 0.0
    %3096 = vmatprep.subr.mxu0 0.0
    %3097 = vmatpush1.msra.mxu0 0.0
    %3098 = vmatprep.subr.mxu0 0.0
    %3099 = vmatpush1.msra.mxu0 0.0
    %3100 = vmatprep.subr.mxu0 0.0
    %3101 = vmatpush1.msra.mxu0 0.0
    %3102 = vmatprep.subr.mxu0 0.0
    %3103 = vmatpush1.msra.mxu0 0.0
    %3104 = vmatprep.subr.mxu0 0.0
    %3105 = vmatpush1.msra.mxu0 0.0
    %3106 = vmatprep.subr.mxu0 0.0
    %3107 = vmatpush1.msra.mxu0 0.0
    %3108 = vmatprep.subr.mxu0 0.0
    %3109 = vmatpush1.msra.mxu0 0.0
    %3110 = vmatprep.subr.mxu0 0.0
    %3111 = vmatpush1.msra.mxu0 0.0
    %3112 = vmatprep.subr.mxu0 0.0
    %3113 = vmatpush1.msra.mxu0 0.0
    %3114 = vmatprep.subr.mxu0 0.0
    %3115 = vmatpush1.msra.mxu0 0.0
    %3116 = vmatprep.subr.mxu0 0.0
    %3117 = vmatpush1.msra.mxu0 0.0
    %3118 = vmatprep.subr.mxu0 0.0
    %3119 = vmatpush1.msra.mxu0 0.0
    %3120 = vmatprep.subr.mxu0 0.0
    %3121 = vmatpush1.msra.mxu0 0.0
    %3122 = vmatprep.subr.mxu0 0.0
    %3123 = vmatpush1.msra.mxu0 0.0
    %3124 = vmatprep.subr.mxu0 0.0
    %3125 = vmatpush1.msra.mxu0 0.0
    %3126 = vmatprep.subr.mxu0 0.0
    %3127 = vmatpush1.msra.mxu0 0.0
    %3128 = vmatprep.subr.mxu0 0.0
    %3129 = vmatpush1.msra.mxu0 0.0
    %3130 = vmatprep.subr.mxu0 0.0
    %3131 = vmatpush1.msra.mxu0 0.0
    %3132 = vmatprep.mubr.f32.mxu0 0.0
    %3133 = vmatmul.mubr.f32.gmra.mrb[0].mxu0 %v3063
    %v3134 = vpop.f32.mrb[0].mxu0
    %v3135 = vadd.f32 0.0, %v3134
    %v3136 = vpop.f32.mrb[0].mxu0
    %3137 = vmatprep.mubr.f32.mxu0 0.0
    %3138 = vmatmul.mubr.f32.gmra.mrb[0].mxu0 %v3066
    %v3139 = vpop.f32.mrb[0].mxu0
    %v3140 = vadd.f32 0.0, %v3139
    %v3141 = vpop.f32.mrb[0].mxu0
    %3142 = vdwg.mxu0
    %s3143 = scalar_lea.vmem %s7, 32
    %v3144 = vld [vmem:[%s3143] sm:$0xff]
    %v3145 = vld [vmem:[%s3143 + $0x8] sm:$0xff]
    %v3146 = vld [vmem:[%s3143 + $0x10] sm:$0xff]
    %v3147 = vld [vmem:[%s3143 + $0x18] sm:$0xff]
    %v3149 = vsel %vm587, %v2874, 0
    %v3152 = vsel %vm587, %v2879, 0
    %3154 = vmatprep.subr.mxu0 0.0
    %3155 = vmatpush1.msra.mxu0 %v3144
    %3156 = vmatprep.subr.mxu0 0.0
    %3157 = vmatpush1.msra.mxu0 0.0
    %3158 = vmatprep.subr.mxu0 0.0
    %3159 = vmatpush1.msra.mxu0 0.0
    %3160 = vmatprep.subr.mxu0 0.0
    %3161 = vmatpush1.msra.mxu0 0.0
    %3162 = vmatprep.subr.mxu0 0.0
    %3163 = vmatpush1.msra.mxu0 0.0
    %3164 = vmatprep.subr.mxu0 0.0
    %3165 = vmatpush1.msra.mxu0 0.0
    %3166 = vmatprep.subr.mxu0 0.0
    %3167 = vmatpush1.msra.mxu0 0.0
    %3168 = vmatprep.subr.mxu0 0.0
    %3169 = vmatpush1.msra.mxu0 0.0
    %3170 = vmatprep.subr.mxu0 0.0
    %3171 = vmatpush1.msra.mxu0 0.0
    %3172 = vmatprep.subr.mxu0 0.0
    %3173 = vmatpush1.msra.mxu0 0.0
    %3174 = vmatprep.subr.mxu0 0.0
    %3175 = vmatpush1.msra.mxu0 0.0
    %3176 = vmatprep.subr.mxu0 0.0
    %3177 = vmatpush1.msra.mxu0 0.0
    %3178 = vmatprep.subr.mxu0 0.0
    %3179 = vmatpush1.msra.mxu0 0.0
    %3180 = vmatprep.subr.mxu0 0.0
    %3181 = vmatpush1.msra.mxu0 0.0
    %3182 = vmatprep.subr.mxu0 0.0
    %3183 = vmatpush1.msra.mxu0 0.0
    %3184 = vmatprep.subr.mxu0 0.0
    %3185 = vmatpush1.msra.mxu0 0.0
    %3186 = vmatprep.subr.mxu0 0.0
    %3187 = vmatpush1.msra.mxu0 0.0
    %3188 = vmatprep.subr.mxu0 0.0
    %3189 = vmatpush1.msra.mxu0 0.0
    %3190 = vmatprep.subr.mxu0 0.0
    %3191 = vmatpush1.msra.mxu0 0.0
    %3192 = vmatprep.subr.mxu0 0.0
    %3193 = vmatpush1.msra.mxu0 0.0
    %3194 = vmatprep.subr.mxu0 0.0
    %3195 = vmatpush1.msra.mxu0 0.0
    %3196 = vmatprep.subr.mxu0 0.0
    %3197 = vmatpush1.msra.mxu0 0.0
    %3198 = vmatprep.subr.mxu0 0.0
    %3199 = vmatpush1.msra.mxu0 0.0
    %3200 = vmatprep.subr.mxu0 0.0
    %3201 = vmatpush1.msra.mxu0 0.0
    %3202 = vmatprep.subr.mxu0 0.0
    %3203 = vmatpush1.msra.mxu0 0.0
    %3204 = vmatprep.subr.mxu0 0.0
    %3205 = vmatpush1.msra.mxu0 0.0
    %3206 = vmatprep.subr.mxu0 0.0
    %3207 = vmatpush1.msra.mxu0 0.0
    %3208 = vmatprep.subr.mxu0 0.0
    %3209 = vmatpush1.msra.mxu0 0.0
    %3210 = vmatprep.subr.mxu0 0.0
    %3211 = vmatpush1.msra.mxu0 0.0
    %3212 = vmatprep.subr.mxu0 0.0
    %3213 = vmatpush1.msra.mxu0 0.0
    %3214 = vmatprep.subr.mxu0 0.0
    %3215 = vmatpush1.msra.mxu0 0.0
    %3216 = vmatprep.subr.mxu0 0.0
    %3217 = vmatpush1.msra.mxu0 0.0
    %3218 = vmatprep.mubr.f32.mxu0 0.0
    %3219 = vmatmul.mubr.f32.gmra.mrb[0].mxu0 %v3149
    %v3220 = vpop.f32.mrb[0].mxu0
    %v3221 = vadd.f32 0.0, %v3220
    %v3222 = vpop.f32.mrb[0].mxu0
    %3223 = vmatprep.mubr.f32.mxu0 0.0
    %3224 = vmatmul.mubr.f32.gmra.mrb[0].mxu0 %v3152
    %v3225 = vpop.f32.mrb[0].mxu0
    %v3226 = vadd.f32 0.0, %v3225
    %v3227 = vpop.f32.mrb[0].mxu0
    %3228 = vdwg.mxu0
    %v3230 = vsel %vm587, %v2961, 0
    %v3233 = vsel %vm587, %v2966, 0
    %3235 = vmatprep.subr.mxu0 0.0
    %3236 = vmatpush1.msra.mxu0 %v3145
    %3237 = vmatprep.subr.mxu0 0.0
    %3238 = vmatpush1.msra.mxu0 0.0
    %3239 = vmatprep.subr.mxu0 0.0
    %3240 = vmatpush1.msra.mxu0 0.0
    %3241 = vmatprep.subr.mxu0 0.0
    %3242 = vmatpush1.msra.mxu0 0.0
    %3243 = vmatprep.subr.mxu0 0.0
    %3244 = vmatpush1.msra.mxu0 0.0
    %3245 = vmatprep.subr.mxu0 0.0
    %3246 = vmatpush1.msra.mxu0 0.0
    %3247 = vmatprep.subr.mxu0 0.0
    %3248 = vmatpush1.msra.mxu0 0.0
    %3249 = vmatprep.subr.mxu0 0.0
    %3250 = vmatpush1.msra.mxu0 0.0
    %3251 = vmatprep.subr.mxu0 0.0
    %3252 = vmatpush1.msra.mxu0 0.0
    %3253 = vmatprep.subr.mxu0 0.0
    %3254 = vmatpush1.msra.mxu0 0.0
    %3255 = vmatprep.subr.mxu0 0.0
    %3256 = vmatpush1.msra.mxu0 0.0
    %3257 = vmatprep.subr.mxu0 0.0
    %3258 = vmatpush1.msra.mxu0 0.0
    %3259 = vmatprep.subr.mxu0 0.0
    %3260 = vmatpush1.msra.mxu0 0.0
    %3261 = vmatprep.subr.mxu0 0.0
    %3262 = vmatpush1.msra.mxu0 0.0
    %3263 = vmatprep.subr.mxu0 0.0
    %3264 = vmatpush1.msra.mxu0 0.0
    %3265 = vmatprep.subr.mxu0 0.0
    %3266 = vmatpush1.msra.mxu0 0.0
    %3267 = vmatprep.subr.mxu0 0.0
    %3268 = vmatpush1.msra.mxu0 0.0
    %3269 = vmatprep.subr.mxu0 0.0
    %3270 = vmatpush1.msra.mxu0 0.0
    %3271 = vmatprep.subr.mxu0 0.0
    %3272 = vmatpush1.msra.mxu0 0.0
    %3273 = vmatprep.subr.mxu0 0.0
    %3274 = vmatpush1.msra.mxu0 0.0
    %3275 = vmatprep.subr.mxu0 0.0
    %3276 = vmatpush1.msra.mxu0 0.0
    %3277 = vmatprep.subr.mxu0 0.0
    %3278 = vmatpush1.msra.mxu0 0.0
    %3279 = vmatprep.subr.mxu0 0.0
    %3280 = vmatpush1.msra.mxu0 0.0
    %3281 = vmatprep.subr.mxu0 0.0
    %3282 = vmatpush1.msra.mxu0 0.0
    %3283 = vmatprep.subr.mxu0 0.0
    %3284 = vmatpush1.msra.mxu0 0.0
    %3285 = vmatprep.subr.mxu0 0.0
    %3286 = vmatpush1.msra.mxu0 0.0
    %3287 = vmatprep.subr.mxu0 0.0
    %3288 = vmatpush1.msra.mxu0 0.0
    %3289 = vmatprep.subr.mxu0 0.0
    %3290 = vmatpush1.msra.mxu0 0.0
    %3291 = vmatprep.subr.mxu0 0.0
    %3292 = vmatpush1.msra.mxu0 0.0
    %3293 = vmatprep.subr.mxu0 0.0
    %3294 = vmatpush1.msra.mxu0 0.0
    %3295 = vmatprep.subr.mxu0 0.0
    %3296 = vmatpush1.msra.mxu0 0.0
    %3297 = vmatprep.subr.mxu0 0.0
    %3298 = vmatpush1.msra.mxu0 0.0
    %3299 = vmatprep.mubr.f32.mxu0 0.0
    %3300 = vmatmul.mubr.f32.gmra.mrb[0].mxu0 %v3230
    %v3301 = vpop.f32.mrb[0].mxu0
    %v3302 = vadd.f32 0.0, %v3301
    %v3303 = vpop.f32.mrb[0].mxu0
    %3304 = vmatprep.mubr.f32.mxu0 0.0
    %3305 = vmatmul.mubr.f32.gmra.mrb[0].mxu0 %v3233
    %v3306 = vpop.f32.mrb[0].mxu0
    %v3307 = vadd.f32 0.0, %v3306
    %v3308 = vpop.f32.mrb[0].mxu0
    %3309 = vdwg.mxu0
    %v3311 = vsel %vm587, %v3048, 0
    %v3314 = vsel %vm587, %v3053, 0
    %3316 = vmatprep.subr.mxu0 0.0
    %3317 = vmatpush1.msra.mxu0 %v3146
    %3318 = vmatprep.subr.mxu0 0.0
    %3319 = vmatpush1.msra.mxu0 0.0
    %3320 = vmatprep.subr.mxu0 0.0
    %3321 = vmatpush1.msra.mxu0 0.0
    %3322 = vmatprep.subr.mxu0 0.0
    %3323 = vmatpush1.msra.mxu0 0.0
    %3324 = vmatprep.subr.mxu0 0.0
    %3325 = vmatpush1.msra.mxu0 0.0
    %3326 = vmatprep.subr.mxu0 0.0
    %3327 = vmatpush1.msra.mxu0 0.0
    %3328 = vmatprep.subr.mxu0 0.0
    %3329 = vmatpush1.msra.mxu0 0.0
    %3330 = vmatprep.subr.mxu0 0.0
    %3331 = vmatpush1.msra.mxu0 0.0
    %3332 = vmatprep.subr.mxu0 0.0
    %3333 = vmatpush1.msra.mxu0 0.0
    %3334 = vmatprep.subr.mxu0 0.0
    %3335 = vmatpush1.msra.mxu0 0.0
    %3336 = vmatprep.subr.mxu0 0.0
    %3337 = vmatpush1.msra.mxu0 0.0
    %3338 = vmatprep.subr.mxu0 0.0
    %3339 = vmatpush1.msra.mxu0 0.0
    %3340 = vmatprep.subr.mxu0 0.0
    %3341 = vmatpush1.msra.mxu0 0.0
    %3342 = vmatprep.subr.mxu0 0.0
    %3343 = vmatpush1.msra.mxu0 0.0
    %3344 = vmatprep.subr.mxu0 0.0
    %3345 = vmatpush1.msra.mxu0 0.0
    %3346 = vmatprep.subr.mxu0 0.0
    %3347 = vmatpush1.msra.mxu0 0.0
    %3348 = vmatprep.subr.mxu0 0.0
    %3349 = vmatpush1.msra.mxu0 0.0
    %3350 = vmatprep.subr.mxu0 0.0
    %3351 = vmatpush1.msra.mxu0 0.0
    %3352 = vmatprep.subr.mxu0 0.0
    %3353 = vmatpush1.msra.mxu0 0.0
    %3354 = vmatprep.subr.mxu0 0.0
    %3355 = vmatpush1.msra.mxu0 0.0
    %3356 = vmatprep.subr.mxu0 0.0
    %3357 = vmatpush1.msra.mxu0 0.0
    %3358 = vmatprep.subr.mxu0 0.0
    %3359 = vmatpush1.msra.mxu0 0.0
    %3360 = vmatprep.subr.mxu0 0.0
    %3361 = vmatpush1.msra.mxu0 0.0
    %3362 = vmatprep.subr.mxu0 0.0
    %3363 = vmatpush1.msra.mxu0 0.0
    %3364 = vmatprep.subr.mxu0 0.0
    %3365 = vmatpush1.msra.mxu0 0.0
    %3366 = vmatprep.subr.mxu0 0.0
    %3367 = vmatpush1.msra.mxu0 0.0
    %3368 = vmatprep.subr.mxu0 0.0
    %3369 = vmatpush1.msra.mxu0 0.0
    %3370 = vmatprep.subr.mxu0 0.0
    %3371 = vmatpush1.msra.mxu0 0.0
    %3372 = vmatprep.subr.mxu0 0.0
    %3373 = vmatpush1.msra.mxu0 0.0
    %3374 = vmatprep.subr.mxu0 0.0
    %3375 = vmatpush1.msra.mxu0 0.0
    %3376 = vmatprep.subr.mxu0 0.0
    %3377 = vmatpush1.msra.mxu0 0.0
    %3378 = vmatprep.subr.mxu0 0.0
    %3379 = vmatpush1.msra.mxu0 0.0
    %3380 = vmatprep.mubr.f32.mxu0 0.0
    %3381 = vmatmul.mubr.f32.gmra.mrb[0].mxu0 %v3311
    %v3382 = vpop.f32.mrb[0].mxu0
    %v3383 = vadd.f32 0.0, %v3382
    %v3384 = vpop.f32.mrb[0].mxu0
    %3385 = vmatprep.mubr.f32.mxu0 0.0
    %3386 = vmatmul.mubr.f32.gmra.mrb[0].mxu0 %v3314
    %v3387 = vpop.f32.mrb[0].mxu0
    %v3388 = vadd.f32 0.0, %v3387
    %v3389 = vpop.f32.mrb[0].mxu0
    %3390 = vdwg.mxu0
    %v3392 = vsel %vm587, %v3135, 0
    %v3395 = vsel %vm587, %v3140, 0
    %3397 = vmatprep.subr.mxu0 0.0
    %3398 = vmatpush1.msra.mxu0 %v3147
    %3399 = vmatprep.subr.mxu0 0.0
    %3400 = vmatpush1.msra.mxu0 0.0
    %3401 = vmatprep.subr.mxu0 0.0
    %3402 = vmatpush1.msra.mxu0 0.0
    %3403 = vmatprep.subr.mxu0 0.0
    %3404 = vmatpush1.msra.mxu0 0.0
    %3405 = vmatprep.subr.mxu0 0.0
    %3406 = vmatpush1.msra.mxu0 0.0
    %3407 = vmatprep.subr.mxu0 0.0
    %3408 = vmatpush1.msra.mxu0 0.0
    %3409 = vmatprep.subr.mxu0 0.0
    %3410 = vmatpush1.msra.mxu0 0.0
    %3411 = vmatprep.subr.mxu0 0.0
    %3412 = vmatpush1.msra.mxu0 0.0
    %3413 = vmatprep.subr.mxu0 0.0
    %3414 = vmatpush1.msra.mxu0 0.0
    %3415 = vmatprep.subr.mxu0 0.0
    %3416 = vmatpush1.msra.mxu0 0.0
    %3417 = vmatprep.subr.mxu0 0.0
    %3418 = vmatpush1.msra.mxu0 0.0
    %3419 = vmatprep.subr.mxu0 0.0
    %3420 = vmatpush1.msra.mxu0 0.0
    %3421 = vmatprep.subr.mxu0 0.0
    %3422 = vmatpush1.msra.mxu0 0.0
    %3423 = vmatprep.subr.mxu0 0.0
    %3424 = vmatpush1.msra.mxu0 0.0
    %3425 = vmatprep.subr.mxu0 0.0
    %3426 = vmatpush1.msra.mxu0 0.0
    %3427 = vmatprep.subr.mxu0 0.0
    %3428 = vmatpush1.msra.mxu0 0.0
    %3429 = vmatprep.subr.mxu0 0.0
    %3430 = vmatpush1.msra.mxu0 0.0
    %3431 = vmatprep.subr.mxu0 0.0
    %3432 = vmatpush1.msra.mxu0 0.0
    %3433 = vmatprep.subr.mxu0 0.0
    %3434 = vmatpush1.msra.mxu0 0.0
    %3435 = vmatprep.subr.mxu0 0.0
    %3436 = vmatpush1.msra.mxu0 0.0
    %3437 = vmatprep.subr.mxu0 0.0
    %3438 = vmatpush1.msra.mxu0 0.0
    %3439 = vmatprep.subr.mxu0 0.0
    %3440 = vmatpush1.msra.mxu0 0.0
    %3441 = vmatprep.subr.mxu0 0.0
    %3442 = vmatpush1.msra.mxu0 0.0
    %3443 = vmatprep.subr.mxu0 0.0
    %3444 = vmatpush1.msra.mxu0 0.0
    %3445 = vmatprep.subr.mxu0 0.0
    %3446 = vmatpush1.msra.mxu0 0.0
    %3447 = vmatprep.subr.mxu0 0.0
    %3448 = vmatpush1.msra.mxu0 0.0
    %3449 = vmatprep.subr.mxu0 0.0
    %3450 = vmatpush1.msra.mxu0 0.0
    %3451 = vmatprep.subr.mxu0 0.0
    %3452 = vmatpush1.msra.mxu0 0.0
    %3453 = vmatprep.subr.mxu0 0.0
    %3454 = vmatpush1.msra.mxu0 0.0
    %3455 = vmatprep.subr.mxu0 0.0
    %3456 = vmatpush1.msra.mxu0 0.0
    %3457 = vmatprep.subr.mxu0 0.0
    %3458 = vmatpush1.msra.mxu0 0.0
    %3459 = vmatprep.subr.mxu0 0.0
    %3460 = vmatpush1.msra.mxu0 0.0
    %3461 = vmatprep.mubr.f32.mxu0 0.0
    %3462 = vmatmul.mubr.f32.gmra.mrb[0].mxu0 %v3392
    %v3463 = vpop.f32.mrb[0].mxu0
    %v3464 = vadd.f32 0.0, %v3463
    %v3465 = vpop.f32.mrb[0].mxu0
    %3466 = vmatprep.mubr.f32.mxu0 0.0
    %3467 = vmatmul.mubr.f32.gmra.mrb[0].mxu0 %v3395
    %v3468 = vpop.f32.mrb[0].mxu0
    %v3469 = vadd.f32 0.0, %v3468
    %v3470 = vpop.f32.mrb[0].mxu0
    %3471 = vdwg.mxu0
    %v3472 = vsel %vm215, %v3221, 0.0
    %v3473 = vsel %vm215, %v3302, 0.0
    %v3474 = vadd.f32 %v3472, %v3473
    %v3475 = vsel %vm215, %v3383, 0.0
    %v3476 = vadd.f32 %v3474, %v3475
    %v3477 = vsel %vm215, %v3464, 0.0
    %v3478 = vadd.f32 %v3476, %v3477
    %v3479 = vsel %vm215, %v3226, 0.0
    %v3480 = vsel %vm215, %v3307, 0.0
    %v3481 = vadd.f32 %v3479, %v3480
    %v3482 = vsel %vm215, %v3388, 0.0
    %v3483 = vadd.f32 %v3481, %v3482
    %v3484 = vsel %vm215, %v3469, 0.0
    %v3485 = vadd.f32 %v3483, %v3484
    %s3486 = scalar_lea.vmem %s8, 1
    %v3487 = vld [vmem:[%s3486] sm:$0x1]
    %v3489 = vlaneseq
    %v3490 = vshrl.u32 %v3489, 7
    %v3491 = vsub.s32 0, %v3490
    %v3492 = vrot.slane %v3487, %v3491
    %v3494 = vadd.f32 %v3478, %v3492
    %v3495 = vadd.f32 %v3485, %v3492
    %v3496 = vadd.f32 %v1980, %v3494
    %v3497 = vadd.f32 %v1981, %v3495
    %s3498 = scalar_lea.vmem %s9, 1
    %v3499 = vld [vmem:[%s3498] sm:$0x1]
    %s3500 = scalar_lea.vmem %s10, 1
    %v3501 = vld [vmem:[%s3500] sm:$0x1]
    %v3502 = vsel %vm215, %v3496, 0.0
    %3503 = vadd.xlane.f32.xlu0 %v3502
    %v3504 = vpop.xlane.xlu0 %3503
    %v3505 = vsel %vm215, %v3497, 0.0
    %3506 = vadd.xlane.f32.xlu0 %v3505
    %v3507 = vpop.xlane.xlu0 %3506
    %v3508 = vmul.f32 %v3504, %v222
    %v3509 = vmul.f32 %v3507, %v222
    %v3510 = vsub.f32 %v3496, %v3508
    %v3511 = vsub.f32 %v3497, %v3509
    %v3512 = vmul.f32 %v3510, %v3510
    %v3513 = vmul.f32 %v3511, %v3511
    %v3514 = vsel %vm215, %v3512, 0.0
    %3515 = vadd.xlane.f32.xlu0 %v3514
    %v3516 = vpop.xlane.xlu0 %3515
    %v3517 = vsel %vm215, %v3513, 0.0
    %3518 = vadd.xlane.f32.xlu0 %v3517
    %v3519 = vpop.xlane.xlu0 %3518
    %v3520 = vmul.f32 %v3516, %v222
    %v3521 = vmul.f32 %v3519, %v222
    %v3522 = vadd.f32 %v3520, 1e-05
    %v3523 = vadd.f32 %v3521, 1e-05
    %v3524 = vrsqrt.pop %v3522
    %v3525 = vrsqrt.pop %v3523
    %v3526 = vmul.f32 %v3510, %v3524
    %v3527 = vmul.f32 %v3511, %v3525
    %v3529 = vlaneseq
    %v3530 = vshrl.u32 %v3529, 7
    %v3531 = vsub.s32 0, %v3530
    %v3532 = vrot.slane %v3499, %v3531
    %v3534 = vmul.f32 %v3526, %v3532
    %v3535 = vmul.f32 %v3527, %v3532
    %v3537 = vlaneseq
    %v3538 = vshrl.u32 %v3537, 7
    %v3539 = vsub.s32 0, %v3538
    %v3540 = vrot.slane %v3501, %v3539
    %v3542 = vadd.f32 %v3534, %v3540
    %v3543 = vadd.f32 %v3535, %v3540
    %s3544 = scalar_lea.vmem %s11, 32
    %v3545 = vld [vmem:[%s3544] sm:$0xff]
    %v3546 = vld [vmem:[%s3544 + $0x8] sm:$0xff]
    %v3547 = vld [vmem:[%s3544 + $0x10] sm:$0xff]
    %v3548 = vld [vmem:[%s3544 + $0x18] sm:$0xff]
    %s3549 = scalar_lea.vmem %s12, 1
    %v3550 = vld [vmem:[%s3549] sm:$0x1]
    %v3552 = vlaneseq
    %v3553 = vshrl.u32 %v3552, 7
    %v3554 = vsub.s32 0, %v3553
    %v3555 = vrot.slane %v3550, %v3554
    %v3558 = vsel %vm215, %v3542, 0
    %v3561 = vsel %vm215, %v3543, 0
    %3563 = vmatprep.subr.mxu0 0.0
    %3564 = vmatpush1.msra.mxu0 %v3545
    %3565 = vmatprep.subr.mxu0 0.0
    %3566 = vmatpush1.msra.mxu0 %v3546
    %3567 = vmatprep.subr.mxu0 0.0
    %3568 = vmatpush1.msra.mxu0 %v3547
    %3569 = vmatprep.subr.mxu0 0.0
    %3570 = vmatpush1.msra.mxu0 %v3548
    %3571 = vmatprep.subr.mxu0 0.0
    %3572 = vmatpush1.msra.mxu0 0.0
    %3573 = vmatprep.subr.mxu0 0.0
    %3574 = vmatpush1.msra.mxu0 0.0
    %3575 = vmatprep.subr.mxu0 0.0
    %3576 = vmatpush1.msra.mxu0 0.0
    %3577 = vmatprep.subr.mxu0 0.0
    %3578 = vmatpush1.msra.mxu0 0.0
    %3579 = vmatprep.subr.mxu0 0.0
    %3580 = vmatpush1.msra.mxu0 0.0
    %3581 = vmatprep.subr.mxu0 0.0
    %3582 = vmatpush1.msra.mxu0 0.0
    %3583 = vmatprep.subr.mxu0 0.0
    %3584 = vmatpush1.msra.mxu0 0.0
    %3585 = vmatprep.subr.mxu0 0.0
    %3586 = vmatpush1.msra.mxu0 0.0
    %3587 = vmatprep.subr.mxu0 0.0
    %3588 = vmatpush1.msra.mxu0 0.0
    %3589 = vmatprep.subr.mxu0 0.0
    %3590 = vmatpush1.msra.mxu0 0.0
    %3591 = vmatprep.subr.mxu0 0.0
    %3592 = vmatpush1.msra.mxu0 0.0
    %3593 = vmatprep.subr.mxu0 0.0
    %3594 = vmatpush1.msra.mxu0 0.0
    %3595 = vmatprep.subr.mxu0 0.0
    %3596 = vmatpush1.msra.mxu0 0.0
    %3597 = vmatprep.subr.mxu0 0.0
    %3598 = vmatpush1.msra.mxu0 0.0
    %3599 = vmatprep.subr.mxu0 0.0
    %3600 = vmatpush1.msra.mxu0 0.0
    %3601 = vmatprep.subr.mxu0 0.0
    %3602 = vmatpush1.msra.mxu0 0.0
    %3603 = vmatprep.subr.mxu0 0.0
    %3604 = vmatpush1.msra.mxu0 0.0
    %3605 = vmatprep.subr.mxu0 0.0
    %3606 = vmatpush1.msra.mxu0 0.0
    %3607 = vmatprep.subr.mxu0 0.0
    %3608 = vmatpush1.msra.mxu0 0.0
    %3609 = vmatprep.subr.mxu0 0.0
    %3610 = vmatpush1.msra.mxu0 0.0
    %3611 = vmatprep.subr.mxu0 0.0
    %3612 = vmatpush1.msra.mxu0 0.0
    %3613 = vmatprep.subr.mxu0 0.0
    %3614 = vmatpush1.msra.mxu0 0.0
    %3615 = vmatprep.subr.mxu0 0.0
    %3616 = vmatpush1.msra.mxu0 0.0
    %3617 = vmatprep.subr.mxu0 0.0
    %3618 = vmatpush1.msra.mxu0 0.0
    %3619 = vmatprep.subr.mxu0 0.0
    %3620 = vmatpush1.msra.mxu0 0.0
    %3621 = vmatprep.subr.mxu0 0.0
    %3622 = vmatpush1.msra.mxu0 0.0
    %3623 = vmatprep.subr.mxu0 0.0
    %3624 = vmatpush1.msra.mxu0 0.0
    %3625 = vmatprep.subr.mxu0 0.0
    %3626 = vmatpush1.msra.mxu0 0.0
    %3627 = vmatprep.mubr.f32.mxu0 0.0
    %3628 = vmatmul.mubr.f32.gmra.mrb[0].mxu0 %v3558
    %v3629 = vpop.f32.mrb[0].mxu0
    %v3630 = vadd.f32 %v3555, %v3629
    %v3631 = vpop.f32.mrb[0].mxu0
    %3632 = vmatprep.mubr.f32.mxu0 0.0
    %3633 = vmatmul.mubr.f32.gmra.mrb[0].mxu0 %v3561
    %v3634 = vpop.f32.mrb[0].mxu0
    %v3635 = vadd.f32 %v3555, %v3634
    %v3636 = vpop.f32.mrb[0].mxu0
    %3637 = vdwg.mxu0
    %v3638 = vmul.f32 %v3630, 0.5
    %v3639 = vmul.f32 %v3635, 0.5
    %v3640 = vmul.f32 %v3630, 0.044715
    %v3641 = vmul.f32 %v3635, 0.044715
    %v3642 = vmul.f32 %v3640, %v3630
    %v3643 = vmul.f32 %v3641, %v3635
    %v3644 = vmul.f32 %v3642, %v3630
    %v3645 = vmul.f32 %v3643, %v3635
    %v3646 = vadd.f32 %v3630, %v3644
    %v3647 = vadd.f32 %v3635, %v3645
    %v3648 = vmul.f32 %v3646, 0.7978846
    %v3649 = vmul.f32 %v3647, 0.7978846
    %v3650 = vtanh.pop %v3648
    %v3651 = vtanh.pop %v3649
    %v3652 = vadd.f32 %v3650, 1.0
    %v3653 = vadd.f32 %v3651, 1.0
    %v3654 = vmul.f32 %v3638, %v3652
    %v3655 = vmul.f32 %v3639, %v3653
    %s3656 = scalar_lea.vmem %s13, 128
    %v3657 = vld [vmem:[%s3656] sm:$0xff]
    %v3658 = vld [vmem:[%s3656 + $0x8] sm:$0xff]
    %v3659 = vld [vmem:[%s3656 + $0x10] sm:$0xff]
    %v3660 = vld [vmem:[%s3656 + $0x18] sm:$0xff]
    %v3661 = vld [vmem:[%s3656 + $0x20] sm:$0xff]
    %v3662 = vld [vmem:[%s3656 + $0x28] sm:$0xff]
    %v3663 = vld [vmem:[%s3656 + $0x30] sm:$0xff]
    %v3664 = vld [vmem:[%s3656 + $0x38] sm:$0xff]
    %v3665 = vld [vmem:[%s3656 + $0x40] sm:$0xff]
    %v3666 = vld [vmem:[%s3656 + $0x48] sm:$0xff]
    %v3667 = vld [vmem:[%s3656 + $0x50] sm:$0xff]
    %v3668 = vld [vmem:[%s3656 + $0x58] sm:$0xff]
    %v3669 = vld [vmem:[%s3656 + $0x60] sm:$0xff]
    %v3670 = vld [vmem:[%s3656 + $0x68] sm:$0xff]
    %v3671 = vld [vmem:[%s3656 + $0x70] sm:$0xff]
    %v3672 = vld [vmem:[%s3656 + $0x78] sm:$0xff]
    %s3673 = scalar_lea.vmem %s14, 1
    %v3674 = vld [vmem:[%s3673] sm:$0x1]
    %v3676 = vlaneseq
    %v3677 = vshrl.u32 %v3676, 7
    %v3678 = vsub.s32 0, %v3677
    %v3679 = vrot.slane %v3674, %v3678
    %3681 = vmatprep.subr.mxu0 0.0
    %3682 = vmatpush1.msra.mxu0 %v3657
    %3683 = vmatprep.subr.mxu0 0.0
    %3684 = vmatpush1.msra.mxu0 %v3658
    %3685 = vmatprep.subr.mxu0 0.0
    %3686 = vmatpush1.msra.mxu0 %v3659
    %3687 = vmatprep.subr.mxu0 0.0
    %3688 = vmatpush1.msra.mxu0 %v3660
    %3689 = vmatprep.subr.mxu0 0.0
    %3690 = vmatpush1.msra.mxu0 %v3661
    %3691 = vmatprep.subr.mxu0 0.0
    %3692 = vmatpush1.msra.mxu0 %v3662
    %3693 = vmatprep.subr.mxu0 0.0
    %3694 = vmatpush1.msra.mxu0 %v3663
    %3695 = vmatprep.subr.mxu0 0.0
    %3696 = vmatpush1.msra.mxu0 %v3664
    %3697 = vmatprep.subr.mxu0 0.0
    %3698 = vmatpush1.msra.mxu0 %v3665
    %3699 = vmatprep.subr.mxu0 0.0
    %3700 = vmatpush1.msra.mxu0 %v3666
    %3701 = vmatprep.subr.mxu0 0.0
    %3702 = vmatpush1.msra.mxu0 %v3667
    %3703 = vmatprep.subr.mxu0 0.0
    %3704 = vmatpush1.msra.mxu0 %v3668
    %3705 = vmatprep.subr.mxu0 0.0
    %3706 = vmatpush1.msra.mxu0 %v3669
    %3707 = vmatprep.subr.mxu0 0.0
    %3708 = vmatpush1.msra.mxu0 %v3670
    %3709 = vmatprep.subr.mxu0 0.0
    %3710 = vmatpush1.msra.mxu0 %v3671
    %3711 = vmatprep.subr.mxu0 0.0
    %3712 = vmatpush1.msra.mxu0 %v3672
    %3713 = vmatprep.subr.mxu0 0.0
    %3714 = vmatpush1.msra.mxu0 0.0
    %3715 = vmatprep.subr.mxu0 0.0
    %3716 = vmatpush1.msra.mxu0 0.0
    %3717 = vmatprep.subr.mxu0 0.0
    %3718 = vmatpush1.msra.mxu0 0.0
    %3719 = vmatprep.subr.mxu0 0.0
    %3720 = vmatpush1.msra.mxu0 0.0
    %3721 = vmatprep.subr.mxu0 0.0
    %3722 = vmatpush1.msra.mxu0 0.0
    %3723 = vmatprep.subr.mxu0 0.0
    %3724 = vmatpush1.msra.mxu0 0.0
    %3725 = vmatprep.subr.mxu0 0.0
    %3726 = vmatpush1.msra.mxu0 0.0
    %3727 = vmatprep.subr.mxu0 0.0
    %3728 = vmatpush1.msra.mxu0 0.0
    %3729 = vmatprep.subr.mxu0 0.0
    %3730 = vmatpush1.msra.mxu0 0.0
    %3731 = vmatprep.subr.mxu0 0.0
    %3732 = vmatpush1.msra.mxu0 0.0
    %3733 = vmatprep.subr.mxu0 0.0
    %3734 = vmatpush1.msra.mxu0 0.0
    %3735 = vmatprep.subr.mxu0 0.0
    %3736 = vmatpush1.msra.mxu0 0.0
    %3737 = vmatprep.subr.mxu0 0.0
    %3738 = vmatpush1.msra.mxu0 0.0
    %3739 = vmatprep.subr.mxu0 0.0
    %3740 = vmatpush1.msra.mxu0 0.0
    %3741 = vmatprep.subr.mxu0 0.0
    %3742 = vmatpush1.msra.mxu0 0.0
    %3743 = vmatprep.subr.mxu0 0.0
    %3744 = vmatpush1.msra.mxu0 0.0
    %3745 = vmatprep.mubr.f32.mxu0 0.0
    %3746 = vmatmul.mubr.f32.gmra.mrb[0].mxu0 %v3654
    %v3747 = vpop.f32.mrb[0].mxu0
    %v3748 = vadd.f32 %v3679, %v3747
    %v3749 = vpop.f32.mrb[0].mxu0
    %3750 = vmatprep.mubr.f32.mxu0 0.0
    %3751 = vmatmul.mubr.f32.gmra.mrb[0].mxu0 %v3655
    %v3752 = vpop.f32.mrb[0].mxu0
    %v3753 = vadd.f32 %v3679, %v3752
    %v3754 = vpop.f32.mrb[0].mxu0
    %3755 = vdwg.mxu0
    %v3756 = vadd.f32 %v3496, %v3748
    %v3757 = vadd.f32 %v3497, %v3753
    %v3758 = vld [vmem:[%s15] sm:$0x1]
    %v3759 = vld [vmem:[%s16] sm:$0x1]
    %v3760 = vsel %vm215, %v3756, 0.0
    %3761 = vadd.xlane.f32.xlu0 %v3760
    %v3762 = vpop.xlane.xlu0 %3761
    %v3763 = vsel %vm215, %v3757, 0.0
    %3764 = vadd.xlane.f32.xlu0 %v3763
    %v3765 = vpop.xlane.xlu0 %3764
    %v3766 = vmul.f32 %v3762, %v222
    %v3767 = vmul.f32 %v3765, %v222
    %v3768 = vsub.f32 %v3756, %v3766
    %v3769 = vsub.f32 %v3757, %v3767
    %v3770 = vmul.f32 %v3768, %v3768
    %v3771 = vmul.f32 %v3769, %v3769
    %v3772 = vsel %vm215, %v3770, 0.0
    %3773 = vadd.xlane.f32.xlu0 %v3772
    %v3774 = vpop.xlane.xlu0 %3773
    %v3775 = vsel %vm215, %v3771, 0.0
    %3776 = vadd.xlane.f32.xlu0 %v3775
    %v3777 = vpop.xlane.xlu0 %3776
    %v3778 = vmul.f32 %v3774, %v222
    %v3779 = vmul.f32 %v3777, %v222
    %v3780 = vadd.f32 %v3778, 1e-05
    %v3781 = vadd.f32 %v3779, 1e-05
    %v3782 = vrsqrt.pop %v3780
    %v3783 = vrsqrt.pop %v3781
    %v3784 = vmul.f32 %v3768, %v3782
    %v3785 = vmul.f32 %v3769, %v3783
    %v3787 = vlaneseq
    %v3788 = vshrl.u32 %v3787, 7
    %v3789 = vsub.s32 0, %v3788
    %v3790 = vrot.slane %v3758, %v3789
    %v3792 = vmul.f32 %v3784, %v3790
    %v3793 = vmul.f32 %v3785, %v3790
    %v3795 = vlaneseq
    %v3796 = vshrl.u32 %v3795, 7
    %v3797 = vsub.s32 0, %v3796
    %v3798 = vrot.slane %v3759, %v3797
    %v3800 = vadd.f32 %v3792, %v3798
    %v3801 = vadd.f32 %v3793, %v3798
    %3802 = vst.msk [vmem:[#allocation2] sm:$0xff] %vm215, %v3800
    %3803 = vst.msk [vmem:[#allocation2 + $0x8] sm:$0xff] %vm215, %v3801
    // Predicated region
    $region70: #{tpu_custom_call.1} parent=1 // pred_check
      _
    $region71: #{tpu_custom_call.1} parent=1 // pred_check_branch
      %3805 = sbr.rel (0) target = $region73
    $region72: #{tpu_custom_call.1} parent=1 // pred_region
      %s3807 = ssub.s32 256, 256
      %3808 = vsyncadd [#allocation3], %s3807
      %s3809 = sshll.u32 [#allocation2], 4
      %s3810 = int_to_ptr.vmem [resolvable:$true] %s3809
      %3815 = dma.vmem_to_hbm [thread:$0]  %s3810, 256, %s17, [#allocation3], 128, 128, 8
    $region73: #{tpu_custom_call.1} parent=1 // pred_fallthru
      _
    // Predicated region
    $region74: #{tpu_custom_call.1} parent=1 // pred_check
      _
    $region75: #{tpu_custom_call.1} parent=1 // pred_check_branch
      %3817 = sbr.rel (0) target = $region77
    $region76: #{tpu_custom_call.1} parent=1 // pred_region
      %3818 = dma.done [#allocation3], 256
    $region77: #{tpu_custom_call.1} parent=1 // pred_fallthru
      _
    %3819 = vsyncpa [#allocation3], 1

</llo_original>
